<compile_context>
chip_gen: v7x
topology: tpu7x:2x2x1
jax: 0.10.0
libtpu: 0.0.40
codegen_flags: <defaults>
</compile_context>

<pallas_src>
import functools

import jax
import jax.numpy as jnp
from jax.experimental import pallas as pl
from jax.experimental.pallas import tpu as pltpu


def _round_up(x, m):
    return (x + m - 1) // m * m


def _vmem_limit_bytes():
    # ~3/4 of physical VMEM: ~96 MiB on v5e/v6e, 48 MiB on v7x; safe fallback 48 MiB.
    try:
        cap = int(pltpu.get_tpu_info().vmem_capacity_bytes)
    except Exception:
        cap = 64 * 1024 * 1024
    return int(max(32 * 1024 * 1024, min((cap * 3) // 4, 96 * 1024 * 1024)))


# ---------------------------------------------------------------------------
# Kernel 1: fused im2col conv (per-tap MXU matmuls, f32 accumulation) plus
# per-channel sum / sum-of-squares for the BatchNorm batch statistics.
# ---------------------------------------------------------------------------
def _conv_stats_kernel(x_ref, w_ref, conv_ref, sum_ref, sq_ref, *,
                       KH, KW, OH, OW, Wh, stride, Cp, OCp):
    @pl.when(pl.program_id(1) == 0)
    def _init():
        sum_ref[...] = jnp.zeros_like(sum_ref)
        sq_ref[...] = jnp.zeros_like(sq_ref)

    rows = OH * Wh                                   # OW valid + (Wh-OW) garbage cols/row
    acc = jnp.zeros((rows, OCp), jnp.float32)
    for kh in range(KH):
        for kw in range(KW):
            phase = (kh % stride) * stride + (kw % stride)
            start = (kh // stride) * Wh + (kw // stride)
            lhs = x_ref[0, phase, pl.ds(start, rows), :]      # (rows, Cp), contiguous
            acc = acc + jnp.dot(lhs, w_ref[kh * KW + kw],
                                preferred_element_type=jnp.float32)

    conv_ref[0] = acc.astype(conv_ref.dtype)

    # BN batch stats from the f32 conv (before the bf16 store); mask out the
    # Wh-OW garbage columns so they do not pollute mean/var.
    col = jax.lax.broadcasted_iota(jnp.int32, (rows, 1), 0) % Wh
    accm = jnp.where(col < OW, acc, 0.0)
    sum_ref[...] += jnp.sum(accm, axis=0).reshape(1, 1, OCp)
    sq_ref[...] += jnp.sum(accm * accm, axis=0).reshape(1, 1, OCp)


# ---------------------------------------------------------------------------
# Kernel 2: folded BatchNorm (one FMA per element) + LeakyReLU.
# ---------------------------------------------------------------------------
def _bn_lrelu_kernel(conv_ref, scale_ref, shift_ref, o_ref, *, alpha):
    y = conv_ref[...].astype(jnp.float32) * scale_ref[...] + shift_ref[...]
    o_ref[...] = jnp.maximum(y, alpha * y).astype(o_ref.dtype)


def discriminator_block(x, weight, gamma, beta, *, stride=2, padding=1,
                        alpha=0.2, eps=1e-5):
    """x: [N, C, H, W] f32; weight: [OC, C, KH, KW]; gamma/beta: [OC]. Returns NCHW."""
    N, C, H, W = x.shape
    OC, _, KH, KW = weight.shape
    OH = (H + 2 * padding - KH) // stride + 1
    OW = (W + 2 * padding - KW) // stride + 1

    Cp = _round_up(C, 8)                                   # sublane-clean contraction
    OCp = _round_up(OC, 256) if OC >= 192 else _round_up(max(OC, 128), 128)

    # Padded spatial extents, rounded up so they split evenly into stride phases.
    Hs = _round_up(H + 2 * padding, stride)
    Ws = _round_up(W + 2 * padding, stride)
    Hh, Wh = Hs // stride, Ws // stride
    assert (KH - 1) // stride + OH <= Hh and (KW - 1) // stride + OW <= Wh
    assert Wh - OW >= (KW - 1) // stride              # garbage cols absorb the w-offset
    ROWS = OH * Wh                                    # conv rows stored per image
    Prows = _round_up(Hh * Wh + (KW - 1) // stride, 8)  # phase-plane rows (+tail pad)

    vmem_limit = _vmem_limit_bytes()
    n_outer = 2 if N % 2 == 0 else 1                  # v7x: both TCs on phase 1
    n_inner = N // n_outer

    # ---- layout prep: ONE fused XLA copy pass (~input-sized, no im2col blowup) ----
    # NCHW -> NHWC, zero-pad, split H/W into (coarse, stride-phase), flatten plane.
    xn = jnp.transpose(x, (0, 2, 3, 1)).astype(jnp.bfloat16)
    xn = jnp.pad(xn, ((0, 0),
                      (padding, Hs - H - padding),
                      (padding, Ws - W - padding),
                      (0, Cp - C)))
    xs = (xn.reshape(N, Hh, stride, Wh, stride, Cp)
            .transpose(0, 2, 4, 1, 3, 5)
            .reshape(N, stride * stride, Hh * Wh, Cp))
    xs = jnp.pad(xs, ((0, 0), (0, 0), (0, Prows - Hh * Wh), (0, 0)))
    # xs[n, hs*stride+ws, hh*Wh+wh, c] == xpad[n, hh*stride+hs, wh*stride+ws, c]

    # Weight: (OC, C, KH, KW) -> (KH*KW, Cp, OCp), tap index = kh*KW + kw.
    w = jnp.transpose(weight, (2, 3, 1, 0)).reshape(KH * KW, C, OC)
    w = jnp.pad(w, ((0, 0), (0, Cp - C), (0, OCp - OC))).astype(jnp.bfloat16)

    gamma_p = jnp.pad(gamma.astype(jnp.float32), (0, OCp - OC))
    beta_p = jnp.pad(beta.astype(jnp.float32), (0, OCp - OC))

    # ---- phase 1: fused im2col conv + per-channel sum / sum-of-squares ----------
    k1 = functools.partial(_conv_stats_kernel, KH=KH, KW=KW, OH=OH, OW=OW,
                           Wh=Wh, stride=stride, Cp=Cp, OCp=OCp)
    ce1 = pl.CostEstimate(
        flops=2 * N * ROWS * Cp * OCp * KH * KW, transcendentals=0,
        bytes_accessed=(N * stride * stride * Prows * Cp * 2
                        + KH * KW * Cp * OCp * 2
                        + N * ROWS * OCp * 2 + 2 * n_outer * OCp * 4))
    conv3, ch_sum, ch_sq = pl.pallas_call(
        k1,
        out_shape=(jax.ShapeDtypeStruct((N, ROWS, OCp), jnp.bfloat16),
                   jax.ShapeDtypeStruct((n_outer, 1, OCp), jnp.float32),
                   jax.ShapeDtypeStruct((n_outer, 1, OCp), jnp.float32)),
        grid=(n_outer, n_inner),
        in_specs=[
            pl.BlockSpec((1, stride * stride, Prows, Cp),
                         lambda o, i: (o * n_inner + i, 0, 0, 0)),
            pl.BlockSpec((KH * KW, Cp, OCp), lambda o, i: (0, 0, 0)),
        ],
        out_specs=(
            pl.BlockSpec((1, ROWS, OCp), lambda o, i: (o * n_inner + i, 0, 0)),
            pl.BlockSpec((1, 1, OCp), lambda o, i: (o, 0, 0)),
            pl.BlockSpec((1, 1, OCp), lambda o, i: (o, 0, 0)),
        ),
        compiler_params=pltpu.CompilerParams(
            dimension_semantics=("parallel", "arbitrary"),
            vmem_limit_bytes=vmem_limit),
        cost_estimate=ce1,
    )(xs, w)

    # ---- tiny [OC] fold: batch stats -> per-channel scale/shift (all f32) -------
    m = jnp.float32(N * OH * OW)                  # true element count per channel
    tot = jnp.sum(ch_sum, axis=0)[0]
    tot_sq = jnp.sum(ch_sq, axis=0)[0]
    mean = tot / m
    var = jnp.maximum(tot_sq / m - mean * mean, 0.0)        # biased var (train mode)
    inv_std = jax.lax.rsqrt(var + jnp.float32(eps))
    scale = (gamma_p * inv_std).reshape(1, 1, OCp)
    shift = (beta_p - mean * gamma_p * inv_std).reshape(1, 1, OCp)

    # ---- phase 2: normalize (one FMA) + LeakyReLU, fully parallel ---------------
    ce2 = pl.CostEstimate(flops=4 * N * ROWS * OCp, transcendentals=0,
                          bytes_accessed=N * ROWS * OCp * (2 + 4) + 2 * OCp * 4)
    out3 = pl.pallas_call(
        functools.partial(_bn_lrelu_kernel, alpha=float(alpha)),
        out_shape=jax.ShapeDtypeStruct((N, ROWS, OCp), jnp.float32),
        grid=(N,),
        in_specs=[pl.BlockSpec((1, ROWS, OCp), lambda n: (n, 0, 0)),
                  pl.BlockSpec((1, 1, OCp), lambda n: (0, 0, 0)),
                  pl.BlockSpec((1, 1, OCp), lambda n: (0, 0, 0))],
        out_specs=pl.BlockSpec((1, ROWS, OCp), lambda n: (n, 0, 0)),
        compiler_params=pltpu.CompilerParams(
            dimension_semantics=("parallel",),
            vmem_limit_bytes=vmem_limit),
        cost_estimate=ce2,
    )(conv3, scale, shift)

    # Slice garbage columns AND padded channels BEFORE the NCHW transpose so the
    # trailing XLA pass only touches N*OH*OW*OC elements.  (Emitting NHWC to the
    # consumer would remove this pass entirely.)
    out = out3.reshape(N, OH, Wh, OCp)[:, :, :OW, :OC]
    return jnp.transpose(out, (0, 3, 1, 2))
    # TODO(synk): BatchNorm2d's running_mean/running_var buffer update is a
    # training-mode side effect, not part of the returned activation; not emitted.


def _reference(x, weight, gamma, beta, *, stride=2, padding=1, alpha=0.2, eps=1e-5):
    # Pure f32 reference (true conv numerics).
    conv = jax.lax.conv_general_dilated(
        x, weight, window_strides=(stride, stride),
        padding=((padding, padding), (padding, padding)),
        dimension_numbers=("NCHW", "OIHW", "NCHW"),
        precision=jax.lax.Precision.HIGHEST)
    mean = jnp.mean(conv, axis=(0, 2, 3), keepdims=True)
    var = jnp.mean((conv - mean) ** 2, axis=(0, 2, 3), keepdims=True)
    y = (conv - mean) * jax.lax.rsqrt(var + eps)
    y = y * gamma.reshape(1, -1, 1, 1) + beta.reshape(1, -1, 1, 1)
    return jnp.where(y > 0, y, alpha * y)


if __name__ == "__main__":
    key = jax.random.PRNGKey(0)
    kx, kw = jax.random.split(key)

    # Small shapes consistent with the module: N=2, C_in=3 (default), H=W=16, OC=8, k=4.
    N, C, H, W = 2, 3, 16, 16
    OC, KH = 8, 4

    x = jax.random.normal(kx, (N, C, H, W), dtype=jnp.float32)
    weight = jax.random.normal(kw, (OC, C, KH, KH), dtype=jnp.float32) * 0.1
    gamma = jnp.ones((OC,), dtype=jnp.float32)   # BatchNorm2d default init
    beta = jnp.zeros((OC,), dtype=jnp.float32)

    fn = jax.jit(discriminator_block)
    out = jax.block_until_ready(fn(x, weight, gamma, beta))

    ref = _reference(x, weight, gamma, beta)
    assert out.shape == (N, OC, H // 2, W // 2), out.shape
    err = float(jnp.max(jnp.abs(out - ref)))
    # Kernel uses bf16 matmul inputs + bf16 inter-phase activations (f32 accum /
    # stats); compared against a pure-f32 reference on unit-variance data.
    assert err < 6e-2, err

    print("KERNEL_OK")
</pallas_src>

<mosaic_0001>
module attributes {stable_mosaic.version = 11 : i64} {
  func.func @_conv_stats_kernel(%arg0: i32, %arg1: i32, %arg2: memref<1x4x88x8xbf16, #tpu.memory_space<vmem>>, %arg3: memref<16x8x128xbf16, #tpu.memory_space<vmem>>, %arg4: memref<1x72x128xbf16, #tpu.memory_space<vmem>>, %arg5: memref<1x1x128xf32, #tpu.memory_space<vmem>>, %arg6: memref<1x1x128xf32, #tpu.memory_space<vmem>>) attributes {dimension_semantics = [#tpu.dimension_semantics<parallel>, #tpu.dimension_semantics<arbitrary>], iteration_bounds = array<i64: 2, 1>, scalar_prefetch = 0 : i64, scratch_operands = 0 : i64, tpu.core_type = #tpu.core_type<tc>, window_params = [{transform_indices = @transform_0, window_bounds = array<i64: 1, 4, 88, 8>}, {pipeline_mode = #tpu.pipeline_mode<synchronous>, transform_indices = @transform_1, window_bounds = array<i64: 16, 8, 128>}, {transform_indices = @transform_2, window_bounds = array<i64: 1, 72, 128>}, {transform_indices = @transform_3, window_bounds = array<i64: 1, 1, 128>}, {transform_indices = @transform_4, window_bounds = array<i64: 1, 1, 128>}]} {
    %c0_i32 = arith.constant 0 : i32
    %0 = arith.cmpi eq, %arg1, %c0_i32 : i32
    %1 = arith.extui %0 : i1 to i32
    %c0_i32_0 = arith.constant 0 : i32
    %2 = arith.cmpi ne, %1, %c0_i32_0 : i32
    scf.if %2 {
      %cst_135 = arith.constant 0.000000e+00 : f32
      %138 = vector.broadcast %cst_135 : f32 to vector<1x1x128xf32>
      %c0_136 = arith.constant 0 : index
      %c0_137 = arith.constant 0 : index
      %c0_138 = arith.constant 0 : index
      %139 = vector.load %arg5[%c0_136, %c0_137, %c0_138] : memref<1x1x128xf32, #tpu.memory_space<vmem>>, vector<1x1x128xf32>
      tpu.vector_store %arg5[%c0_136, %c0_137, %c0_138], %138 {strides = array<i32>} : memref<1x1x128xf32, #tpu.memory_space<vmem>>, vector<1x1x128xf32>,
      %cst_139 = arith.constant 0.000000e+00 : f32
      %140 = vector.broadcast %cst_139 : f32 to vector<1x1x128xf32>
      %c0_140 = arith.constant 0 : index
      %c0_141 = arith.constant 0 : index
      %c0_142 = arith.constant 0 : index
      %141 = vector.load %arg6[%c0_140, %c0_141, %c0_142] : memref<1x1x128xf32, #tpu.memory_space<vmem>>, vector<1x1x128xf32>
      tpu.vector_store %arg6[%c0_140, %c0_141, %c0_142], %140 {strides = array<i32>} : memref<1x1x128xf32, #tpu.memory_space<vmem>>, vector<1x1x128xf32>,
    } else {
    }
    %cst = arith.constant 0.000000e+00 : f32
    %3 = vector.broadcast %cst : f32 to vector<72x128xf32>
    %c0 = arith.constant 0 : index
    %c0_1 = arith.constant 0 : index
    %c0_2 = arith.constant 0 : index
    %c0_3 = arith.constant 0 : index
    %4 = vector.load %arg2[%c0, %c0_1, %c0_2, %c0_3] : memref<1x4x88x8xbf16, #tpu.memory_space<vmem>>, vector<1x1x72x8xbf16>
    %5 = vector.shape_cast %4 : vector<1x1x72x8xbf16> to vector<72x8xbf16>
    %c0_4 = arith.constant 0 : index
    %c0_5 = arith.constant 0 : index
    %c0_6 = arith.constant 0 : index
    %6 = vector.load %arg3[%c0_4, %c0_5, %c0_6] : memref<16x8x128xbf16, #tpu.memory_space<vmem>>, vector<1x8x128xbf16>
    %7 = vector.shape_cast %6 : vector<1x8x128xbf16> to vector<8x128xbf16>
    %cst_7 = arith.constant dense<0.000000e+00> : vector<72x128xf32>
    %8 = tpu.matmul %5, %7, %cst_7 {dimension_numbers = #tpu.dot_dimension_numbers<[1], [0], [0], [1], [0, 0, 1, 1], [], []>} : vector<72x8xbf16>, vector<8x128xbf16>, vector<72x128xf32> -> vector<72x128xf32>
    %9 = arith.addf %3, %8 : vector<72x128xf32>
    %c0_8 = arith.constant 0 : index
    %c1 = arith.constant 1 : index
    %c0_9 = arith.constant 0 : index
    %c0_10 = arith.constant 0 : index
    %10 = vector.load %arg2[%c0_8, %c1, %c0_9, %c0_10] : memref<1x4x88x8xbf16, #tpu.memory_space<vmem>>, vector<1x1x72x8xbf16>
    %11 = vector.shape_cast %10 : vector<1x1x72x8xbf16> to vector<72x8xbf16>
    %c1_11 = arith.constant 1 : index
    %c0_12 = arith.constant 0 : index
    %c0_13 = arith.constant 0 : index
    %12 = vector.load %arg3[%c1_11, %c0_12, %c0_13] : memref<16x8x128xbf16, #tpu.memory_space<vmem>>, vector<1x8x128xbf16>
    %13 = vector.shape_cast %12 : vector<1x8x128xbf16> to vector<8x128xbf16>
    %cst_14 = arith.constant dense<0.000000e+00> : vector<72x128xf32>
    %14 = tpu.matmul %11, %13, %cst_14 {dimension_numbers = #tpu.dot_dimension_numbers<[1], [0], [0], [1], [0, 0, 1, 1], [], []>} : vector<72x8xbf16>, vector<8x128xbf16>, vector<72x128xf32> -> vector<72x128xf32>
    %15 = arith.addf %9, %14 : vector<72x128xf32>
    %c0_15 = arith.constant 0 : index
    %c0_16 = arith.constant 0 : index
    %c1_17 = arith.constant 1 : index
    %c0_18 = arith.constant 0 : index
    %16 = vector.load %arg2[%c0_15, %c0_16, %c1_17, %c0_18] : memref<1x4x88x8xbf16, #tpu.memory_space<vmem>>, vector<1x1x72x8xbf16>
    %17 = vector.shape_cast %16 : vector<1x1x72x8xbf16> to vector<72x8xbf16>
    %c2 = arith.constant 2 : index
    %c0_19 = arith.constant 0 : index
    %c0_20 = arith.constant 0 : index
    %18 = vector.load %arg3[%c2, %c0_19, %c0_20] : memref<16x8x128xbf16, #tpu.memory_space<vmem>>, vector<1x8x128xbf16>
    %19 = vector.shape_cast %18 : vector<1x8x128xbf16> to vector<8x128xbf16>
    %cst_21 = arith.constant dense<0.000000e+00> : vector<72x128xf32>
    %20 = tpu.matmul %17, %19, %cst_21 {dimension_numbers = #tpu.dot_dimension_numbers<[1], [0], [0], [1], [0, 0, 1, 1], [], []>} : vector<72x8xbf16>, vector<8x128xbf16>, vector<72x128xf32> -> vector<72x128xf32>
    %21 = arith.addf %15, %20 : vector<72x128xf32>
    %c0_22 = arith.constant 0 : index
    %c1_23 = arith.constant 1 : index
    %c1_24 = arith.constant 1 : index
    %c0_25 = arith.constant 0 : index
    %22 = vector.load %arg2[%c0_22, %c1_23, %c1_24, %c0_25] : memref<1x4x88x8xbf16, #tpu.memory_space<vmem>>, vector<1x1x72x8xbf16>
    %23 = vector.shape_cast %22 : vector<1x1x72x8xbf16> to vector<72x8xbf16>
    %c3 = arith.constant 3 : index
    %c0_26 = arith.constant 0 : index
    %c0_27 = arith.constant 0 : index
    %24 = vector.load %arg3[%c3, %c0_26, %c0_27] : memref<16x8x128xbf16, #tpu.memory_space<vmem>>, vector<1x8x128xbf16>
    %25 = vector.shape_cast %24 : vector<1x8x128xbf16> to vector<8x128xbf16>
    %cst_28 = arith.constant dense<0.000000e+00> : vector<72x128xf32>
    %26 = tpu.matmul %23, %25, %cst_28 {dimension_numbers = #tpu.dot_dimension_numbers<[1], [0], [0], [1], [0, 0, 1, 1], [], []>} : vector<72x8xbf16>, vector<8x128xbf16>, vector<72x128xf32> -> vector<72x128xf32>
    %27 = arith.addf %21, %26 : vector<72x128xf32>
    %c0_29 = arith.constant 0 : index
    %c2_30 = arith.constant 2 : index
    %c0_31 = arith.constant 0 : index
    %c0_32 = arith.constant 0 : index
    %28 = vector.load %arg2[%c0_29, %c2_30, %c0_31, %c0_32] : memref<1x4x88x8xbf16, #tpu.memory_space<vmem>>, vector<1x1x72x8xbf16>
    %29 = vector.shape_cast %28 : vector<1x1x72x8xbf16> to vector<72x8xbf16>
    %c4 = arith.constant 4 : index
    %c0_33 = arith.constant 0 : index
    %c0_34 = arith.constant 0 : index
    %30 = vector.load %arg3[%c4, %c0_33, %c0_34] : memref<16x8x128xbf16, #tpu.memory_space<vmem>>, vector<1x8x128xbf16>
    %31 = vector.shape_cast %30 : vector<1x8x128xbf16> to vector<8x128xbf16>
    %cst_35 = arith.constant dense<0.000000e+00> : vector<72x128xf32>
    %32 = tpu.matmul %29, %31, %cst_35 {dimension_numbers = #tpu.dot_dimension_numbers<[1], [0], [0], [1], [0, 0, 1, 1], [], []>} : vector<72x8xbf16>, vector<8x128xbf16>, vector<72x128xf32> -> vector<72x128xf32>
    %33 = arith.addf %27, %32 : vector<72x128xf32>
    %c0_36 = arith.constant 0 : index
    %c3_37 = arith.constant 3 : index
    %c0_38 = arith.constant 0 : index
    %c0_39 = arith.constant 0 : index
    %34 = vector.load %arg2[%c0_36, %c3_37, %c0_38, %c0_39] : memref<1x4x88x8xbf16, #tpu.memory_space<vmem>>, vector<1x1x72x8xbf16>
    %35 = vector.shape_cast %34 : vector<1x1x72x8xbf16> to vector<72x8xbf16>
    %c5 = arith.constant 5 : index
    %c0_40 = arith.constant 0 : index
    %c0_41 = arith.constant 0 : index
    %36 = vector.load %arg3[%c5, %c0_40, %c0_41] : memref<16x8x128xbf16, #tpu.memory_space<vmem>>, vector<1x8x128xbf16>
    %37 = vector.shape_cast %36 : vector<1x8x128xbf16> to vector<8x128xbf16>
    %cst_42 = arith.constant dense<0.000000e+00> : vector<72x128xf32>
    %38 = tpu.matmul %35, %37, %cst_42 {dimension_numbers = #tpu.dot_dimension_numbers<[1], [0], [0], [1], [0, 0, 1, 1], [], []>} : vector<72x8xbf16>, vector<8x128xbf16>, vector<72x128xf32> -> vector<72x128xf32>
    %39 = arith.addf %33, %38 : vector<72x128xf32>
    %c0_43 = arith.constant 0 : index
    %c2_44 = arith.constant 2 : index
    %c1_45 = arith.constant 1 : index
    %c0_46 = arith.constant 0 : index
    %40 = vector.load %arg2[%c0_43, %c2_44, %c1_45, %c0_46] : memref<1x4x88x8xbf16, #tpu.memory_space<vmem>>, vector<1x1x72x8xbf16>
    %41 = vector.shape_cast %40 : vector<1x1x72x8xbf16> to vector<72x8xbf16>
    %c6 = arith.constant 6 : index
    %c0_47 = arith.constant 0 : index
    %c0_48 = arith.constant 0 : index
    %42 = vector.load %arg3[%c6, %c0_47, %c0_48] : memref<16x8x128xbf16, #tpu.memory_space<vmem>>, vector<1x8x128xbf16>
    %43 = vector.shape_cast %42 : vector<1x8x128xbf16> to vector<8x128xbf16>
    %cst_49 = arith.constant dense<0.000000e+00> : vector<72x128xf32>
    %44 = tpu.matmul %41, %43, %cst_49 {dimension_numbers = #tpu.dot_dimension_numbers<[1], [0], [0], [1], [0, 0, 1, 1], [], []>} : vector<72x8xbf16>, vector<8x128xbf16>, vector<72x128xf32> -> vector<72x128xf32>
    %45 = arith.addf %39, %44 : vector<72x128xf32>
    %c0_50 = arith.constant 0 : index
    %c3_51 = arith.constant 3 : index
    %c1_52 = arith.constant 1 : index
    %c0_53 = arith.constant 0 : index
    %46 = vector.load %arg2[%c0_50, %c3_51, %c1_52, %c0_53] : memref<1x4x88x8xbf16, #tpu.memory_space<vmem>>, vector<1x1x72x8xbf16>
    %47 = vector.shape_cast %46 : vector<1x1x72x8xbf16> to vector<72x8xbf16>
    %c7 = arith.constant 7 : index
    %c0_54 = arith.constant 0 : index
    %c0_55 = arith.constant 0 : index
    %48 = vector.load %arg3[%c7, %c0_54, %c0_55] : memref<16x8x128xbf16, #tpu.memory_space<vmem>>, vector<1x8x128xbf16>
    %49 = vector.shape_cast %48 : vector<1x8x128xbf16> to vector<8x128xbf16>
    %cst_56 = arith.constant dense<0.000000e+00> : vector<72x128xf32>
    %50 = tpu.matmul %47, %49, %cst_56 {dimension_numbers = #tpu.dot_dimension_numbers<[1], [0], [0], [1], [0, 0, 1, 1], [], []>} : vector<72x8xbf16>, vector<8x128xbf16>, vector<72x128xf32> -> vector<72x128xf32>
    %51 = arith.addf %45, %50 : vector<72x128xf32>
    %c0_57 = arith.constant 0 : index
    %c0_58 = arith.constant 0 : index
    %c9 = arith.constant 9 : index
    %c0_59 = arith.constant 0 : index
    %52 = vector.load %arg2[%c0_57, %c0_58, %c9, %c0_59] : memref<1x4x88x8xbf16, #tpu.memory_space<vmem>>, vector<1x1x72x8xbf16>
    %53 = vector.shape_cast %52 : vector<1x1x72x8xbf16> to vector<72x8xbf16>
    %c8 = arith.constant 8 : index
    %c0_60 = arith.constant 0 : index
    %c0_61 = arith.constant 0 : index
    %54 = vector.load %arg3[%c8, %c0_60, %c0_61] : memref<16x8x128xbf16, #tpu.memory_space<vmem>>, vector<1x8x128xbf16>
    %55 = vector.shape_cast %54 : vector<1x8x128xbf16> to vector<8x128xbf16>
    %cst_62 = arith.constant dense<0.000000e+00> : vector<72x128xf32>
    %56 = tpu.matmul %53, %55, %cst_62 {dimension_numbers = #tpu.dot_dimension_numbers<[1], [0], [0], [1], [0, 0, 1, 1], [], []>} : vector<72x8xbf16>, vector<8x128xbf16>, vector<72x128xf32> -> vector<72x128xf32>
    %57 = arith.addf %51, %56 : vector<72x128xf32>
    %c0_63 = arith.constant 0 : index
    %c1_64 = arith.constant 1 : index
    %c9_65 = arith.constant 9 : index
    %c0_66 = arith.constant 0 : index
    %58 = vector.load %arg2[%c0_63, %c1_64, %c9_65, %c0_66] : memref<1x4x88x8xbf16, #tpu.memory_space<vmem>>, vector<1x1x72x8xbf16>
    %59 = vector.shape_cast %58 : vector<1x1x72x8xbf16> to vector<72x8xbf16>
    %c9_67 = arith.constant 9 : index
    %c0_68 = arith.constant 0 : index
    %c0_69 = arith.constant 0 : index
    %60 = vector.load %arg3[%c9_67, %c0_68, %c0_69] : memref<16x8x128xbf16, #tpu.memory_space<vmem>>, vector<1x8x128xbf16>
    %61 = vector.shape_cast %60 : vector<1x8x128xbf16> to vector<8x128xbf16>
    %cst_70 = arith.constant dense<0.000000e+00> : vector<72x128xf32>
    %62 = tpu.matmul %59, %61, %cst_70 {dimension_numbers = #tpu.dot_dimension_numbers<[1], [0], [0], [1], [0, 0, 1, 1], [], []>} : vector<72x8xbf16>, vector<8x128xbf16>, vector<72x128xf32> -> vector<72x128xf32>
    %63 = arith.addf %57, %62 : vector<72x128xf32>
    %c0_71 = arith.constant 0 : index
    %c0_72 = arith.constant 0 : index
    %c10 = arith.constant 10 : index
    %c0_73 = arith.constant 0 : index
    %64 = vector.load %arg2[%c0_71, %c0_72, %c10, %c0_73] : memref<1x4x88x8xbf16, #tpu.memory_space<vmem>>, vector<1x1x72x8xbf16>
    %65 = vector.shape_cast %64 : vector<1x1x72x8xbf16> to vector<72x8xbf16>
    %c10_74 = arith.constant 10 : index
    %c0_75 = arith.constant 0 : index
    %c0_76 = arith.constant 0 : index
    %66 = vector.load %arg3[%c10_74, %c0_75, %c0_76] : memref<16x8x128xbf16, #tpu.memory_space<vmem>>, vector<1x8x128xbf16>
    %67 = vector.shape_cast %66 : vector<1x8x128xbf16> to vector<8x128xbf16>
    %cst_77 = arith.constant dense<0.000000e+00> : vector<72x128xf32>
    %68 = tpu.matmul %65, %67, %cst_77 {dimension_numbers = #tpu.dot_dimension_numbers<[1], [0], [0], [1], [0, 0, 1, 1], [], []>} : vector<72x8xbf16>, vector<8x128xbf16>, vector<72x128xf32> -> vector<72x128xf32>
    %69 = arith.addf %63, %68 : vector<72x128xf32>
    %c0_78 = arith.constant 0 : index
    %c1_79 = arith.constant 1 : index
    %c10_80 = arith.constant 10 : index
    %c0_81 = arith.constant 0 : index
    %70 = vector.load %arg2[%c0_78, %c1_79, %c10_80, %c0_81] : memref<1x4x88x8xbf16, #tpu.memory_space<vmem>>, vector<1x1x72x8xbf16>
    %71 = vector.shape_cast %70 : vector<1x1x72x8xbf16> to vector<72x8xbf16>
    %c11 = arith.constant 11 : index
    %c0_82 = arith.constant 0 : index
    %c0_83 = arith.constant 0 : index
    %72 = vector.load %arg3[%c11, %c0_82, %c0_83] : memref<16x8x128xbf16, #tpu.memory_space<vmem>>, vector<1x8x128xbf16>
    %73 = vector.shape_cast %72 : vector<1x8x128xbf16> to vector<8x128xbf16>
    %cst_84 = arith.constant dense<0.000000e+00> : vector<72x128xf32>
    %74 = tpu.matmul %71, %73, %cst_84 {dimension_numbers = #tpu.dot_dimension_numbers<[1], [0], [0], [1], [0, 0, 1, 1], [], []>} : vector<72x8xbf16>, vector<8x128xbf16>, vector<72x128xf32> -> vector<72x128xf32>
    %75 = arith.addf %69, %74 : vector<72x128xf32>
    %c0_85 = arith.constant 0 : index
    %c2_86 = arith.constant 2 : index
    %c9_87 = arith.constant 9 : index
    %c0_88 = arith.constant 0 : index
    %76 = vector.load %arg2[%c0_85, %c2_86, %c9_87, %c0_88] : memref<1x4x88x8xbf16, #tpu.memory_space<vmem>>, vector<1x1x72x8xbf16>
    %77 = vector.shape_cast %76 : vector<1x1x72x8xbf16> to vector<72x8xbf16>
    %c12 = arith.constant 12 : index
    %c0_89 = arith.constant 0 : index
    %c0_90 = arith.constant 0 : index
    %78 = vector.load %arg3[%c12, %c0_89, %c0_90] : memref<16x8x128xbf16, #tpu.memory_space<vmem>>, vector<1x8x128xbf16>
    %79 = vector.shape_cast %78 : vector<1x8x128xbf16> to vector<8x128xbf16>
    %cst_91 = arith.constant dense<0.000000e+00> : vector<72x128xf32>
    %80 = tpu.matmul %77, %79, %cst_91 {dimension_numbers = #tpu.dot_dimension_numbers<[1], [0], [0], [1], [0, 0, 1, 1], [], []>} : vector<72x8xbf16>, vector<8x128xbf16>, vector<72x128xf32> -> vector<72x128xf32>
    %81 = arith.addf %75, %80 : vector<72x128xf32>
    %c0_92 = arith.constant 0 : index
    %c3_93 = arith.constant 3 : index
    %c9_94 = arith.constant 9 : index
    %c0_95 = arith.constant 0 : index
    %82 = vector.load %arg2[%c0_92, %c3_93, %c9_94, %c0_95] : memref<1x4x88x8xbf16, #tpu.memory_space<vmem>>, vector<1x1x72x8xbf16>
    %83 = vector.shape_cast %82 : vector<1x1x72x8xbf16> to vector<72x8xbf16>
    %c13 = arith.constant 13 : index
    %c0_96 = arith.constant 0 : index
    %c0_97 = arith.constant 0 : index
    %84 = vector.load %arg3[%c13, %c0_96, %c0_97] : memref<16x8x128xbf16, #tpu.memory_space<vmem>>, vector<1x8x128xbf16>
    %85 = vector.shape_cast %84 : vector<1x8x128xbf16> to vector<8x128xbf16>
    %cst_98 = arith.constant dense<0.000000e+00> : vector<72x128xf32>
    %86 = tpu.matmul %83, %85, %cst_98 {dimension_numbers = #tpu.dot_dimension_numbers<[1], [0], [0], [1], [0, 0, 1, 1], [], []>} : vector<72x8xbf16>, vector<8x128xbf16>, vector<72x128xf32> -> vector<72x128xf32>
    %87 = arith.addf %81, %86 : vector<72x128xf32>
    %c0_99 = arith.constant 0 : index
    %c2_100 = arith.constant 2 : index
    %c10_101 = arith.constant 10 : index
    %c0_102 = arith.constant 0 : index
    %88 = vector.load %arg2[%c0_99, %c2_100, %c10_101, %c0_102] : memref<1x4x88x8xbf16, #tpu.memory_space<vmem>>, vector<1x1x72x8xbf16>
    %89 = vector.shape_cast %88 : vector<1x1x72x8xbf16> to vector<72x8xbf16>
    %c14 = arith.constant 14 : index
    %c0_103 = arith.constant 0 : index
    %c0_104 = arith.constant 0 : index
    %90 = vector.load %arg3[%c14, %c0_103, %c0_104] : memref<16x8x128xbf16, #tpu.memory_space<vmem>>, vector<1x8x128xbf16>
    %91 = vector.shape_cast %90 : vector<1x8x128xbf16> to vector<8x128xbf16>
    %cst_105 = arith.constant dense<0.000000e+00> : vector<72x128xf32>
    %92 = tpu.matmul %89, %91, %cst_105 {dimension_numbers = #tpu.dot_dimension_numbers<[1], [0], [0], [1], [0, 0, 1, 1], [], []>} : vector<72x8xbf16>, vector<8x128xbf16>, vector<72x128xf32> -> vector<72x128xf32>
    %93 = arith.addf %87, %92 : vector<72x128xf32>
    %c0_106 = arith.constant 0 : index
    %c3_107 = arith.constant 3 : index
    %c10_108 = arith.constant 10 : index
    %c0_109 = arith.constant 0 : index
    %94 = vector.load %arg2[%c0_106, %c3_107, %c10_108, %c0_109] : memref<1x4x88x8xbf16, #tpu.memory_space<vmem>>, vector<1x1x72x8xbf16>
    %95 = vector.shape_cast %94 : vector<1x1x72x8xbf16> to vector<72x8xbf16>
    %c15 = arith.constant 15 : index
    %c0_110 = arith.constant 0 : index
    %c0_111 = arith.constant 0 : index
    %96 = vector.load %arg3[%c15, %c0_110, %c0_111] : memref<16x8x128xbf16, #tpu.memory_space<vmem>>, vector<1x8x128xbf16>
    %97 = vector.shape_cast %96 : vector<1x8x128xbf16> to vector<8x128xbf16>
    %cst_112 = arith.constant dense<0.000000e+00> : vector<72x128xf32>
    %98 = tpu.matmul %95, %97, %cst_112 {dimension_numbers = #tpu.dot_dimension_numbers<[1], [0], [0], [1], [0, 0, 1, 1], [], []>} : vector<72x8xbf16>, vector<8x128xbf16>, vector<72x128xf32> -> vector<72x128xf32>
    %99 = arith.addf %93, %98 : vector<72x128xf32>
    %100 = arith.truncf %99 : vector<72x128xf32> to vector<72x128xbf16>
    %c0_113 = arith.constant 0 : index
    %c0_114 = arith.constant 0 : index
    %c0_115 = arith.constant 0 : index
    %101 = vector.load %arg4[%c0_113, %c0_114, %c0_115] : memref<1x72x128xbf16, #tpu.memory_space<vmem>>, vector<1x72x128xbf16>
    %102 = vector.shape_cast %101 : vector<1x72x128xbf16> to vector<72x128xbf16>
    %103 = vector.shape_cast %100 : vector<72x128xbf16> to vector<1x72x128xbf16>
    tpu.vector_store %arg4[%c0_113, %c0_114, %c0_115], %103 {strides = array<i32>} : memref<1x72x128xbf16, #tpu.memory_space<vmem>>, vector<1x72x128xbf16>,
    %104 = tpu.iota {dimensions = array<i32: 0>} : vector<72x1xi32>
    %c9_i32 = arith.constant 9 : i32
    %c0_i32_116 = arith.constant 0 : i32
    %105 = arith.cmpi eq, %c9_i32, %c0_i32_116 : i32
    %c1_i32 = arith.constant 1 : i32
    %106 = arith.select %105, %c1_i32, %c9_i32 : i32
    %107 = vector.broadcast %106 : i32 to vector<72x1xi32>
    %108 = arith.remsi %104, %107 : vector<72x1xi32>
    %c0_i32_117 = arith.constant 0 : i32
    %109 = vector.broadcast %c0_i32_117 : i32 to vector<72x1xi32>
    %110 = arith.cmpi ne, %108, %109 : vector<72x1xi32>
    %c0_i32_118 = arith.constant 0 : i32
    %111 = vector.broadcast %c0_i32_118 : i32 to vector<72x1xi32>
    %112 = arith.cmpi slt, %108, %111 : vector<72x1xi32>
    %c0_i32_119 = arith.constant 0 : i32
    %113 = arith.cmpi slt, %106, %c0_i32_119 : i32
    %114 = vector.broadcast %113 : i1 to vector<72x1xi1>
    %115 = vector.broadcast %114 : vector<72x1xi1> to vector<72x1xi1>
    %116 = arith.xori %112, %115 : vector<72x1xi1>
    %117 = arith.andi %116, %110 : vector<72x1xi1>
    %118 = vector.broadcast %106 : i32 to vector<72x1xi32>
    %119 = arith.addi %108, %118 : vector<72x1xi32>
    %120 = arith.select %117, %119, %108 : vector<72x1xi1>, vector<72x1xi32>
    %c8_i32 = arith.constant 8 : i32
    %121 = vector.broadcast %c8_i32 : i32 to vector<72x1xi32>
    %122 = arith.cmpi slt, %120, %121 : vector<72x1xi32>
    %cst_120 = arith.constant 0.000000e+00 : f32
    %123 = vector.shape_cast %122 : vector<72x1xi1> to vector<72x1xi1>
    %124 = vector.broadcast %123 : vector<72x1xi1> to vector<72x128xi1>
    %125 = vector.broadcast %cst_120 : f32 to vector<72x128xf32>
    %126 = arith.select %124, %99, %125 : vector<72x128xi1>, vector<72x128xf32>
    %c0_121 = arith.constant 0 : index
    %c0_122 = arith.constant 0 : index
    %c0_123 = arith.constant 0 : index
    %127 = vector.load %arg5[%c0_121, %c0_122, %c0_123] : memref<1x1x128xf32, #tpu.memory_space<vmem>>, vector<1x1x128xf32>
    %cst_124 = arith.constant dense<0.000000e+00> : vector<128xf32>
    %128 = vector.multi_reduction <add>, %126, %cst_124 [0] : vector<72x128xf32> to vector<128xf32>
    %129 = vector.shape_cast %128 : vector<128xf32> to vector<1x1x128xf32>
    %130 = arith.addf %127, %129 : vector<1x1x128xf32>
    %c0_125 = arith.constant 0 : index
    %c0_126 = arith.constant 0 : index
    %c0_127 = arith.constant 0 : index
    %131 = vector.load %arg5[%c0_125, %c0_126, %c0_127] : memref<1x1x128xf32, #tpu.memory_space<vmem>>, vector<1x1x128xf32>
    tpu.vector_store %arg5[%c0_125, %c0_126, %c0_127], %130 {strides = array<i32>} : memref<1x1x128xf32, #tpu.memory_space<vmem>>, vector<1x1x128xf32>,
    %c0_128 = arith.constant 0 : index
    %c0_129 = arith.constant 0 : index
    %c0_130 = arith.constant 0 : index
    %132 = vector.load %arg6[%c0_128, %c0_129, %c0_130] : memref<1x1x128xf32, #tpu.memory_space<vmem>>, vector<1x1x128xf32>
    %133 = arith.mulf %126, %126 : vector<72x128xf32>
    %cst_131 = arith.constant dense<0.000000e+00> : vector<128xf32>
    %134 = vector.multi_reduction <add>, %133, %cst_131 [0] : vector<72x128xf32> to vector<128xf32>
    %135 = vector.shape_cast %134 : vector<128xf32> to vector<1x1x128xf32>
    %136 = arith.addf %132, %135 : vector<1x1x128xf32>
    %c0_132 = arith.constant 0 : index
    %c0_133 = arith.constant 0 : index
    %c0_134 = arith.constant 0 : index
    %137 = vector.load %arg6[%c0_132, %c0_133, %c0_134] : memref<1x1x128xf32, #tpu.memory_space<vmem>>, vector<1x1x128xf32>
    tpu.vector_store %arg6[%c0_132, %c0_133, %c0_134], %136 {strides = array<i32>} : memref<1x1x128xf32, #tpu.memory_space<vmem>>, vector<1x1x128xf32>,
    return
  }
  func.func @transform_0(%arg0: i32, %arg1: i32) -> (i32, i32, i32, i32) {
    %c1_i32 = arith.constant 1 : i32
    %0 = arith.muli %arg0, %c1_i32 : i32
    %1 = arith.addi %0, %arg1 : i32
    %c0_i32 = arith.constant 0 : i32
    %c0_i32_0 = arith.constant 0 : i32
    %c0_i32_1 = arith.constant 0 : i32
    %c0_i32_2 = arith.constant 0 : i32
    return %1, %c0_i32, %c0_i32_0, %c0_i32_1 : i32, i32, i32, i32
  }
  func.func @transform_1(%arg0: i32, %arg1: i32) -> (i32, i32, i32) {
    %c0_i32 = arith.constant 0 : i32
    %c0_i32_0 = arith.constant 0 : i32
    %c0_i32_1 = arith.constant 0 : i32
    %c0_i32_2 = arith.constant 0 : i32
    return %c0_i32, %c0_i32_0, %c0_i32_1 : i32, i32, i32
  }
  func.func @transform_2(%arg0: i32, %arg1: i32) -> (i32, i32, i32) {
    %c1_i32 = arith.constant 1 : i32
    %0 = arith.muli %arg0, %c1_i32 : i32
    %1 = arith.addi %0, %arg1 : i32
    %c0_i32 = arith.constant 0 : i32
    %c0_i32_0 = arith.constant 0 : i32
    %c0_i32_1 = arith.constant 0 : i32
    return %1, %c0_i32, %c0_i32_0 : i32, i32, i32
  }
  func.func @transform_3(%arg0: i32, %arg1: i32) -> (i32, i32, i32) {
    %c0_i32 = arith.constant 0 : i32
    %c0_i32_0 = arith.constant 0 : i32
    %c0_i32_1 = arith.constant 0 : i32
    return %arg0, %c0_i32, %c0_i32_0 : i32, i32, i32
  }
  func.func @transform_4(%arg0: i32, %arg1: i32) -> (i32, i32, i32) {
    %c0_i32 = arith.constant 0 : i32
    %c0_i32_0 = arith.constant 0 : i32
    %c0_i32_1 = arith.constant 0 : i32
    return %arg0, %c0_i32, %c0_i32_0 : i32, i32, i32
  }
}

module attributes {stable_mosaic.version = 11 : i64} {
  func.func @_bn_lrelu_kernel(%arg0: i32, %arg1: memref<1x72x128xbf16, #tpu.memory_space<vmem>>, %arg2: memref<1x1x128xf32, #tpu.memory_space<vmem>>, %arg3: memref<1x1x128xf32, #tpu.memory_space<vmem>>, %arg4: memref<1x72x128xf32, #tpu.memory_space<vmem>>) attributes {dimension_semantics = [#tpu.dimension_semantics<parallel>], iteration_bounds = array<i64: 2>, scalar_prefetch = 0 : i64, scratch_operands = 0 : i64, tpu.core_type = #tpu.core_type<tc>, window_params = [{transform_indices = @transform_0, window_bounds = array<i64: 1, 72, 128>}, {pipeline_mode = #tpu.pipeline_mode<synchronous>, transform_indices = @transform_1, window_bounds = array<i64: 1, 1, 128>}, {pipeline_mode = #tpu.pipeline_mode<synchronous>, transform_indices = @transform_2, window_bounds = array<i64: 1, 1, 128>}, {transform_indices = @transform_3, window_bounds = array<i64: 1, 72, 128>}]} {
    %c0 = arith.constant 0 : index
    %c0_0 = arith.constant 0 : index
    %c0_1 = arith.constant 0 : index
    %0 = vector.load %arg1[%c0, %c0_0, %c0_1] : memref<1x72x128xbf16, #tpu.memory_space<vmem>>, vector<1x72x128xbf16>
    %1 = arith.extf %0 : vector<1x72x128xbf16> to vector<1x72x128xf32>
    %c0_2 = arith.constant 0 : index
    %c0_3 = arith.constant 0 : index
    %c0_4 = arith.constant 0 : index
    %2 = vector.load %arg2[%c0_2, %c0_3, %c0_4] : memref<1x1x128xf32, #tpu.memory_space<vmem>>, vector<1x1x128xf32>
    %3 = vector.broadcast %2 : vector<1x1x128xf32> to vector<1x72x128xf32>
    %4 = arith.mulf %1, %3 : vector<1x72x128xf32>
    %c0_5 = arith.constant 0 : index
    %c0_6 = arith.constant 0 : index
    %c0_7 = arith.constant 0 : index
    %5 = vector.load %arg3[%c0_5, %c0_6, %c0_7] : memref<1x1x128xf32, #tpu.memory_space<vmem>>, vector<1x1x128xf32>
    %6 = vector.broadcast %5 : vector<1x1x128xf32> to vector<1x72x128xf32>
    %7 = arith.addf %4, %6 : vector<1x72x128xf32>
    %cst = arith.constant 2.000000e-01 : f32
    %8 = vector.broadcast %cst : f32 to vector<1x72x128xf32>
    %9 = arith.mulf %8, %7 : vector<1x72x128xf32>
    %10 = arith.maximumf %7, %9 : vector<1x72x128xf32>
    %c0_8 = arith.constant 0 : index
    %c0_9 = arith.constant 0 : index
    %c0_10 = arith.constant 0 : index
    %11 = vector.load %arg4[%c0_8, %c0_9, %c0_10] : memref<1x72x128xf32, #tpu.memory_space<vmem>>, vector<1x72x128xf32>
    tpu.vector_store %arg4[%c0_8, %c0_9, %c0_10], %10 {strides = array<i32>} : memref<1x72x128xf32, #tpu.memory_space<vmem>>, vector<1x72x128xf32>,
    return
  }
  func.func @transform_0(%arg0: i32) -> (i32, i32, i32) {
    %c0_i32 = arith.constant 0 : i32
    %c0_i32_0 = arith.constant 0 : i32
    %c0_i32_1 = arith.constant 0 : i32
    return %arg0, %c0_i32, %c0_i32_0 : i32, i32, i32
  }
  func.func @transform_1(%arg0: i32) -> (i32, i32, i32) {
    %c0_i32 = arith.constant 0 : i32
    %c0_i32_0 = arith.constant 0 : i32
    %c0_i32_1 = arith.constant 0 : i32
    %c0_i32_2 = arith.constant 0 : i32
    return %c0_i32, %c0_i32_0, %c0_i32_1 : i32, i32, i32
  }
  func.func @transform_2(%arg0: i32) -> (i32, i32, i32) {
    %c0_i32 = arith.constant 0 : i32
    %c0_i32_0 = arith.constant 0 : i32
    %c0_i32_1 = arith.constant 0 : i32
    %c0_i32_2 = arith.constant 0 : i32
    return %c0_i32, %c0_i32_0, %c0_i32_1 : i32, i32, i32
  }
  func.func @transform_3(%arg0: i32) -> (i32, i32, i32) {
    %c0_i32 = arith.constant 0 : i32
    %c0_i32_0 = arith.constant 0 : i32
    %c0_i32_1 = arith.constant 0 : i32
    return %arg0, %c0_i32, %c0_i32_0 : i32, i32, i32
  }
}

</mosaic_0001>

<llo_original>
// kernel: discriminator_block.3
$region0: #{discriminator_block.3}
  #allocation0 [shape = 'u32[]', space=smem, size = 0x4, offset = 0x4, fixed_abs, tag = 'smem constant byte address 0x4 - core index']
  #allocation1 [shape = 'u32[144,128]{1,0:T(1,128)}', space=vmem, size = 0x12000, scoped, tag = 'internal scratch']
  %s0 = inlined_call_operand.vmem [shape: bf16[2,72,128], index: 0, kind: input, shape index: {}]
  %s1 = inlined_call_operand.vmem [shape: f32[1,1,128], index: 1, kind: input, shape index: {}]
  %s2 = inlined_call_operand.vmem [shape: f32[1,1,128], index: 2, kind: input, shape index: {}]
  %s3 = inlined_call_operand.vmem [shape: f32[2,72,128], index: 3, kind: output, shape index: {}]
  %s4 = sld [smem:[#allocation0]]
  $region45: #{discriminator_block.3} parent=0
    _
  %s6 = ssub.s32 1, %s4
  %s7 = scalar_select 0, %s6, %s4
  loop: start=0, step=1, limit=4
  $region2: #{discriminator_block.3} parent=0 // loop_pre_header
    _
  $region3: #{discriminator_block.3} parent=0 // loop_header
    %s9 = sphi 0, %s13
    %p10 = scmp.ge.s32.totalorder %s9, 4
    %s19 = sphi 0, %s21
    %s22 = sphi 0, %s19
    %s23 = sphi 0, %s22
    %s39 = sphi 0, %s23
    %s43 = sphi 0, %s43
    %s45 = sphi 0, %s43
    %s46 = sphi 0, %s45
    %s60 = sphi 0, %s46
    %s64 = sphi 0, %s64
    %s66 = sphi 0, %s64
    %s67 = sphi 0, %s66
    %s81 = sphi 0, %s67
    %s87 = sphi 0, %s89
    %s90 = sphi 0, %s87
    %s91 = sphi 0, %s90
    %s107 = sphi 0, %s91
  $region4: #{discriminator_block.3} parent=0 // loop_header_branch
    %12 = sbr.rel (%p10) target = $region8
  $region5: #{discriminator_block.3} parent=0 // loop_body
    %s14 = ssub.s32 %s9, 1
    %s15 = ssub.s32 %s9, 2
    %s16 = sadd.s32 %s9, 1
    %s17 = ssub.s32 %s9, %s16
    %p18 = scmp.eq.s32.totalorder %s17, 0
    %s20 = sadd.s32 %s19, 1
    %s21 = scalar_select %p18, %s19, %s20
    %p24 = pneg %p18
    %p25 = scmp.eq.s32.totalorder %s9, 1
    %p26 = por %p24, %p25
    %p27 = scmp.ne.s32.totalorder %s19, %s22
    %p28 = scmp.eq.s32.totalorder %s9, 0
    %p29 = por %p27, %p28
    %p30 = scmp.ne.s32.totalorder %s19, %s22
    %p31 = scmp.eq.s32.totalorder %s14, 1
    %p32 = por %p30, %p31
    %p33 = scmp.ne.s32.totalorder %s22, %s23
    %p34 = scmp.eq.s32.totalorder %s14, 0
    %p35 = por %p33, %p34
    %p36 = scmp.ne.s32.totalorder %s22, %s23
    %p37 = scmp.eq.s32.totalorder %s15, 1
    %p38 = por %p36, %p37
    %p40 = scmp.ne.s32.totalorder %s23, %s39
    %p41 = scmp.eq.s32.totalorder %s15, 0
    %p42 = por %p40, %p41
    %s44 = sadd.s32 %s43, 1
    %p47 = scmp.eq.s32.totalorder %s9, 1
    %p48 = scmp.ne.s32.totalorder %s43, %s45
    %p49 = scmp.eq.s32.totalorder %s9, 0
    %p50 = por %p48, %p49
    %p51 = scmp.ne.s32.totalorder %s43, %s45
    %p52 = scmp.eq.s32.totalorder %s14, 1
    %p53 = por %p51, %p52
    %p54 = scmp.ne.s32.totalorder %s45, %s46
    %p55 = scmp.eq.s32.totalorder %s14, 0
    %p56 = por %p54, %p55
    %p57 = scmp.ne.s32.totalorder %s45, %s46
    %p58 = scmp.eq.s32.totalorder %s15, 1
    %p59 = por %p57, %p58
    %p61 = scmp.ne.s32.totalorder %s46, %s60
    %p62 = scmp.eq.s32.totalorder %s15, 0
    %p63 = por %p61, %p62
    %s65 = sadd.s32 %s64, 1
    %p68 = scmp.eq.s32.totalorder %s9, 1
    %p69 = scmp.ne.s32.totalorder %s64, %s66
    %p70 = scmp.eq.s32.totalorder %s9, 0
    %p71 = por %p69, %p70
    %p72 = scmp.ne.s32.totalorder %s64, %s66
    %p73 = scmp.eq.s32.totalorder %s14, 1
    %p74 = por %p72, %p73
    %p75 = scmp.ne.s32.totalorder %s66, %s67
    %p76 = scmp.eq.s32.totalorder %s14, 0
    %p77 = por %p75, %p76
    %p78 = scmp.ne.s32.totalorder %s66, %s67
    %p79 = scmp.eq.s32.totalorder %s15, 1
    %p80 = por %p78, %p79
    %p82 = scmp.ne.s32.totalorder %s67, %s81
    %p83 = scmp.eq.s32.totalorder %s15, 0
    %p84 = por %p82, %p83
    %s85 = ssub.s32 %s9, %s16
    %p86 = scmp.eq.s32.totalorder %s85, 0
    %s88 = sadd.s32 %s87, 1
    %s89 = scalar_select %p86, %s87, %s88
    %p92 = pneg %p86
    %p93 = scmp.eq.s32.totalorder %s9, 1
    %p94 = por %p92, %p93
    %p95 = scmp.ne.s32.totalorder %s87, %s90
    %p96 = scmp.eq.s32.totalorder %s9, 0
    %p97 = por %p95, %p96
    %p98 = scmp.ne.s32.totalorder %s87, %s90
    %p99 = scmp.eq.s32.totalorder %s14, 1
    %p100 = por %p98, %p99
    %p101 = scmp.ne.s32.totalorder %s90, %s91
    %p102 = scmp.eq.s32.totalorder %s14, 0
    %p103 = por %p101, %p102
    %p104 = scmp.ne.s32.totalorder %s90, %s91
    %p105 = scmp.eq.s32.totalorder %s15, 1
    %p106 = por %p104, %p105
    %p108 = scmp.ne.s32.totalorder %s91, %s107
    %p109 = scmp.eq.s32.totalorder %s15, 0
    %p110 = por %p108, %p109
    %p111 = scmp.le.s32.totalorder 1, %s9
    %p112 = scmp.lt.s32.totalorder %s9, 3
    %p113 = pnand %p111, %p112
    %p114 = pneg %p113
    // Predicated region
    $region9: #{discriminator_block.3} parent=5 // pred_check
      _
    $region10: #{discriminator_block.3} parent=5 // pred_check_branch
      %116 = sbr.rel (%p113) target = $region12
    $region11: #{discriminator_block.3} parent=5 // pred_region
      %s117 = ssub.s32 %s9, 1
      // Predicated region
      $region13: #{discriminator_block.3} parent=11 // pred_check
        %p118 = pneg %p56
      $region14: #{discriminator_block.3} parent=11 // pred_check_branch
        %120 = sbr.rel (%p118) target = $region16
      $region15: #{discriminator_block.3} parent=11 // pred_region
        _
      $region16: #{discriminator_block.3} parent=11 // pred_fallthru
        _
      // Predicated region
      $region17: #{discriminator_block.3} parent=11 // pred_check
        %p121 = pneg %p77
      $region18: #{discriminator_block.3} parent=11 // pred_check_branch
        %123 = sbr.rel (%p121) target = $region20
      $region19: #{discriminator_block.3} parent=11 // pred_region
        _
      $region20: #{discriminator_block.3} parent=11 // pred_fallthru
        _
    $region12: #{discriminator_block.3} parent=5 // pred_fallthru
      _
    %p124 = scmp.lt.s32.totalorder %s9, 2
    // Predicated region
    $region21: #{discriminator_block.3} parent=5 // pred_check
      %p125 = pneg %p124
    $region22: #{discriminator_block.3} parent=5 // pred_check_branch
      %127 = sbr.rel (%p125) target = $region24
    $region23: #{discriminator_block.3} parent=5 // pred_region
      // Predicated region
      $region25: #{discriminator_block.3} parent=23 // pred_check
        %p128 = pneg %p29
      $region26: #{discriminator_block.3} parent=23 // pred_check_branch
        %130 = sbr.rel (%p128) target = $region28
      $region27: #{discriminator_block.3} parent=23 // pred_region
        %p131 = scmp.lt.s32.totalorder %s9, 1
        %s132 = scalar_select %p131, %s9, 1
        %s133 = smul.addr %s132, 9
        %s134 = smul.addr %s133, 4
        %s135 = scalar_lea.vmem %s0, %s134
      $region28: #{discriminator_block.3} parent=23 // pred_fallthru
        _
    $region24: #{discriminator_block.3} parent=5 // pred_fallthru
      _
    %p136 = scmp.le.s32.totalorder 1, %s9
    %p137 = scmp.lt.s32.totalorder %s9, 3
    %p138 = pnand %p136, %p137
    %p139 = pneg %p138
    // Predicated region
    $region29: #{discriminator_block.3} parent=5 // pred_check
      _
    $region30: #{discriminator_block.3} parent=5 // pred_check_branch
      %141 = sbr.rel (%p138) target = $region32
    $region31: #{discriminator_block.3} parent=5 // pred_region
      %s142 = ssub.s32 %s9, 1
      %p143 = scmp.lt.s32.totalorder %s14, 1
      %s144 = scalar_select %p143, %s14, 1
      %s145 = smul.addr %s144, 9
      %s146 = smul.addr %s145, 4
      %s147 = scalar_lea.vmem %s0, %s146
      %p148 = pneg %p35
      %p149 = pneg %p32
      %p150 = pneg %p56
      %p151 = pneg %p53
      %p152 = pneg %p77
      %p153 = pneg %p74
      %p154 = pneg %p103
      %p155 = pneg %p100
      %p156 = scmp.lt.s32.totalorder %s14, 1
      %s157 = scalar_select %p156, %s14, 1
      %s158 = smul.addr %s157, 9
      %s159 = smul.addr %s158, 8
      %s160 = scalar_lea.vmem %s3, %s159
      %p161 = scmp.lt.s32.totalorder %s14, 1
      %s162 = scalar_select %p161, %s14, 1
      %s163 = smul.addr %s162, 9
      %s164 = smul.addr %s163, 4
      %s165 = scalar_lea.vmem %s0, %s164
      %p166 = scmp.lt.s32.totalorder %s14, 1
      %s167 = scalar_select %p166, %s14, 1
      %s168 = smul.addr %s167, 9
      %s169 = smul.addr %s168, 8
      %s170 = scalar_lea.vmem %s3, %s169
      %v171 = vld [vmem:[%s165] sm:$0xf]
      %v172 = vld [vmem:[%s165 + $0x4] sm:$0xf]
      %v173 = vld [vmem:[%s165 + $0x8] sm:$0xf]
      %v174 = vld [vmem:[%s165 + $0xc] sm:$0xf]
      %v175 = vld [vmem:[%s165 + $0x10] sm:$0xf]
      %v176 = vld [vmem:[%s165 + $0x14] sm:$0xf]
      %v177 = vld [vmem:[%s165 + $0x18] sm:$0xf]
      %v178 = vld [vmem:[%s165 + $0x1c] sm:$0xf]
      %v179 = vld [vmem:[%s165 + $0x20] sm:$0xf]
      %v180 = vunpack.c.l.bf16 %v171
      %v181 = vunpack.c.l.bf16 %v172
      %v182 = vunpack.c.l.bf16 %v173
      %v183 = vunpack.c.l.bf16 %v174
      %v184 = vunpack.c.l.bf16 %v175
      %v185 = vunpack.c.l.bf16 %v176
      %v186 = vunpack.c.l.bf16 %v177
      %v187 = vunpack.c.l.bf16 %v178
      %v188 = vunpack.c.l.bf16 %v179
      %v189 = vld [vmem:[%s1] sm:$0x1]
      %v191 = vlaneseq
      %v192 = vshrl.u32 %v191, 7
      %v193 = vsub.s32 0, %v192
      %v194 = vrot.slane %v189, %v193
      %v196 = vmul.f32 %v180, %v194
      %v197 = vmul.f32 %v181, %v194
      %v198 = vmul.f32 %v182, %v194
      %v199 = vmul.f32 %v183, %v194
      %v200 = vmul.f32 %v184, %v194
      %v201 = vmul.f32 %v185, %v194
      %v202 = vmul.f32 %v186, %v194
      %v203 = vmul.f32 %v187, %v194
      %v204 = vmul.f32 %v188, %v194
      %v205 = vld [vmem:[%s2] sm:$0x1]
      %v207 = vlaneseq
      %v208 = vshrl.u32 %v207, 7
      %v209 = vsub.s32 0, %v208
      %v210 = vrot.slane %v205, %v209
      %v212 = vadd.f32 %v196, %v210
      %v213 = vadd.f32 %v197, %v210
      %v214 = vadd.f32 %v198, %v210
      %v215 = vadd.f32 %v199, %v210
      %v216 = vadd.f32 %v200, %v210
      %v217 = vadd.f32 %v201, %v210
      %v218 = vadd.f32 %v202, %v210
      %v219 = vadd.f32 %v203, %v210
      %v220 = vadd.f32 %v204, %v210
      %v221 = vmul.f32 %v212, 0.2
      %v222 = vmul.f32 %v213, 0.2
      %v223 = vmul.f32 %v214, 0.2
      %v224 = vmul.f32 %v215, 0.2
      %v225 = vmul.f32 %v216, 0.2
      %v226 = vmul.f32 %v217, 0.2
      %v227 = vmul.f32 %v218, 0.2
      %v228 = vmul.f32 %v219, 0.2
      %v229 = vmul.f32 %v220, 0.2
      %v230 = vmax.f32 %v212, %v221
      %v231 = vmax.f32 %v213, %v222
      %v232 = vmax.f32 %v214, %v223
      %v233 = vmax.f32 %v215, %v224
      %v234 = vmax.f32 %v216, %v225
      %v235 = vmax.f32 %v217, %v226
      %v236 = vmax.f32 %v218, %v227
      %v237 = vmax.f32 %v219, %v228
      %v238 = vmax.f32 %v220, %v229
      %239 = vst [vmem:[%s170] sm:$0xff] %v230
      %240 = vst [vmem:[%s170 + $0x8] sm:$0xff] %v231
      %241 = vst [vmem:[%s170 + $0x10] sm:$0xff] %v232
      %242 = vst [vmem:[%s170 + $0x18] sm:$0xff] %v233
      %243 = vst [vmem:[%s170 + $0x20] sm:$0xff] %v234
      %244 = vst [vmem:[%s170 + $0x28] sm:$0xff] %v235
      %245 = vst [vmem:[%s170 + $0x30] sm:$0xff] %v236
      %246 = vst [vmem:[%s170 + $0x38] sm:$0xff] %v237
      %247 = vst [vmem:[%s170 + $0x40] sm:$0xff] %v238
      %p248 = scmp.lt.s32.totalorder %s14, 1
      %s249 = scalar_select %p248, %s14, 1
      %s250 = smul.addr %s249, 9
      %s251 = smul.addr %s250, 8
      %s252 = scalar_lea.vmem %s3, %s251
      // Predicated region
      $region33: #{discriminator_block.3} parent=31 // pred_check
        %p253 = pneg %p100
      $region34: #{discriminator_block.3} parent=31 // pred_check_branch
        %255 = sbr.rel (%p253) target = $region36
      $region35: #{discriminator_block.3} parent=31 // pred_region
        _
      $region36: #{discriminator_block.3} parent=31 // pred_fallthru
        _
    $region32: #{discriminator_block.3} parent=5 // pred_fallthru
      _
    %p256 = scmp.le.s32.totalorder 2, %s9
    // Predicated region
    $region37: #{discriminator_block.3} parent=5 // pred_check
      %p257 = pneg %p256
    $region38: #{discriminator_block.3} parent=5 // pred_check_branch
      %259 = sbr.rel (%p257) target = $region40
    $region39: #{discriminator_block.3} parent=5 // pred_region
      %s260 = ssub.s32 %s9, 2
      // Predicated region
      $region41: #{discriminator_block.3} parent=39 // pred_check
        %p261 = pneg %p106
      $region42: #{discriminator_block.3} parent=39 // pred_check_branch
        %263 = sbr.rel (%p261) target = $region44
      $region43: #{discriminator_block.3} parent=39 // pred_region
        %p264 = scmp.lt.s32.totalorder %s15, 1
        %s265 = scalar_select %p264, %s15, 1
        %s266 = smul.addr %s265, 9
        %s267 = smul.addr %s266, 8
        %s268 = scalar_lea.vmem %s3, %s267
      $region44: #{discriminator_block.3} parent=39 // pred_fallthru
        _
    $region40: #{discriminator_block.3} parent=5 // pred_fallthru
      _
  $region6: #{discriminator_block.3} parent=0 // loop_footer
    %s13 = sadd.s32 1, %s9
  $region7: #{discriminator_block.3} parent=0 // loop_footer_branch
    %8 = sbr.rel target = $region3
  $region8: #{discriminator_block.3} parent=0 // loop_exit
    _

// kernel: discriminator_block.2
$region0: #{discriminator_block.2}
  #allocation0 [shape = 'u32[]', space=smem, size = 0x4, offset = 0x4, fixed_abs, tag = 'smem constant byte address 0x4 - core index']
  #allocation1 [shape = 'u32[144,128]{1,0:T(1,128)}', space=vmem, size = 0x12000, scoped, tag = 'internal scratch']
  %s0 = inlined_call_operand.vmem [shape: bf16[2,4,88,8], index: 0, kind: input, shape index: {}]
  %s1 = inlined_call_operand.vmem [shape: bf16[16,8,128], index: 1, kind: input, shape index: {}]
  %s2 = inlined_call_operand.vmem [shape: bf16[2,72,128], index: 2, kind: output, shape index: {0}]
  %s3 = inlined_call_operand.vmem [shape: f32[2,1,128], index: 3, kind: output, shape index: {1}]
  %s4 = inlined_call_operand.vmem [shape: f32[2,1,128], index: 4, kind: output, shape index: {2}]
  %5 = xla_tuple %s2, %s3, %s4
  %s6 = sld [smem:[#allocation0]]
  $region61: #{discriminator_block.2} parent=0
    _
  %s8 = ssub.s32 1, %s6
  %s9 = scalar_select 0, %s8, %s6
  loop: start=0, step=1, limit=4
  $region2: #{discriminator_block.2} parent=0 // loop_pre_header
    _
  $region3: #{discriminator_block.2} parent=0 // loop_header
    %s11 = sphi 0, %s15
    %p12 = scmp.ge.s32.totalorder %s11, 4
    %s18 = sphi 0, %s30
    %s19 = sphi 0, %s26
    %s20 = sphi 0, %s18
    %s21 = sphi 0, %s19
    %s22 = sphi 0, %s20
    %s23 = sphi 0, %s21
    %s35 = sphi 0, %s37
    %s38 = sphi 0, %s35
    %s39 = sphi 0, %s38
    %s55 = sphi 0, %s39
    %s59 = sphi 0, %s59
    %s61 = sphi 0, %s59
    %s62 = sphi 0, %s61
    %s76 = sphi 0, %s62
    %s84 = sphi 0, %s86
    %s87 = sphi 0, %s84
    %s88 = sphi 0, %s87
    %s104 = sphi 0, %s88
    %s110 = sphi 0, %s112
    %s113 = sphi 0, %s110
    %s114 = sphi 0, %s113
    %s130 = sphi 0, %s114
    %s136 = sphi 0, %s138
    %s139 = sphi 0, %s136
    %s140 = sphi 0, %s139
    %s156 = sphi 0, %s140
  $region4: #{discriminator_block.2} parent=0 // loop_header_branch
    %14 = sbr.rel (%p12) target = $region8
  $region5: #{discriminator_block.2} parent=0 // loop_body
    %s16 = ssub.s32 %s11, 1
    %s17 = ssub.s32 %s11, 2
    %s24 = sadd.s32 1, %s19
    %p25 = scmp.ge.s32.totalorder %s24, 1
    %s26 = scalar_select %p25, 0, %s24
    %s27 = sadd.s32 1, %s18
    %s28 = scalar_select %p25, %s27, %s18
    %p29 = scmp.ge.s32.totalorder %s28, 2
    %s30 = scalar_select %p29, 0, %s28
    %s31 = sadd.s32 %s18, %s19
    %s32 = sadd.s32 %s30, %s26
    %s33 = ssub.s32 %s31, %s32
    %p34 = scmp.eq.s32.totalorder %s33, 0
    %s36 = sadd.s32 %s35, 1
    %s37 = scalar_select %p34, %s35, %s36
    %p40 = pneg %p34
    %p41 = scmp.eq.s32.totalorder %s11, 1
    %p42 = por %p40, %p41
    %p43 = scmp.ne.s32.totalorder %s35, %s38
    %p44 = scmp.eq.s32.totalorder %s11, 0
    %p45 = por %p43, %p44
    %p46 = scmp.ne.s32.totalorder %s35, %s38
    %p47 = scmp.eq.s32.totalorder %s16, 1
    %p48 = por %p46, %p47
    %p49 = scmp.ne.s32.totalorder %s38, %s39
    %p50 = scmp.eq.s32.totalorder %s16, 0
    %p51 = por %p49, %p50
    %p52 = scmp.ne.s32.totalorder %s38, %s39
    %p53 = scmp.eq.s32.totalorder %s17, 1
    %p54 = por %p52, %p53
    %p56 = scmp.ne.s32.totalorder %s39, %s55
    %p57 = scmp.eq.s32.totalorder %s17, 0
    %p58 = por %p56, %p57
    %s60 = sadd.s32 %s59, 1
    %p63 = scmp.eq.s32.totalorder %s11, 1
    %p64 = scmp.ne.s32.totalorder %s59, %s61
    %p65 = scmp.eq.s32.totalorder %s11, 0
    %p66 = por %p64, %p65
    %p67 = scmp.ne.s32.totalorder %s59, %s61
    %p68 = scmp.eq.s32.totalorder %s16, 1
    %p69 = por %p67, %p68
    %p70 = scmp.ne.s32.totalorder %s61, %s62
    %p71 = scmp.eq.s32.totalorder %s16, 0
    %p72 = por %p70, %p71
    %p73 = scmp.ne.s32.totalorder %s61, %s62
    %p74 = scmp.eq.s32.totalorder %s17, 1
    %p75 = por %p73, %p74
    %p77 = scmp.ne.s32.totalorder %s62, %s76
    %p78 = scmp.eq.s32.totalorder %s17, 0
    %p79 = por %p77, %p78
    %s80 = sadd.s32 %s18, %s19
    %s81 = sadd.s32 %s30, %s26
    %s82 = ssub.s32 %s80, %s81
    %p83 = scmp.eq.s32.totalorder %s82, 0
    %s85 = sadd.s32 %s84, 1
    %s86 = scalar_select %p83, %s84, %s85
    %p89 = pneg %p83
    %p90 = scmp.eq.s32.totalorder %s11, 1
    %p91 = por %p89, %p90
    %p92 = scmp.ne.s32.totalorder %s84, %s87
    %p93 = scmp.eq.s32.totalorder %s11, 0
    %p94 = por %p92, %p93
    %p95 = scmp.ne.s32.totalorder %s84, %s87
    %p96 = scmp.eq.s32.totalorder %s16, 1
    %p97 = por %p95, %p96
    %p98 = scmp.ne.s32.totalorder %s87, %s88
    %p99 = scmp.eq.s32.totalorder %s16, 0
    %p100 = por %p98, %p99
    %p101 = scmp.ne.s32.totalorder %s87, %s88
    %p102 = scmp.eq.s32.totalorder %s17, 1
    %p103 = por %p101, %p102
    %p105 = scmp.ne.s32.totalorder %s88, %s104
    %p106 = scmp.eq.s32.totalorder %s17, 0
    %p107 = por %p105, %p106
    %s108 = ssub.s32 %s18, %s30
    %p109 = scmp.eq.s32.totalorder %s108, 0
    %s111 = sadd.s32 %s110, 1
    %s112 = scalar_select %p109, %s110, %s111
    %p115 = pneg %p109
    %p116 = scmp.eq.s32.totalorder %s11, 1
    %p117 = por %p115, %p116
    %p118 = scmp.ne.s32.totalorder %s110, %s113
    %p119 = scmp.eq.s32.totalorder %s11, 0
    %p120 = por %p118, %p119
    %p121 = scmp.ne.s32.totalorder %s110, %s113
    %p122 = scmp.eq.s32.totalorder %s16, 1
    %p123 = por %p121, %p122
    %p124 = scmp.ne.s32.totalorder %s113, %s114
    %p125 = scmp.eq.s32.totalorder %s16, 0
    %p126 = por %p124, %p125
    %p127 = scmp.ne.s32.totalorder %s113, %s114
    %p128 = scmp.eq.s32.totalorder %s17, 1
    %p129 = por %p127, %p128
    %p131 = scmp.ne.s32.totalorder %s114, %s130
    %p132 = scmp.eq.s32.totalorder %s17, 0
    %p133 = por %p131, %p132
    %s134 = ssub.s32 %s18, %s30
    %p135 = scmp.eq.s32.totalorder %s134, 0
    %s137 = sadd.s32 %s136, 1
    %s138 = scalar_select %p135, %s136, %s137
    %p141 = pneg %p135
    %p142 = scmp.eq.s32.totalorder %s11, 1
    %p143 = por %p141, %p142
    %p144 = scmp.ne.s32.totalorder %s136, %s139
    %p145 = scmp.eq.s32.totalorder %s11, 0
    %p146 = por %p144, %p145
    %p147 = scmp.ne.s32.totalorder %s136, %s139
    %p148 = scmp.eq.s32.totalorder %s16, 1
    %p149 = por %p147, %p148
    %p150 = scmp.ne.s32.totalorder %s139, %s140
    %p151 = scmp.eq.s32.totalorder %s16, 0
    %p152 = por %p150, %p151
    %p153 = scmp.ne.s32.totalorder %s139, %s140
    %p154 = scmp.eq.s32.totalorder %s17, 1
    %p155 = por %p153, %p154
    %p157 = scmp.ne.s32.totalorder %s140, %s156
    %p158 = scmp.eq.s32.totalorder %s17, 0
    %p159 = por %p157, %p158
    %p160 = scmp.le.s32.totalorder 1, %s11
    %p161 = scmp.lt.s32.totalorder %s11, 3
    %p162 = pnand %p160, %p161
    %p163 = pneg %p162
    // Predicated region
    $region9: #{discriminator_block.2} parent=5 // pred_check
      _
    $region10: #{discriminator_block.2} parent=5 // pred_check_branch
      %165 = sbr.rel (%p162) target = $region12
    $region11: #{discriminator_block.2} parent=5 // pred_region
      %s166 = ssub.s32 %s11, 1
      // Predicated region
      $region13: #{discriminator_block.2} parent=11 // pred_check
        %p167 = pneg %p72
      $region14: #{discriminator_block.2} parent=11 // pred_check_branch
        %169 = sbr.rel (%p167) target = $region16
      $region15: #{discriminator_block.2} parent=11 // pred_region
        _
      $region16: #{discriminator_block.2} parent=11 // pred_fallthru
        _
    $region12: #{discriminator_block.2} parent=5 // pred_fallthru
      _
    %p170 = scmp.lt.s32.totalorder %s11, 2
    // Predicated region
    $region17: #{discriminator_block.2} parent=5 // pred_check
      %p171 = pneg %p170
    $region18: #{discriminator_block.2} parent=5 // pred_check_branch
      %173 = sbr.rel (%p171) target = $region20
    $region19: #{discriminator_block.2} parent=5 // pred_region
      // Predicated region
      $region21: #{discriminator_block.2} parent=19 // pred_check
        %p174 = pneg %p45
      $region22: #{discriminator_block.2} parent=19 // pred_check_branch
        %176 = sbr.rel (%p174) target = $region24
      $region23: #{discriminator_block.2} parent=19 // pred_region
        %s177 = sadd.s32 %s18, %s19
        %p178 = scmp.lt.s32.totalorder %s177, 1
        %s179 = scalar_select %p178, %s177, 1
        %s180 = smul.addr %s179, 44
        %s181 = smul.addr %s180, 4
        %s182 = scalar_lea.vmem %s0, %s181
        %s183 = sadd.s32 %s18, %s19
      $region24: #{discriminator_block.2} parent=19 // pred_fallthru
        _
    $region20: #{discriminator_block.2} parent=5 // pred_fallthru
      _
    %p184 = scmp.le.s32.totalorder 1, %s11
    %p185 = scmp.lt.s32.totalorder %s11, 3
    %p186 = pnand %p184, %p185
    %p187 = pneg %p186
    // Predicated region
    $region25: #{discriminator_block.2} parent=5 // pred_check
      _
    $region26: #{discriminator_block.2} parent=5 // pred_check_branch
      %189 = sbr.rel (%p186) target = $region28
    $region27: #{discriminator_block.2} parent=5 // pred_region
      %s190 = ssub.s32 %s11, 1
      %s191 = sadd.s32 %s20, %s21
      %p192 = scmp.lt.s32.totalorder %s191, 1
      %s193 = scalar_select %p192, %s191, 1
      %s194 = smul.addr %s193, 44
      %s195 = smul.addr %s194, 4
      %s196 = scalar_lea.vmem %s0, %s195
      %p197 = pneg %p51
      %p198 = pneg %p48
      %p199 = pneg %p72
      %p200 = pneg %p69
      %p201 = pneg %p100
      %p202 = pneg %p97
      %s203 = sadd.s32 %s20, %s21
      %p204 = scmp.lt.s32.totalorder %s203, 1
      %s205 = scalar_select %p204, %s203, 1
      %s206 = smul.addr %s205, 9
      %s207 = smul.addr %s206, 4
      %s208 = scalar_lea.vmem %s2, %s207
      %p209 = pneg %p126
      %p210 = pneg %p123
      %p211 = scmp.lt.s32.totalorder %s20, 1
      %s212 = scalar_select %p211, %s20, 1
      %s213 = scalar_lea.vmem %s3, %s212
      %p214 = pneg %p152
      %p215 = pneg %p149
      %p216 = scmp.lt.s32.totalorder %s20, 1
      %s217 = scalar_select %p216, %s20, 1
      %s218 = scalar_lea.vmem %s4, %s217
      %s219 = sadd.s32 %s20, %s21
      %p220 = scmp.lt.s32.totalorder %s219, 1
      %s221 = scalar_select %p220, %s219, 1
      %s222 = smul.addr %s221, 44
      %s223 = smul.addr %s222, 4
      %s224 = scalar_lea.vmem %s0, %s223
      %s225 = sadd.s32 %s20, %s21
      %s226 = sadd.s32 %s20, %s21
      %p227 = scmp.lt.s32.totalorder %s226, 1
      %s228 = scalar_select %p227, %s226, 1
      %s229 = smul.addr %s228, 9
      %s230 = smul.addr %s229, 4
      %s231 = scalar_lea.vmem %s2, %s230
      %s232 = sadd.s32 %s20, %s21
      %p233 = scmp.lt.s32.totalorder %s20, 1
      %s234 = scalar_select %p233, %s20, 1
      %s235 = scalar_lea.vmem %s3, %s234
      %p236 = scmp.lt.s32.totalorder %s20, 1
      %s237 = scalar_select %p236, %s20, 1
      %s238 = scalar_lea.vmem %s4, %s237
      %p240 = scmp.eq.s32.totalorder %s21, 0
      // Predicated region
      $region29: #{discriminator_block.2} parent=27 // pred_check
        %p241 = pneg %p240
      $region30: #{discriminator_block.2} parent=27 // pred_check_branch
        %243 = sbr.rel (%p241) target = $region32
      $region31: #{discriminator_block.2} parent=27 // pred_region
        %244 = vst [vmem:[%s235] sm:$0x1] 0.0
        %245 = vst [vmem:[%s238] sm:$0x1] 0.0
      $region32: #{discriminator_block.2} parent=27 // pred_fallthru
        _
      %v246 = vld [vmem:[%s224] sm:$0xf]
      %v247 = vld [vmem:[%s224 + $0x4] sm:$0xf]
      %v248 = vld [vmem:[%s224 + $0x8] sm:$0xf]
      %v249 = vld [vmem:[%s224 + $0xc] sm:$0xf]
      %v250 = vld [vmem:[%s224 + $0x10] sm:$0xf]
      %v251 = vld [vmem:[%s224 + $0x14] sm:$0xf]
      %v252 = vld [vmem:[%s224 + $0x18] sm:$0xf]
      %v253 = vld [vmem:[%s224 + $0x1c] sm:$0xf]
      %v254 = vld [vmem:[%s224 + $0x20] sm:$0xf]
      %v255 = vld [vmem:[%s1] sm:$0xf]
      %s256 = scalar_lea.vmem %s224, 44
      %v257 = vld [vmem:[%s256] sm:$0xf]
      %v258 = vld [vmem:[%s256 + $0x4] sm:$0xf]
      %v259 = vld [vmem:[%s256 + $0x8] sm:$0xf]
      %v260 = vld [vmem:[%s256 + $0xc] sm:$0xf]
      %v261 = vld [vmem:[%s256 + $0x10] sm:$0xf]
      %v262 = vld [vmem:[%s256 + $0x14] sm:$0xf]
      %v263 = vld [vmem:[%s256 + $0x18] sm:$0xf]
      %v264 = vld [vmem:[%s256 + $0x1c] sm:$0xf]
      %v265 = vld [vmem:[%s256 + $0x20] sm:$0xf]
      %s266 = scalar_lea.vmem %s1, 4
      %v267 = vld [vmem:[%s266] sm:$0xf]
      %v277 = vunpack.c.l.b16 %v257
      %v278 = vunpack.c.l.b16 %v258
      %v279 = vunpack.c.l.b16 %v259
      %v280 = vunpack.c.l.b16 %v260
      %v281 = vunpack.c.l.b16 %v261
      %v282 = vunpack.c.l.b16 %v262
      %v283 = vunpack.c.l.b16 %v263
      %v284 = vunpack.c.l.b16 %v264
      %v285 = vunpack.c.l.b16 %v265
      %v286 = vpack.c.b16 %v278, %v277
      %v287 = vpack.c.b16 %v280, %v279
      %v288 = vpack.c.b16 %v282, %v281
      %v289 = vpack.c.b16 %v284, %v283
      %v290 = vpack.c.b16 %v285, %v285
      %vm291 = vcmask 64512
      %v293 = vsel %vm291, %v286, 0
      %v296 = vsel %vm291, %v287, 0
      %v299 = vsel %vm291, %v288, 0
      %v302 = vsel %vm291, %v289, 0
      %v305 = vsel %vm291, %v290, 0
      %vm307 = vcmask 1043456
      %v309 = vsel %vm307, %v267, 0
      %311 = vmatprep.subr.bf16.mxu0 0
      %312 = vmatpush1.bf16.msra.mxu0 %v309
      %313 = vmatprep.subr.bf16.mxu0 0
      %314 = vmatpush1.bf16.msra.mxu0 0
      %315 = vmatprep.subr.bf16.mxu0 0
      %316 = vmatpush1.bf16.msra.mxu0 0
      %317 = vmatprep.subr.bf16.mxu0 0
      %318 = vmatpush1.bf16.msra.mxu0 0
      %319 = vmatprep.subr.bf16.mxu0 0
      %320 = vmatpush1.bf16.msra.mxu0 0
      %321 = vmatprep.subr.bf16.mxu0 0
      %322 = vmatpush1.bf16.msra.mxu0 0
      %323 = vmatprep.subr.bf16.mxu0 0
      %324 = vmatpush1.bf16.msra.mxu0 0
      %325 = vmatprep.subr.bf16.mxu0 0
      %326 = vmatpush1.bf16.msra.mxu0 0
      %327 = vmatprep.subr.bf16.mxu0 0
      %328 = vmatpush1.bf16.msra.mxu0 0
      %329 = vmatprep.subr.bf16.mxu0 0
      %330 = vmatpush1.bf16.msra.mxu0 0
      %331 = vmatprep.subr.bf16.mxu0 0
      %332 = vmatpush1.bf16.msra.mxu0 0
      %333 = vmatprep.subr.bf16.mxu0 0
      %334 = vmatpush1.bf16.msra.mxu0 0
      %335 = vmatprep.subr.bf16.mxu0 0
      %336 = vmatpush1.bf16.msra.mxu0 0
      %337 = vmatprep.subr.bf16.mxu0 0
      %338 = vmatpush1.bf16.msra.mxu0 0
      %339 = vmatprep.subr.bf16.mxu0 0
      %340 = vmatpush1.bf16.msra.mxu0 0
      %341 = vmatprep.subr.bf16.mxu0 0
      %342 = vmatpush1.bf16.msra.mxu0 0
      %343 = vmatprep.mubr.bf16.mxu0 0
      %344 = vmatmul.mubr.bf16.gmra.mrb[0].mxu0 %v293
      %v345 = vpop.f32.mrb[0].mxu0
      %v346 = vadd.f32 0.0, %v345
      %v347 = vpop.f32.mrb[0].mxu0
      %v348 = vpop.f32.mrb[0].mxu0
      %v349 = vadd.f32 0.0, %v348
      %v350 = vpop.f32.mrb[0].mxu0
      %351 = vmatprep.mubr.bf16.mxu0 0
      %352 = vmatmul.mubr.bf16.gmra.mrb[0].mxu0 %v296
      %v353 = vpop.f32.mrb[0].mxu0
      %v354 = vadd.f32 0.0, %v353
      %v355 = vpop.f32.mrb[0].mxu0
      %v356 = vpop.f32.mrb[0].mxu0
      %v357 = vadd.f32 0.0, %v356
      %v358 = vpop.f32.mrb[0].mxu0
      %359 = vmatprep.mubr.bf16.mxu0 0
      %360 = vmatmul.mubr.bf16.gmra.mrb[0].mxu0 %v299
      %v361 = vpop.f32.mrb[0].mxu0
      %v362 = vadd.f32 0.0, %v361
      %v363 = vpop.f32.mrb[0].mxu0
      %v364 = vpop.f32.mrb[0].mxu0
      %v365 = vadd.f32 0.0, %v364
      %v366 = vpop.f32.mrb[0].mxu0
      %367 = vmatprep.mubr.bf16.mxu0 0
      %368 = vmatmul.mubr.bf16.gmra.mrb[0].mxu0 %v302
      %v369 = vpop.f32.mrb[0].mxu0
      %v370 = vadd.f32 0.0, %v369
      %v371 = vpop.f32.mrb[0].mxu0
      %v372 = vpop.f32.mrb[0].mxu0
      %v373 = vadd.f32 0.0, %v372
      %v374 = vpop.f32.mrb[0].mxu0
      %375 = vmatprep.mubr.bf16.mxu0 0
      %376 = vmatmul.mubr.bf16.gmra.mrb[0].mxu0 %v305
      %v377 = vpop.f32.mrb[0].mxu0
      %v378 = vadd.f32 0.0, %v377
      %v379 = vpop.f32.mrb[0].mxu0
      %v380 = vpop.f32.mrb[0].mxu0
      %v381 = vpop.f32.mrb[0].mxu0
      %382 = vdwg.mxu0
      %v392 = vunpack.c.l.b16 %v246
      %v393 = vunpack.c.l.b16 %v247
      %v394 = vunpack.c.l.b16 %v248
      %v395 = vunpack.c.l.b16 %v249
      %v396 = vunpack.c.l.b16 %v250
      %v397 = vunpack.c.l.b16 %v251
      %v398 = vunpack.c.l.b16 %v252
      %v399 = vunpack.c.l.b16 %v253
      %v400 = vunpack.c.l.b16 %v254
      %v401 = vpack.c.b16 %v393, %v392
      %v402 = vpack.c.b16 %v395, %v394
      %v403 = vpack.c.b16 %v397, %v396
      %v404 = vpack.c.b16 %v399, %v398
      %v405 = vpack.c.b16 %v400, %v400
      %v407 = vsel %vm291, %v401, 0
      %v410 = vsel %vm291, %v402, 0
      %v413 = vsel %vm291, %v403, 0
      %v416 = vsel %vm291, %v404, 0
      %v419 = vsel %vm291, %v405, 0
      %v422 = vsel %vm307, %v255, 0
      %424 = vmatprep.subr.bf16.mxu0 0
      %425 = vmatpush1.bf16.msra.mxu0 %v422
      %426 = vmatprep.subr.bf16.mxu0 0
      %427 = vmatpush1.bf16.msra.mxu0 0
      %428 = vmatprep.subr.bf16.mxu0 0
      %429 = vmatpush1.bf16.msra.mxu0 0
      %430 = vmatprep.subr.bf16.mxu0 0
      %431 = vmatpush1.bf16.msra.mxu0 0
      %432 = vmatprep.subr.bf16.mxu0 0
      %433 = vmatpush1.bf16.msra.mxu0 0
      %434 = vmatprep.subr.bf16.mxu0 0
      %435 = vmatpush1.bf16.msra.mxu0 0
      %436 = vmatprep.subr.bf16.mxu0 0
      %437 = vmatpush1.bf16.msra.mxu0 0
      %438 = vmatprep.subr.bf16.mxu0 0
      %439 = vmatpush1.bf16.msra.mxu0 0
      %440 = vmatprep.subr.bf16.mxu0 0
      %441 = vmatpush1.bf16.msra.mxu0 0
      %442 = vmatprep.subr.bf16.mxu0 0
      %443 = vmatpush1.bf16.msra.mxu0 0
      %444 = vmatprep.subr.bf16.mxu0 0
      %445 = vmatpush1.bf16.msra.mxu0 0
      %446 = vmatprep.subr.bf16.mxu0 0
      %447 = vmatpush1.bf16.msra.mxu0 0
      %448 = vmatprep.subr.bf16.mxu0 0
      %449 = vmatpush1.bf16.msra.mxu0 0
      %450 = vmatprep.subr.bf16.mxu0 0
      %451 = vmatpush1.bf16.msra.mxu0 0
      %452 = vmatprep.subr.bf16.mxu0 0
      %453 = vmatpush1.bf16.msra.mxu0 0
      %454 = vmatprep.subr.bf16.mxu0 0
      %455 = vmatpush1.bf16.msra.mxu0 0
      %456 = vmatprep.mubr.bf16.mxu0 0
      %457 = vmatmul.mubr.bf16.gmra.mrb[0].mxu0 %v407
      %v458 = vpop.f32.mrb[0].mxu0
      %v459 = vadd.f32 %v346, %v458
      %v460 = vpop.f32.mrb[0].mxu0
      %v461 = vpop.f32.mrb[0].mxu0
      %v462 = vadd.f32 %v349, %v461
      %v463 = vpop.f32.mrb[0].mxu0
      %464 = vmatprep.mubr.bf16.mxu0 0
      %465 = vmatmul.mubr.bf16.gmra.mrb[0].mxu0 %v410
      %v466 = vpop.f32.mrb[0].mxu0
      %v467 = vadd.f32 %v354, %v466
      %v468 = vpop.f32.mrb[0].mxu0
      %v469 = vpop.f32.mrb[0].mxu0
      %v470 = vadd.f32 %v357, %v469
      %v471 = vpop.f32.mrb[0].mxu0
      %472 = vmatprep.mubr.bf16.mxu0 0
      %473 = vmatmul.mubr.bf16.gmra.mrb[0].mxu0 %v413
      %v474 = vpop.f32.mrb[0].mxu0
      %v475 = vadd.f32 %v362, %v474
      %v476 = vpop.f32.mrb[0].mxu0
      %v477 = vpop.f32.mrb[0].mxu0
      %v478 = vadd.f32 %v365, %v477
      %v479 = vpop.f32.mrb[0].mxu0
      %480 = vmatprep.mubr.bf16.mxu0 0
      %481 = vmatmul.mubr.bf16.gmra.mrb[0].mxu0 %v416
      %v482 = vpop.f32.mrb[0].mxu0
      %v483 = vadd.f32 %v370, %v482
      %v484 = vpop.f32.mrb[0].mxu0
      %v485 = vpop.f32.mrb[0].mxu0
      %v486 = vadd.f32 %v373, %v485
      %v487 = vpop.f32.mrb[0].mxu0
      %488 = vmatprep.mubr.bf16.mxu0 0
      %489 = vmatmul.mubr.bf16.gmra.mrb[0].mxu0 %v419
      %v490 = vpop.f32.mrb[0].mxu0
      %v491 = vadd.f32 %v378, %v490
      %v492 = vpop.f32.mrb[0].mxu0
      %v493 = vpop.f32.mrb[0].mxu0
      %v494 = vpop.f32.mrb[0].mxu0
      %495 = vdwg.mxu0
      %v496 = vld [vmem:[%s224] sm:$0xf]
      %v497 = vld [vmem:[%s224 + $0x4] sm:$0xf]
      %v498 = vld [vmem:[%s224 + $0x8] sm:$0xf]
      %v499 = vld [vmem:[%s224 + $0xc] sm:$0xf]
      %v500 = vld [vmem:[%s224 + $0x10] sm:$0xf]
      %v501 = vld [vmem:[%s224 + $0x14] sm:$0xf]
      %v502 = vld [vmem:[%s224 + $0x18] sm:$0xf]
      %v503 = vld [vmem:[%s224 + $0x1c] sm:$0xf]
      %v504 = vld [vmem:[%s224 + $0x20] sm:$0xf]
      %v505 = vld [vmem:[%s224 + $0x24] sm:$0x1]
      %s506 = scalar_lea.vmem %s1, 8
      %v507 = vld [vmem:[%s506] sm:$0xf]
      %v518 = vunpack.c.l.b16 %v496
      %v519 = vunpack.c.l.b16 %v497
      %v520 = vunpack.c.l.b16 %v498
      %v521 = vunpack.c.l.b16 %v499
      %v522 = vunpack.c.l.b16 %v500
      %v523 = vunpack.c.l.b16 %v501
      %v524 = vunpack.c.l.b16 %v502
      %v525 = vunpack.c.l.b16 %v503
      %v526 = vunpack.c.l.b16 %v504
      %v527 = vunpack.c.l.b16 %v505
      %v528 = vpack.c.b16 %v519, %v518
      %v529 = vpack.c.b16 %v521, %v520
      %v530 = vpack.c.b16 %v523, %v522
      %v531 = vpack.c.b16 %v525, %v524
      %v532 = vpack.c.b16 %v527, %v526
      %vm533 = vsmask.f32 7424
      %v535 = vshrl.u32 %v528, 16
      %v537 = vshll.u32 %v528, 16
      %v539 = vrot.slane %v537, 1
      %v540 = vor.u32 %v535, %v539
      %v542 = vshll.u32 %v529, 16
      %v544 = vrot.slane %v542, 1
      %v545 = vsel %vm533, %v540, %v544
      %v546 = vshrl.u32 %v529, 16
      %v548 = vor.u32 %v546, %v544
      %v550 = vshll.u32 %v530, 16
      %v552 = vrot.slane %v550, 1
      %v553 = vsel %vm533, %v548, %v552
      %v554 = vshrl.u32 %v530, 16
      %v556 = vor.u32 %v554, %v552
      %v558 = vshll.u32 %v531, 16
      %v560 = vrot.slane %v558, 1
      %v561 = vsel %vm533, %v556, %v560
      %v562 = vshrl.u32 %v531, 16
      %v564 = vor.u32 %v562, %v560
      %v566 = vshll.u32 %v532, 16
      %v568 = vrot.slane %v566, 1
      %v569 = vsel %vm533, %v564, %v568
      %v570 = vshrl.u32 %v532, 16
      %v572 = vor.u32 %v570, %v568
      %v574 = vsel %vm291, %v545, 0
      %v577 = vsel %vm291, %v553, 0
      %v580 = vsel %vm291, %v561, 0
      %v583 = vsel %vm291, %v569, 0
      %v586 = vsel %vm291, %v572, 0
      %v589 = vsel %vm307, %v507, 0
      %591 = vmatprep.subr.bf16.mxu0 0
      %592 = vmatpush1.bf16.msra.mxu0 %v589
      %593 = vmatprep.subr.bf16.mxu0 0
      %594 = vmatpush1.bf16.msra.mxu0 0
      %595 = vmatprep.subr.bf16.mxu0 0
      %596 = vmatpush1.bf16.msra.mxu0 0
      %597 = vmatprep.subr.bf16.mxu0 0
      %598 = vmatpush1.bf16.msra.mxu0 0
      %599 = vmatprep.subr.bf16.mxu0 0
      %600 = vmatpush1.bf16.msra.mxu0 0
      %601 = vmatprep.subr.bf16.mxu0 0
      %602 = vmatpush1.bf16.msra.mxu0 0
      %603 = vmatprep.subr.bf16.mxu0 0
      %604 = vmatpush1.bf16.msra.mxu0 0
      %605 = vmatprep.subr.bf16.mxu0 0
      %606 = vmatpush1.bf16.msra.mxu0 0
      %607 = vmatprep.subr.bf16.mxu0 0
      %608 = vmatpush1.bf16.msra.mxu0 0
      %609 = vmatprep.subr.bf16.mxu0 0
      %610 = vmatpush1.bf16.msra.mxu0 0
      %611 = vmatprep.subr.bf16.mxu0 0
      %612 = vmatpush1.bf16.msra.mxu0 0
      %613 = vmatprep.subr.bf16.mxu0 0
      %614 = vmatpush1.bf16.msra.mxu0 0
      %615 = vmatprep.subr.bf16.mxu0 0
      %616 = vmatpush1.bf16.msra.mxu0 0
      %617 = vmatprep.subr.bf16.mxu0 0
      %618 = vmatpush1.bf16.msra.mxu0 0
      %619 = vmatprep.subr.bf16.mxu0 0
      %620 = vmatpush1.bf16.msra.mxu0 0
      %621 = vmatprep.subr.bf16.mxu0 0
      %622 = vmatpush1.bf16.msra.mxu0 0
      %623 = vmatprep.mubr.bf16.mxu0 0
      %624 = vmatmul.mubr.bf16.gmra.mrb[0].mxu0 %v574
      %v625 = vpop.f32.mrb[0].mxu0
      %v626 = vadd.f32 0.0, %v625
      %v627 = vpop.f32.mrb[0].mxu0
      %v628 = vpop.f32.mrb[0].mxu0
      %v629 = vadd.f32 0.0, %v628
      %v630 = vpop.f32.mrb[0].mxu0
      %631 = vmatprep.mubr.bf16.mxu0 0
      %632 = vmatmul.mubr.bf16.gmra.mrb[0].mxu0 %v577
      %v633 = vpop.f32.mrb[0].mxu0
      %v634 = vadd.f32 0.0, %v633
      %v635 = vpop.f32.mrb[0].mxu0
      %v636 = vpop.f32.mrb[0].mxu0
      %v637 = vadd.f32 0.0, %v636
      %v638 = vpop.f32.mrb[0].mxu0
      %639 = vmatprep.mubr.bf16.mxu0 0
      %640 = vmatmul.mubr.bf16.gmra.mrb[0].mxu0 %v580
      %v641 = vpop.f32.mrb[0].mxu0
      %v642 = vadd.f32 0.0, %v641
      %v643 = vpop.f32.mrb[0].mxu0
      %v644 = vpop.f32.mrb[0].mxu0
      %v645 = vadd.f32 0.0, %v644
      %v646 = vpop.f32.mrb[0].mxu0
      %647 = vmatprep.mubr.bf16.mxu0 0
      %648 = vmatmul.mubr.bf16.gmra.mrb[0].mxu0 %v583
      %v649 = vpop.f32.mrb[0].mxu0
      %v650 = vadd.f32 0.0, %v649
      %v651 = vpop.f32.mrb[0].mxu0
      %v652 = vpop.f32.mrb[0].mxu0
      %v653 = vadd.f32 0.0, %v652
      %v654 = vpop.f32.mrb[0].mxu0
      %655 = vmatprep.mubr.bf16.mxu0 0
      %656 = vmatmul.mubr.bf16.gmra.mrb[0].mxu0 %v586
      %v657 = vpop.f32.mrb[0].mxu0
      %v658 = vadd.f32 0.0, %v657
      %v659 = vpop.f32.mrb[0].mxu0
      %v660 = vpop.f32.mrb[0].mxu0
      %v661 = vpop.f32.mrb[0].mxu0
      %662 = vdwg.mxu0
      %v663 = vadd.f32 %v459, %v626
      %v664 = vadd.f32 %v462, %v629
      %v665 = vadd.f32 %v467, %v634
      %v666 = vadd.f32 %v470, %v637
      %v667 = vadd.f32 %v475, %v642
      %v668 = vadd.f32 %v478, %v645
      %v669 = vadd.f32 %v483, %v650
      %v670 = vadd.f32 %v486, %v653
      %v671 = vadd.f32 %v491, %v658
      %v672 = vld [vmem:[%s256] sm:$0xf]
      %v673 = vld [vmem:[%s256 + $0x4] sm:$0xf]
      %v674 = vld [vmem:[%s256 + $0x8] sm:$0xf]
      %v675 = vld [vmem:[%s256 + $0xc] sm:$0xf]
      %v676 = vld [vmem:[%s256 + $0x10] sm:$0xf]
      %v677 = vld [vmem:[%s256 + $0x14] sm:$0xf]
      %v678 = vld [vmem:[%s256 + $0x18] sm:$0xf]
      %v679 = vld [vmem:[%s256 + $0x1c] sm:$0xf]
      %v680 = vld [vmem:[%s256 + $0x20] sm:$0xf]
      %v681 = vld [vmem:[%s256 + $0x24] sm:$0x1]
      %s682 = scalar_lea.vmem %s1, 12
      %v683 = vld [vmem:[%s682] sm:$0xf]
      %v694 = vunpack.c.l.b16 %v672
      %v695 = vunpack.c.l.b16 %v673
      %v696 = vunpack.c.l.b16 %v674
      %v697 = vunpack.c.l.b16 %v675
      %v698 = vunpack.c.l.b16 %v676
      %v699 = vunpack.c.l.b16 %v677
      %v700 = vunpack.c.l.b16 %v678
      %v701 = vunpack.c.l.b16 %v679
      %v702 = vunpack.c.l.b16 %v680
      %v703 = vunpack.c.l.b16 %v681
      %v704 = vpack.c.b16 %v695, %v694
      %v705 = vpack.c.b16 %v697, %v696
      %v706 = vpack.c.b16 %v699, %v698
      %v707 = vpack.c.b16 %v701, %v700
      %v708 = vpack.c.b16 %v703, %v702
      %v710 = vshrl.u32 %v704, 16
      %v712 = vshll.u32 %v704, 16
      %v714 = vrot.slane %v712, 1
      %v715 = vor.u32 %v710, %v714
      %v717 = vshll.u32 %v705, 16
      %v719 = vrot.slane %v717, 1
      %v720 = vsel %vm533, %v715, %v719
      %v721 = vshrl.u32 %v705, 16
      %v723 = vor.u32 %v721, %v719
      %v725 = vshll.u32 %v706, 16
      %v727 = vrot.slane %v725, 1
      %v728 = vsel %vm533, %v723, %v727
      %v729 = vshrl.u32 %v706, 16
      %v731 = vor.u32 %v729, %v727
      %v733 = vshll.u32 %v707, 16
      %v735 = vrot.slane %v733, 1
      %v736 = vsel %vm533, %v731, %v735
      %v737 = vshrl.u32 %v707, 16
      %v739 = vor.u32 %v737, %v735
      %v741 = vshll.u32 %v708, 16
      %v743 = vrot.slane %v741, 1
      %v744 = vsel %vm533, %v739, %v743
      %v745 = vshrl.u32 %v708, 16
      %v747 = vor.u32 %v745, %v743
      %v749 = vsel %vm291, %v720, 0
      %v752 = vsel %vm291, %v728, 0
      %v755 = vsel %vm291, %v736, 0
      %v758 = vsel %vm291, %v744, 0
      %v761 = vsel %vm291, %v747, 0
      %v764 = vsel %vm307, %v683, 0
      %766 = vmatprep.subr.bf16.mxu0 0
      %767 = vmatpush1.bf16.msra.mxu0 %v764
      %768 = vmatprep.subr.bf16.mxu0 0
      %769 = vmatpush1.bf16.msra.mxu0 0
      %770 = vmatprep.subr.bf16.mxu0 0
      %771 = vmatpush1.bf16.msra.mxu0 0
      %772 = vmatprep.subr.bf16.mxu0 0
      %773 = vmatpush1.bf16.msra.mxu0 0
      %774 = vmatprep.subr.bf16.mxu0 0
      %775 = vmatpush1.bf16.msra.mxu0 0
      %776 = vmatprep.subr.bf16.mxu0 0
      %777 = vmatpush1.bf16.msra.mxu0 0
      %778 = vmatprep.subr.bf16.mxu0 0
      %779 = vmatpush1.bf16.msra.mxu0 0
      %780 = vmatprep.subr.bf16.mxu0 0
      %781 = vmatpush1.bf16.msra.mxu0 0
      %782 = vmatprep.subr.bf16.mxu0 0
      %783 = vmatpush1.bf16.msra.mxu0 0
      %784 = vmatprep.subr.bf16.mxu0 0
      %785 = vmatpush1.bf16.msra.mxu0 0
      %786 = vmatprep.subr.bf16.mxu0 0
      %787 = vmatpush1.bf16.msra.mxu0 0
      %788 = vmatprep.subr.bf16.mxu0 0
      %789 = vmatpush1.bf16.msra.mxu0 0
      %790 = vmatprep.subr.bf16.mxu0 0
      %791 = vmatpush1.bf16.msra.mxu0 0
      %792 = vmatprep.subr.bf16.mxu0 0
      %793 = vmatpush1.bf16.msra.mxu0 0
      %794 = vmatprep.subr.bf16.mxu0 0
      %795 = vmatpush1.bf16.msra.mxu0 0
      %796 = vmatprep.subr.bf16.mxu0 0
      %797 = vmatpush1.bf16.msra.mxu0 0
      %798 = vmatprep.mubr.bf16.mxu0 0
      %799 = vmatmul.mubr.bf16.gmra.mrb[0].mxu0 %v749
      %v800 = vpop.f32.mrb[0].mxu0
      %v801 = vadd.f32 0.0, %v800
      %v802 = vpop.f32.mrb[0].mxu0
      %v803 = vpop.f32.mrb[0].mxu0
      %v804 = vadd.f32 0.0, %v803
      %v805 = vpop.f32.mrb[0].mxu0
      %806 = vmatprep.mubr.bf16.mxu0 0
      %807 = vmatmul.mubr.bf16.gmra.mrb[0].mxu0 %v752
      %v808 = vpop.f32.mrb[0].mxu0
      %v809 = vadd.f32 0.0, %v808
      %v810 = vpop.f32.mrb[0].mxu0
      %v811 = vpop.f32.mrb[0].mxu0
      %v812 = vadd.f32 0.0, %v811
      %v813 = vpop.f32.mrb[0].mxu0
      %814 = vmatprep.mubr.bf16.mxu0 0
      %815 = vmatmul.mubr.bf16.gmra.mrb[0].mxu0 %v755
      %v816 = vpop.f32.mrb[0].mxu0
      %v817 = vadd.f32 0.0, %v816
      %v818 = vpop.f32.mrb[0].mxu0
      %v819 = vpop.f32.mrb[0].mxu0
      %v820 = vadd.f32 0.0, %v819
      %v821 = vpop.f32.mrb[0].mxu0
      %822 = vmatprep.mubr.bf16.mxu0 0
      %823 = vmatmul.mubr.bf16.gmra.mrb[0].mxu0 %v758
      %v824 = vpop.f32.mrb[0].mxu0
      %v825 = vadd.f32 0.0, %v824
      %v826 = vpop.f32.mrb[0].mxu0
      %v827 = vpop.f32.mrb[0].mxu0
      %v828 = vadd.f32 0.0, %v827
      %v829 = vpop.f32.mrb[0].mxu0
      %830 = vmatprep.mubr.bf16.mxu0 0
      %831 = vmatmul.mubr.bf16.gmra.mrb[0].mxu0 %v761
      %v832 = vpop.f32.mrb[0].mxu0
      %v833 = vadd.f32 0.0, %v832
      %v834 = vpop.f32.mrb[0].mxu0
      %v835 = vpop.f32.mrb[0].mxu0
      %v836 = vpop.f32.mrb[0].mxu0
      %837 = vdwg.mxu0
      %v838 = vadd.f32 %v663, %v801
      %v839 = vadd.f32 %v664, %v804
      %v840 = vadd.f32 %v665, %v809
      %v841 = vadd.f32 %v666, %v812
      %v842 = vadd.f32 %v667, %v817
      %v843 = vadd.f32 %v668, %v820
      %v844 = vadd.f32 %v669, %v825
      %v845 = vadd.f32 %v670, %v828
      %v846 = vadd.f32 %v671, %v833
      %s847 = scalar_lea.vmem %s224, 88
      %v848 = vld [vmem:[%s847] sm:$0xf]
      %v849 = vld [vmem:[%s847 + $0x4] sm:$0xf]
      %v850 = vld [vmem:[%s847 + $0x8] sm:$0xf]
      %v851 = vld [vmem:[%s847 + $0xc] sm:$0xf]
      %v852 = vld [vmem:[%s847 + $0x10] sm:$0xf]
      %v853 = vld [vmem:[%s847 + $0x14] sm:$0xf]
      %v854 = vld [vmem:[%s847 + $0x18] sm:$0xf]
      %v855 = vld [vmem:[%s847 + $0x1c] sm:$0xf]
      %v856 = vld [vmem:[%s847 + $0x20] sm:$0xf]
      %s857 = scalar_lea.vmem %s1, 16
      %v858 = vld [vmem:[%s857] sm:$0xf]
      %v868 = vunpack.c.l.b16 %v848
      %v869 = vunpack.c.l.b16 %v849
      %v870 = vunpack.c.l.b16 %v850
      %v871 = vunpack.c.l.b16 %v851
      %v872 = vunpack.c.l.b16 %v852
      %v873 = vunpack.c.l.b16 %v853
      %v874 = vunpack.c.l.b16 %v854
      %v875 = vunpack.c.l.b16 %v855
      %v876 = vunpack.c.l.b16 %v856
      %v877 = vpack.c.b16 %v869, %v868
      %v878 = vpack.c.b16 %v871, %v870
      %v879 = vpack.c.b16 %v873, %v872
      %v880 = vpack.c.b16 %v875, %v874
      %v881 = vpack.c.b16 %v876, %v876
      %v883 = vsel %vm291, %v877, 0
      %v886 = vsel %vm291, %v878, 0
      %v889 = vsel %vm291, %v879, 0
      %v892 = vsel %vm291, %v880, 0
      %v895 = vsel %vm291, %v881, 0
      %v898 = vsel %vm307, %v858, 0
      %900 = vmatprep.subr.bf16.mxu0 0
      %901 = vmatpush1.bf16.msra.mxu0 %v898
      %902 = vmatprep.subr.bf16.mxu0 0
      %903 = vmatpush1.bf16.msra.mxu0 0
      %904 = vmatprep.subr.bf16.mxu0 0
      %905 = vmatpush1.bf16.msra.mxu0 0
      %906 = vmatprep.subr.bf16.mxu0 0
      %907 = vmatpush1.bf16.msra.mxu0 0
      %908 = vmatprep.subr.bf16.mxu0 0
      %909 = vmatpush1.bf16.msra.mxu0 0
      %910 = vmatprep.subr.bf16.mxu0 0
      %911 = vmatpush1.bf16.msra.mxu0 0
      %912 = vmatprep.subr.bf16.mxu0 0
      %913 = vmatpush1.bf16.msra.mxu0 0
      %914 = vmatprep.subr.bf16.mxu0 0
      %915 = vmatpush1.bf16.msra.mxu0 0
      %916 = vmatprep.subr.bf16.mxu0 0
      %917 = vmatpush1.bf16.msra.mxu0 0
      %918 = vmatprep.subr.bf16.mxu0 0
      %919 = vmatpush1.bf16.msra.mxu0 0
      %920 = vmatprep.subr.bf16.mxu0 0
      %921 = vmatpush1.bf16.msra.mxu0 0
      %922 = vmatprep.subr.bf16.mxu0 0
      %923 = vmatpush1.bf16.msra.mxu0 0
      %924 = vmatprep.subr.bf16.mxu0 0
      %925 = vmatpush1.bf16.msra.mxu0 0
      %926 = vmatprep.subr.bf16.mxu0 0
      %927 = vmatpush1.bf16.msra.mxu0 0
      %928 = vmatprep.subr.bf16.mxu0 0
      %929 = vmatpush1.bf16.msra.mxu0 0
      %930 = vmatprep.subr.bf16.mxu0 0
      %931 = vmatpush1.bf16.msra.mxu0 0
      %932 = vmatprep.mubr.bf16.mxu0 0
      %933 = vmatmul.mubr.bf16.gmra.mrb[0].mxu0 %v883
      %v934 = vpop.f32.mrb[0].mxu0
      %v935 = vadd.f32 0.0, %v934
      %v936 = vpop.f32.mrb[0].mxu0
      %v937 = vpop.f32.mrb[0].mxu0
      %v938 = vadd.f32 0.0, %v937
      %v939 = vpop.f32.mrb[0].mxu0
      %940 = vmatprep.mubr.bf16.mxu0 0
      %941 = vmatmul.mubr.bf16.gmra.mrb[0].mxu0 %v886
      %v942 = vpop.f32.mrb[0].mxu0
      %v943 = vadd.f32 0.0, %v942
      %v944 = vpop.f32.mrb[0].mxu0
      %v945 = vpop.f32.mrb[0].mxu0
      %v946 = vadd.f32 0.0, %v945
      %v947 = vpop.f32.mrb[0].mxu0
      %948 = vmatprep.mubr.bf16.mxu0 0
      %949 = vmatmul.mubr.bf16.gmra.mrb[0].mxu0 %v889
      %v950 = vpop.f32.mrb[0].mxu0
      %v951 = vadd.f32 0.0, %v950
      %v952 = vpop.f32.mrb[0].mxu0
      %v953 = vpop.f32.mrb[0].mxu0
      %v954 = vadd.f32 0.0, %v953
      %v955 = vpop.f32.mrb[0].mxu0
      %956 = vmatprep.mubr.bf16.mxu0 0
      %957 = vmatmul.mubr.bf16.gmra.mrb[0].mxu0 %v892
      %v958 = vpop.f32.mrb[0].mxu0
      %v959 = vadd.f32 0.0, %v958
      %v960 = vpop.f32.mrb[0].mxu0
      %v961 = vpop.f32.mrb[0].mxu0
      %v962 = vadd.f32 0.0, %v961
      %v963 = vpop.f32.mrb[0].mxu0
      %964 = vmatprep.mubr.bf16.mxu0 0
      %965 = vmatmul.mubr.bf16.gmra.mrb[0].mxu0 %v895
      %v966 = vpop.f32.mrb[0].mxu0
      %v967 = vadd.f32 0.0, %v966
      %v968 = vpop.f32.mrb[0].mxu0
      %v969 = vpop.f32.mrb[0].mxu0
      %v970 = vpop.f32.mrb[0].mxu0
      %971 = vdwg.mxu0
      %v972 = vadd.f32 %v838, %v935
      %v973 = vadd.f32 %v839, %v938
      %v974 = vadd.f32 %v840, %v943
      %v975 = vadd.f32 %v841, %v946
      %v976 = vadd.f32 %v842, %v951
      %v977 = vadd.f32 %v843, %v954
      %v978 = vadd.f32 %v844, %v959
      %v979 = vadd.f32 %v845, %v962
      %v980 = vadd.f32 %v846, %v967
      %s981 = scalar_lea.vmem %s224, 132
      %v982 = vld [vmem:[%s981] sm:$0xf]
      %v983 = vld [vmem:[%s981 + $0x4] sm:$0xf]
      %v984 = vld [vmem:[%s981 + $0x8] sm:$0xf]
      %v985 = vld [vmem:[%s981 + $0xc] sm:$0xf]
      %v986 = vld [vmem:[%s981 + $0x10] sm:$0xf]
      %v987 = vld [vmem:[%s981 + $0x14] sm:$0xf]
      %v988 = vld [vmem:[%s981 + $0x18] sm:$0xf]
      %v989 = vld [vmem:[%s981 + $0x1c] sm:$0xf]
      %v990 = vld [vmem:[%s981 + $0x20] sm:$0xf]
      %s991 = scalar_lea.vmem %s1, 20
      %v992 = vld [vmem:[%s991] sm:$0xf]
      %v1002 = vunpack.c.l.b16 %v982
      %v1003 = vunpack.c.l.b16 %v983
      %v1004 = vunpack.c.l.b16 %v984
      %v1005 = vunpack.c.l.b16 %v985
      %v1006 = vunpack.c.l.b16 %v986
      %v1007 = vunpack.c.l.b16 %v987
      %v1008 = vunpack.c.l.b16 %v988
      %v1009 = vunpack.c.l.b16 %v989
      %v1010 = vunpack.c.l.b16 %v990
      %v1011 = vpack.c.b16 %v1003, %v1002
      %v1012 = vpack.c.b16 %v1005, %v1004
      %v1013 = vpack.c.b16 %v1007, %v1006
      %v1014 = vpack.c.b16 %v1009, %v1008
      %v1015 = vpack.c.b16 %v1010, %v1010
      %v1017 = vsel %vm291, %v1011, 0
      %v1020 = vsel %vm291, %v1012, 0
      %v1023 = vsel %vm291, %v1013, 0
      %v1026 = vsel %vm291, %v1014, 0
      %v1029 = vsel %vm291, %v1015, 0
      %v1032 = vsel %vm307, %v992, 0
      %1034 = vmatprep.subr.bf16.mxu0 0
      %1035 = vmatpush1.bf16.msra.mxu0 %v1032
      %1036 = vmatprep.subr.bf16.mxu0 0
      %1037 = vmatpush1.bf16.msra.mxu0 0
      %1038 = vmatprep.subr.bf16.mxu0 0
      %1039 = vmatpush1.bf16.msra.mxu0 0
      %1040 = vmatprep.subr.bf16.mxu0 0
      %1041 = vmatpush1.bf16.msra.mxu0 0
      %1042 = vmatprep.subr.bf16.mxu0 0
      %1043 = vmatpush1.bf16.msra.mxu0 0
      %1044 = vmatprep.subr.bf16.mxu0 0
      %1045 = vmatpush1.bf16.msra.mxu0 0
      %1046 = vmatprep.subr.bf16.mxu0 0
      %1047 = vmatpush1.bf16.msra.mxu0 0
      %1048 = vmatprep.subr.bf16.mxu0 0
      %1049 = vmatpush1.bf16.msra.mxu0 0
      %1050 = vmatprep.subr.bf16.mxu0 0
      %1051 = vmatpush1.bf16.msra.mxu0 0
      %1052 = vmatprep.subr.bf16.mxu0 0
      %1053 = vmatpush1.bf16.msra.mxu0 0
      %1054 = vmatprep.subr.bf16.mxu0 0
      %1055 = vmatpush1.bf16.msra.mxu0 0
      %1056 = vmatprep.subr.bf16.mxu0 0
      %1057 = vmatpush1.bf16.msra.mxu0 0
      %1058 = vmatprep.subr.bf16.mxu0 0
      %1059 = vmatpush1.bf16.msra.mxu0 0
      %1060 = vmatprep.subr.bf16.mxu0 0
      %1061 = vmatpush1.bf16.msra.mxu0 0
      %1062 = vmatprep.subr.bf16.mxu0 0
      %1063 = vmatpush1.bf16.msra.mxu0 0
      %1064 = vmatprep.subr.bf16.mxu0 0
      %1065 = vmatpush1.bf16.msra.mxu0 0
      %1066 = vmatprep.mubr.bf16.mxu0 0
      %1067 = vmatmul.mubr.bf16.gmra.mrb[0].mxu0 %v1017
      %v1068 = vpop.f32.mrb[0].mxu0
      %v1069 = vadd.f32 0.0, %v1068
      %v1070 = vpop.f32.mrb[0].mxu0
      %v1071 = vpop.f32.mrb[0].mxu0
      %v1072 = vadd.f32 0.0, %v1071
      %v1073 = vpop.f32.mrb[0].mxu0
      %1074 = vmatprep.mubr.bf16.mxu0 0
      %1075 = vmatmul.mubr.bf16.gmra.mrb[0].mxu0 %v1020
      %v1076 = vpop.f32.mrb[0].mxu0
      %v1077 = vadd.f32 0.0, %v1076
      %v1078 = vpop.f32.mrb[0].mxu0
      %v1079 = vpop.f32.mrb[0].mxu0
      %v1080 = vadd.f32 0.0, %v1079
      %v1081 = vpop.f32.mrb[0].mxu0
      %1082 = vmatprep.mubr.bf16.mxu0 0
      %1083 = vmatmul.mubr.bf16.gmra.mrb[0].mxu0 %v1023
      %v1084 = vpop.f32.mrb[0].mxu0
      %v1085 = vadd.f32 0.0, %v1084
      %v1086 = vpop.f32.mrb[0].mxu0
      %v1087 = vpop.f32.mrb[0].mxu0
      %v1088 = vadd.f32 0.0, %v1087
      %v1089 = vpop.f32.mrb[0].mxu0
      %1090 = vmatprep.mubr.bf16.mxu0 0
      %1091 = vmatmul.mubr.bf16.gmra.mrb[0].mxu0 %v1026
      %v1092 = vpop.f32.mrb[0].mxu0
      %v1093 = vadd.f32 0.0, %v1092
      %v1094 = vpop.f32.mrb[0].mxu0
      %v1095 = vpop.f32.mrb[0].mxu0
      %v1096 = vadd.f32 0.0, %v1095
      %v1097 = vpop.f32.mrb[0].mxu0
      %1098 = vmatprep.mubr.bf16.mxu0 0
      %1099 = vmatmul.mubr.bf16.gmra.mrb[0].mxu0 %v1029
      %v1100 = vpop.f32.mrb[0].mxu0
      %v1101 = vadd.f32 0.0, %v1100
      %v1102 = vpop.f32.mrb[0].mxu0
      %v1103 = vpop.f32.mrb[0].mxu0
      %v1104 = vpop.f32.mrb[0].mxu0
      %1105 = vdwg.mxu0
      %v1106 = vadd.f32 %v972, %v1069
      %v1107 = vadd.f32 %v973, %v1072
      %v1108 = vadd.f32 %v974, %v1077
      %v1109 = vadd.f32 %v975, %v1080
      %v1110 = vadd.f32 %v976, %v1085
      %v1111 = vadd.f32 %v977, %v1088
      %v1112 = vadd.f32 %v978, %v1093
      %v1113 = vadd.f32 %v979, %v1096
      %v1114 = vadd.f32 %v980, %v1101
      %v1115 = vld [vmem:[%s847] sm:$0xf]
      %v1116 = vld [vmem:[%s847 + $0x4] sm:$0xf]
      %v1117 = vld [vmem:[%s847 + $0x8] sm:$0xf]
      %v1118 = vld [vmem:[%s847 + $0xc] sm:$0xf]
      %v1119 = vld [vmem:[%s847 + $0x10] sm:$0xf]
      %v1120 = vld [vmem:[%s847 + $0x14] sm:$0xf]
      %v1121 = vld [vmem:[%s847 + $0x18] sm:$0xf]
      %v1122 = vld [vmem:[%s847 + $0x1c] sm:$0xf]
      %v1123 = vld [vmem:[%s847 + $0x20] sm:$0xf]
      %v1124 = vld [vmem:[%s847 + $0x24] sm:$0x1]
      %s1125 = scalar_lea.vmem %s1, 24
      %v1126 = vld [vmem:[%s1125] sm:$0xf]
      %v1137 = vunpack.c.l.b16 %v1115
      %v1138 = vunpack.c.l.b16 %v1116
      %v1139 = vunpack.c.l.b16 %v1117
      %v1140 = vunpack.c.l.b16 %v1118
      %v1141 = vunpack.c.l.b16 %v1119
      %v1142 = vunpack.c.l.b16 %v1120
      %v1143 = vunpack.c.l.b16 %v1121
      %v1144 = vunpack.c.l.b16 %v1122
      %v1145 = vunpack.c.l.b16 %v1123
      %v1146 = vunpack.c.l.b16 %v1124
      %v1147 = vpack.c.b16 %v1138, %v1137
      %v1148 = vpack.c.b16 %v1140, %v1139
      %v1149 = vpack.c.b16 %v1142, %v1141
      %v1150 = vpack.c.b16 %v1144, %v1143
      %v1151 = vpack.c.b16 %v1146, %v1145
      %v1153 = vshrl.u32 %v1147, 16
      %v1155 = vshll.u32 %v1147, 16
      %v1157 = vrot.slane %v1155, 1
      %v1158 = vor.u32 %v1153, %v1157
      %v1160 = vshll.u32 %v1148, 16
      %v1162 = vrot.slane %v1160, 1
      %v1163 = vsel %vm533, %v1158, %v1162
      %v1164 = vshrl.u32 %v1148, 16
      %v1166 = vor.u32 %v1164, %v1162
      %v1168 = vshll.u32 %v1149, 16
      %v1170 = vrot.slane %v1168, 1
      %v1171 = vsel %vm533, %v1166, %v1170
      %v1172 = vshrl.u32 %v1149, 16
      %v1174 = vor.u32 %v1172, %v1170
      %v1176 = vshll.u32 %v1150, 16
      %v1178 = vrot.slane %v1176, 1
      %v1179 = vsel %vm533, %v1174, %v1178
      %v1180 = vshrl.u32 %v1150, 16
      %v1182 = vor.u32 %v1180, %v1178
      %v1184 = vshll.u32 %v1151, 16
      %v1186 = vrot.slane %v1184, 1
      %v1187 = vsel %vm533, %v1182, %v1186
      %v1188 = vshrl.u32 %v1151, 16
      %v1190 = vor.u32 %v1188, %v1186
      %v1192 = vsel %vm291, %v1163, 0
      %v1195 = vsel %vm291, %v1171, 0
      %v1198 = vsel %vm291, %v1179, 0
      %v1201 = vsel %vm291, %v1187, 0
      %v1204 = vsel %vm291, %v1190, 0
      %v1207 = vsel %vm307, %v1126, 0
      %1209 = vmatprep.subr.bf16.mxu0 0
      %1210 = vmatpush1.bf16.msra.mxu0 %v1207
      %1211 = vmatprep.subr.bf16.mxu0 0
      %1212 = vmatpush1.bf16.msra.mxu0 0
      %1213 = vmatprep.subr.bf16.mxu0 0
      %1214 = vmatpush1.bf16.msra.mxu0 0
      %1215 = vmatprep.subr.bf16.mxu0 0
      %1216 = vmatpush1.bf16.msra.mxu0 0
      %1217 = vmatprep.subr.bf16.mxu0 0
      %1218 = vmatpush1.bf16.msra.mxu0 0
      %1219 = vmatprep.subr.bf16.mxu0 0
      %1220 = vmatpush1.bf16.msra.mxu0 0
      %1221 = vmatprep.subr.bf16.mxu0 0
      %1222 = vmatpush1.bf16.msra.mxu0 0
      %1223 = vmatprep.subr.bf16.mxu0 0
      %1224 = vmatpush1.bf16.msra.mxu0 0
      %1225 = vmatprep.subr.bf16.mxu0 0
      %1226 = vmatpush1.bf16.msra.mxu0 0
      %1227 = vmatprep.subr.bf16.mxu0 0
      %1228 = vmatpush1.bf16.msra.mxu0 0
      %1229 = vmatprep.subr.bf16.mxu0 0
      %1230 = vmatpush1.bf16.msra.mxu0 0
      %1231 = vmatprep.subr.bf16.mxu0 0
      %1232 = vmatpush1.bf16.msra.mxu0 0
      %1233 = vmatprep.subr.bf16.mxu0 0
      %1234 = vmatpush1.bf16.msra.mxu0 0
      %1235 = vmatprep.subr.bf16.mxu0 0
      %1236 = vmatpush1.bf16.msra.mxu0 0
      %1237 = vmatprep.subr.bf16.mxu0 0
      %1238 = vmatpush1.bf16.msra.mxu0 0
      %1239 = vmatprep.subr.bf16.mxu0 0
      %1240 = vmatpush1.bf16.msra.mxu0 0
      %1241 = vmatprep.mubr.bf16.mxu0 0
      %1242 = vmatmul.mubr.bf16.gmra.mrb[0].mxu0 %v1192
      %v1243 = vpop.f32.mrb[0].mxu0
      %v1244 = vadd.f32 0.0, %v1243
      %v1245 = vpop.f32.mrb[0].mxu0
      %v1246 = vpop.f32.mrb[0].mxu0
      %v1247 = vadd.f32 0.0, %v1246
      %v1248 = vpop.f32.mrb[0].mxu0
      %1249 = vmatprep.mubr.bf16.mxu0 0
      %1250 = vmatmul.mubr.bf16.gmra.mrb[0].mxu0 %v1195
      %v1251 = vpop.f32.mrb[0].mxu0
      %v1252 = vadd.f32 0.0, %v1251
      %v1253 = vpop.f32.mrb[0].mxu0
      %v1254 = vpop.f32.mrb[0].mxu0
      %v1255 = vadd.f32 0.0, %v1254
      %v1256 = vpop.f32.mrb[0].mxu0
      %1257 = vmatprep.mubr.bf16.mxu0 0
      %1258 = vmatmul.mubr.bf16.gmra.mrb[0].mxu0 %v1198
      %v1259 = vpop.f32.mrb[0].mxu0
      %v1260 = vadd.f32 0.0, %v1259
      %v1261 = vpop.f32.mrb[0].mxu0
      %v1262 = vpop.f32.mrb[0].mxu0
      %v1263 = vadd.f32 0.0, %v1262
      %v1264 = vpop.f32.mrb[0].mxu0
      %1265 = vmatprep.mubr.bf16.mxu0 0
      %1266 = vmatmul.mubr.bf16.gmra.mrb[0].mxu0 %v1201
      %v1267 = vpop.f32.mrb[0].mxu0
      %v1268 = vadd.f32 0.0, %v1267
      %v1269 = vpop.f32.mrb[0].mxu0
      %v1270 = vpop.f32.mrb[0].mxu0
      %v1271 = vadd.f32 0.0, %v1270
      %v1272 = vpop.f32.mrb[0].mxu0
      %1273 = vmatprep.mubr.bf16.mxu0 0
      %1274 = vmatmul.mubr.bf16.gmra.mrb[0].mxu0 %v1204
      %v1275 = vpop.f32.mrb[0].mxu0
      %v1276 = vadd.f32 0.0, %v1275
      %v1277 = vpop.f32.mrb[0].mxu0
      %v1278 = vpop.f32.mrb[0].mxu0
      %v1279 = vpop.f32.mrb[0].mxu0
      %1280 = vdwg.mxu0
      %v1281 = vadd.f32 %v1106, %v1244
      %v1282 = vadd.f32 %v1107, %v1247
      %v1283 = vadd.f32 %v1108, %v1252
      %v1284 = vadd.f32 %v1109, %v1255
      %v1285 = vadd.f32 %v1110, %v1260
      %v1286 = vadd.f32 %v1111, %v1263
      %v1287 = vadd.f32 %v1112, %v1268
      %v1288 = vadd.f32 %v1113, %v1271
      %v1289 = vadd.f32 %v1114, %v1276
      %v1290 = vld [vmem:[%s981] sm:$0xf]
      %v1291 = vld [vmem:[%s981 + $0x4] sm:$0xf]
      %v1292 = vld [vmem:[%s981 + $0x8] sm:$0xf]
      %v1293 = vld [vmem:[%s981 + $0xc] sm:$0xf]
      %v1294 = vld [vmem:[%s981 + $0x10] sm:$0xf]
      %v1295 = vld [vmem:[%s981 + $0x14] sm:$0xf]
      %v1296 = vld [vmem:[%s981 + $0x18] sm:$0xf]
      %v1297 = vld [vmem:[%s981 + $0x1c] sm:$0xf]
      %v1298 = vld [vmem:[%s981 + $0x20] sm:$0xf]
      %v1299 = vld [vmem:[%s981 + $0x24] sm:$0x1]
      %s1300 = scalar_lea.vmem %s1, 28
      %v1301 = vld [vmem:[%s1300] sm:$0xf]
      %v1312 = vunpack.c.l.b16 %v1290
      %v1313 = vunpack.c.l.b16 %v1291
      %v1314 = vunpack.c.l.b16 %v1292
      %v1315 = vunpack.c.l.b16 %v1293
      %v1316 = vunpack.c.l.b16 %v1294
      %v1317 = vunpack.c.l.b16 %v1295
      %v1318 = vunpack.c.l.b16 %v1296
      %v1319 = vunpack.c.l.b16 %v1297
      %v1320 = vunpack.c.l.b16 %v1298
      %v1321 = vunpack.c.l.b16 %v1299
      %v1322 = vpack.c.b16 %v1313, %v1312
      %v1323 = vpack.c.b16 %v1315, %v1314
      %v1324 = vpack.c.b16 %v1317, %v1316
      %v1325 = vpack.c.b16 %v1319, %v1318
      %v1326 = vpack.c.b16 %v1321, %v1320
      %v1328 = vshrl.u32 %v1322, 16
      %v1330 = vshll.u32 %v1322, 16
      %v1332 = vrot.slane %v1330, 1
      %v1333 = vor.u32 %v1328, %v1332
      %v1335 = vshll.u32 %v1323, 16
      %v1337 = vrot.slane %v1335, 1
      %v1338 = vsel %vm533, %v1333, %v1337
      %v1339 = vshrl.u32 %v1323, 16
      %v1341 = vor.u32 %v1339, %v1337
      %v1343 = vshll.u32 %v1324, 16
      %v1345 = vrot.slane %v1343, 1
      %v1346 = vsel %vm533, %v1341, %v1345
      %v1347 = vshrl.u32 %v1324, 16
      %v1349 = vor.u32 %v1347, %v1345
      %v1351 = vshll.u32 %v1325, 16
      %v1353 = vrot.slane %v1351, 1
      %v1354 = vsel %vm533, %v1349, %v1353
      %v1355 = vshrl.u32 %v1325, 16
      %v1357 = vor.u32 %v1355, %v1353
      %v1359 = vshll.u32 %v1326, 16
      %v1361 = vrot.slane %v1359, 1
      %v1362 = vsel %vm533, %v1357, %v1361
      %v1363 = vshrl.u32 %v1326, 16
      %v1365 = vor.u32 %v1363, %v1361
      %v1367 = vsel %vm291, %v1338, 0
      %v1370 = vsel %vm291, %v1346, 0
      %v1373 = vsel %vm291, %v1354, 0
      %v1376 = vsel %vm291, %v1362, 0
      %v1379 = vsel %vm291, %v1365, 0
      %v1382 = vsel %vm307, %v1301, 0
      %1384 = vmatprep.subr.bf16.mxu0 0
      %1385 = vmatpush1.bf16.msra.mxu0 %v1382
      %1386 = vmatprep.subr.bf16.mxu0 0
      %1387 = vmatpush1.bf16.msra.mxu0 0
      %1388 = vmatprep.subr.bf16.mxu0 0
      %1389 = vmatpush1.bf16.msra.mxu0 0
      %1390 = vmatprep.subr.bf16.mxu0 0
      %1391 = vmatpush1.bf16.msra.mxu0 0
      %1392 = vmatprep.subr.bf16.mxu0 0
      %1393 = vmatpush1.bf16.msra.mxu0 0
      %1394 = vmatprep.subr.bf16.mxu0 0
      %1395 = vmatpush1.bf16.msra.mxu0 0
      %1396 = vmatprep.subr.bf16.mxu0 0
      %1397 = vmatpush1.bf16.msra.mxu0 0
      %1398 = vmatprep.subr.bf16.mxu0 0
      %1399 = vmatpush1.bf16.msra.mxu0 0
      %1400 = vmatprep.subr.bf16.mxu0 0
      %1401 = vmatpush1.bf16.msra.mxu0 0
      %1402 = vmatprep.subr.bf16.mxu0 0
      %1403 = vmatpush1.bf16.msra.mxu0 0
      %1404 = vmatprep.subr.bf16.mxu0 0
      %1405 = vmatpush1.bf16.msra.mxu0 0
      %1406 = vmatprep.subr.bf16.mxu0 0
      %1407 = vmatpush1.bf16.msra.mxu0 0
      %1408 = vmatprep.subr.bf16.mxu0 0
      %1409 = vmatpush1.bf16.msra.mxu0 0
      %1410 = vmatprep.subr.bf16.mxu0 0
      %1411 = vmatpush1.bf16.msra.mxu0 0
      %1412 = vmatprep.subr.bf16.mxu0 0
      %1413 = vmatpush1.bf16.msra.mxu0 0
      %1414 = vmatprep.subr.bf16.mxu0 0
      %1415 = vmatpush1.bf16.msra.mxu0 0
      %1416 = vmatprep.mubr.bf16.mxu0 0
      %1417 = vmatmul.mubr.bf16.gmra.mrb[0].mxu0 %v1367
      %v1418 = vpop.f32.mrb[0].mxu0
      %v1419 = vadd.f32 0.0, %v1418
      %v1420 = vpop.f32.mrb[0].mxu0
      %v1421 = vpop.f32.mrb[0].mxu0
      %v1422 = vadd.f32 0.0, %v1421
      %v1423 = vpop.f32.mrb[0].mxu0
      %1424 = vmatprep.mubr.bf16.mxu0 0
      %1425 = vmatmul.mubr.bf16.gmra.mrb[0].mxu0 %v1370
      %v1426 = vpop.f32.mrb[0].mxu0
      %v1427 = vadd.f32 0.0, %v1426
      %v1428 = vpop.f32.mrb[0].mxu0
      %v1429 = vpop.f32.mrb[0].mxu0
      %v1430 = vadd.f32 0.0, %v1429
      %v1431 = vpop.f32.mrb[0].mxu0
      %1432 = vmatprep.mubr.bf16.mxu0 0
      %1433 = vmatmul.mubr.bf16.gmra.mrb[0].mxu0 %v1373
      %v1434 = vpop.f32.mrb[0].mxu0
      %v1435 = vadd.f32 0.0, %v1434
      %v1436 = vpop.f32.mrb[0].mxu0
      %v1437 = vpop.f32.mrb[0].mxu0
      %v1438 = vadd.f32 0.0, %v1437
      %v1439 = vpop.f32.mrb[0].mxu0
      %1440 = vmatprep.mubr.bf16.mxu0 0
      %1441 = vmatmul.mubr.bf16.gmra.mrb[0].mxu0 %v1376
      %v1442 = vpop.f32.mrb[0].mxu0
      %v1443 = vadd.f32 0.0, %v1442
      %v1444 = vpop.f32.mrb[0].mxu0
      %v1445 = vpop.f32.mrb[0].mxu0
      %v1446 = vadd.f32 0.0, %v1445
      %v1447 = vpop.f32.mrb[0].mxu0
      %1448 = vmatprep.mubr.bf16.mxu0 0
      %1449 = vmatmul.mubr.bf16.gmra.mrb[0].mxu0 %v1379
      %v1450 = vpop.f32.mrb[0].mxu0
      %v1451 = vadd.f32 0.0, %v1450
      %v1452 = vpop.f32.mrb[0].mxu0
      %v1453 = vpop.f32.mrb[0].mxu0
      %v1454 = vpop.f32.mrb[0].mxu0
      %1455 = vdwg.mxu0
      %v1456 = vadd.f32 %v1281, %v1419
      %v1457 = vadd.f32 %v1282, %v1422
      %v1458 = vadd.f32 %v1283, %v1427
      %v1459 = vadd.f32 %v1284, %v1430
      %v1460 = vadd.f32 %v1285, %v1435
      %v1461 = vadd.f32 %v1286, %v1438
      %v1462 = vadd.f32 %v1287, %v1443
      %v1463 = vadd.f32 %v1288, %v1446
      %v1464 = vadd.f32 %v1289, %v1451
      %v1465 = vld [vmem:[%s224 + $0x4] sm:$0xf]
      %v1466 = vld [vmem:[%s224 + $0x8] sm:$0xf]
      %v1467 = vld [vmem:[%s224 + $0xc] sm:$0xf]
      %v1468 = vld [vmem:[%s224 + $0x10] sm:$0xf]
      %v1469 = vld [vmem:[%s224 + $0x14] sm:$0xf]
      %v1470 = vld [vmem:[%s224 + $0x18] sm:$0xf]
      %v1471 = vld [vmem:[%s224 + $0x1c] sm:$0xf]
      %v1472 = vld [vmem:[%s224 + $0x20] sm:$0xf]
      %v1473 = vld [vmem:[%s224 + $0x24] sm:$0xf]
      %v1474 = vld [vmem:[%s224 + $0x28] sm:$0x1]
      %s1475 = scalar_lea.vmem %s1, 32
      %v1476 = vld [vmem:[%s1475] sm:$0xf]
      %v1487 = vunpack.c.l.b16 %v1465
      %v1488 = vunpack.c.l.b16 %v1466
      %v1489 = vunpack.c.l.b16 %v1467
      %v1490 = vunpack.c.l.b16 %v1468
      %v1491 = vunpack.c.l.b16 %v1469
      %v1492 = vunpack.c.l.b16 %v1470
      %v1493 = vunpack.c.l.b16 %v1471
      %v1494 = vunpack.c.l.b16 %v1472
      %v1495 = vunpack.c.l.b16 %v1473
      %v1496 = vunpack.c.l.b16 %v1474
      %v1497 = vpack.c.b16 %v1488, %v1487
      %v1498 = vpack.c.b16 %v1490, %v1489
      %v1499 = vpack.c.b16 %v1492, %v1491
      %v1500 = vpack.c.b16 %v1494, %v1493
      %v1501 = vpack.c.b16 %v1496, %v1495
      %v1503 = vshrl.u32 %v1497, 16
      %v1505 = vshll.u32 %v1497, 16
      %v1507 = vrot.slane %v1505, 1
      %v1508 = vor.u32 %v1503, %v1507
      %v1510 = vshll.u32 %v1498, 16
      %v1512 = vrot.slane %v1510, 1
      %v1513 = vsel %vm533, %v1508, %v1512
      %v1514 = vshrl.u32 %v1498, 16
      %v1516 = vor.u32 %v1514, %v1512
      %v1518 = vshll.u32 %v1499, 16
      %v1520 = vrot.slane %v1518, 1
      %v1521 = vsel %vm533, %v1516, %v1520
      %v1522 = vshrl.u32 %v1499, 16
      %v1524 = vor.u32 %v1522, %v1520
      %v1526 = vshll.u32 %v1500, 16
      %v1528 = vrot.slane %v1526, 1
      %v1529 = vsel %vm533, %v1524, %v1528
      %v1530 = vshrl.u32 %v1500, 16
      %v1532 = vor.u32 %v1530, %v1528
      %v1534 = vshll.u32 %v1501, 16
      %v1536 = vrot.slane %v1534, 1
      %v1537 = vsel %vm533, %v1532, %v1536
      %v1538 = vshrl.u32 %v1501, 16
      %v1540 = vor.u32 %v1538, %v1536
      %v1542 = vsel %vm291, %v1513, 0
      %v1545 = vsel %vm291, %v1521, 0
      %v1548 = vsel %vm291, %v1529, 0
      %v1551 = vsel %vm291, %v1537, 0
      %v1554 = vsel %vm291, %v1540, 0
      %v1557 = vsel %vm307, %v1476, 0
      %1559 = vmatprep.subr.bf16.mxu0 0
      %1560 = vmatpush1.bf16.msra.mxu0 %v1557
      %1561 = vmatprep.subr.bf16.mxu0 0
      %1562 = vmatpush1.bf16.msra.mxu0 0
      %1563 = vmatprep.subr.bf16.mxu0 0
      %1564 = vmatpush1.bf16.msra.mxu0 0
      %1565 = vmatprep.subr.bf16.mxu0 0
      %1566 = vmatpush1.bf16.msra.mxu0 0
      %1567 = vmatprep.subr.bf16.mxu0 0
      %1568 = vmatpush1.bf16.msra.mxu0 0
      %1569 = vmatprep.subr.bf16.mxu0 0
      %1570 = vmatpush1.bf16.msra.mxu0 0
      %1571 = vmatprep.subr.bf16.mxu0 0
      %1572 = vmatpush1.bf16.msra.mxu0 0
      %1573 = vmatprep.subr.bf16.mxu0 0
      %1574 = vmatpush1.bf16.msra.mxu0 0
      %1575 = vmatprep.subr.bf16.mxu0 0
      %1576 = vmatpush1.bf16.msra.mxu0 0
      %1577 = vmatprep.subr.bf16.mxu0 0
      %1578 = vmatpush1.bf16.msra.mxu0 0
      %1579 = vmatprep.subr.bf16.mxu0 0
      %1580 = vmatpush1.bf16.msra.mxu0 0
      %1581 = vmatprep.subr.bf16.mxu0 0
      %1582 = vmatpush1.bf16.msra.mxu0 0
      %1583 = vmatprep.subr.bf16.mxu0 0
      %1584 = vmatpush1.bf16.msra.mxu0 0
      %1585 = vmatprep.subr.bf16.mxu0 0
      %1586 = vmatpush1.bf16.msra.mxu0 0
      %1587 = vmatprep.subr.bf16.mxu0 0
      %1588 = vmatpush1.bf16.msra.mxu0 0
      %1589 = vmatprep.subr.bf16.mxu0 0
      %1590 = vmatpush1.bf16.msra.mxu0 0
      %1591 = vmatprep.mubr.bf16.mxu0 0
      %1592 = vmatmul.mubr.bf16.gmra.mrb[0].mxu0 %v1542
      %v1593 = vpop.f32.mrb[0].mxu0
      %v1594 = vadd.f32 0.0, %v1593
      %v1595 = vpop.f32.mrb[0].mxu0
      %v1596 = vpop.f32.mrb[0].mxu0
      %v1597 = vadd.f32 0.0, %v1596
      %v1598 = vpop.f32.mrb[0].mxu0
      %1599 = vmatprep.mubr.bf16.mxu0 0
      %1600 = vmatmul.mubr.bf16.gmra.mrb[0].mxu0 %v1545
      %v1601 = vpop.f32.mrb[0].mxu0
      %v1602 = vadd.f32 0.0, %v1601
      %v1603 = vpop.f32.mrb[0].mxu0
      %v1604 = vpop.f32.mrb[0].mxu0
      %v1605 = vadd.f32 0.0, %v1604
      %v1606 = vpop.f32.mrb[0].mxu0
      %1607 = vmatprep.mubr.bf16.mxu0 0
      %1608 = vmatmul.mubr.bf16.gmra.mrb[0].mxu0 %v1548
      %v1609 = vpop.f32.mrb[0].mxu0
      %v1610 = vadd.f32 0.0, %v1609
      %v1611 = vpop.f32.mrb[0].mxu0
      %v1612 = vpop.f32.mrb[0].mxu0
      %v1613 = vadd.f32 0.0, %v1612
      %v1614 = vpop.f32.mrb[0].mxu0
      %1615 = vmatprep.mubr.bf16.mxu0 0
      %1616 = vmatmul.mubr.bf16.gmra.mrb[0].mxu0 %v1551
      %v1617 = vpop.f32.mrb[0].mxu0
      %v1618 = vadd.f32 0.0, %v1617
      %v1619 = vpop.f32.mrb[0].mxu0
      %v1620 = vpop.f32.mrb[0].mxu0
      %v1621 = vadd.f32 0.0, %v1620
      %v1622 = vpop.f32.mrb[0].mxu0
      %1623 = vmatprep.mubr.bf16.mxu0 0
      %1624 = vmatmul.mubr.bf16.gmra.mrb[0].mxu0 %v1554
      %v1625 = vpop.f32.mrb[0].mxu0
      %v1626 = vadd.f32 0.0, %v1625
      %v1627 = vpop.f32.mrb[0].mxu0
      %v1628 = vpop.f32.mrb[0].mxu0
      %v1629 = vpop.f32.mrb[0].mxu0
      %1630 = vdwg.mxu0
      %v1631 = vadd.f32 %v1456, %v1594
      %v1632 = vadd.f32 %v1457, %v1597
      %v1633 = vadd.f32 %v1458, %v1602
      %v1634 = vadd.f32 %v1459, %v1605
      %v1635 = vadd.f32 %v1460, %v1610
      %v1636 = vadd.f32 %v1461, %v1613
      %v1637 = vadd.f32 %v1462, %v1618
      %v1638 = vadd.f32 %v1463, %v1621
      %v1639 = vadd.f32 %v1464, %v1626
      %v1640 = vld [vmem:[%s256 + $0x4] sm:$0xf]
      %v1641 = vld [vmem:[%s256 + $0x8] sm:$0xf]
      %v1642 = vld [vmem:[%s256 + $0xc] sm:$0xf]
      %v1643 = vld [vmem:[%s256 + $0x10] sm:$0xf]
      %v1644 = vld [vmem:[%s256 + $0x14] sm:$0xf]
      %v1645 = vld [vmem:[%s256 + $0x18] sm:$0xf]
      %v1646 = vld [vmem:[%s256 + $0x1c] sm:$0xf]
      %v1647 = vld [vmem:[%s256 + $0x20] sm:$0xf]
      %v1648 = vld [vmem:[%s256 + $0x24] sm:$0xf]
      %v1649 = vld [vmem:[%s256 + $0x28] sm:$0x1]
      %s1650 = scalar_lea.vmem %s1, 36
      %v1651 = vld [vmem:[%s1650] sm:$0xf]
      %v1662 = vunpack.c.l.b16 %v1640
      %v1663 = vunpack.c.l.b16 %v1641
      %v1664 = vunpack.c.l.b16 %v1642
      %v1665 = vunpack.c.l.b16 %v1643
      %v1666 = vunpack.c.l.b16 %v1644
      %v1667 = vunpack.c.l.b16 %v1645
      %v1668 = vunpack.c.l.b16 %v1646
      %v1669 = vunpack.c.l.b16 %v1647
      %v1670 = vunpack.c.l.b16 %v1648
      %v1671 = vunpack.c.l.b16 %v1649
      %v1672 = vpack.c.b16 %v1663, %v1662
      %v1673 = vpack.c.b16 %v1665, %v1664
      %v1674 = vpack.c.b16 %v1667, %v1666
      %v1675 = vpack.c.b16 %v1669, %v1668
      %v1676 = vpack.c.b16 %v1671, %v1670
      %v1678 = vshrl.u32 %v1672, 16
      %v1680 = vshll.u32 %v1672, 16
      %v1682 = vrot.slane %v1680, 1
      %v1683 = vor.u32 %v1678, %v1682
      %v1685 = vshll.u32 %v1673, 16
      %v1687 = vrot.slane %v1685, 1
      %v1688 = vsel %vm533, %v1683, %v1687
      %v1689 = vshrl.u32 %v1673, 16
      %v1691 = vor.u32 %v1689, %v1687
      %v1693 = vshll.u32 %v1674, 16
      %v1695 = vrot.slane %v1693, 1
      %v1696 = vsel %vm533, %v1691, %v1695
      %v1697 = vshrl.u32 %v1674, 16
      %v1699 = vor.u32 %v1697, %v1695
      %v1701 = vshll.u32 %v1675, 16
      %v1703 = vrot.slane %v1701, 1
      %v1704 = vsel %vm533, %v1699, %v1703
      %v1705 = vshrl.u32 %v1675, 16
      %v1707 = vor.u32 %v1705, %v1703
      %v1709 = vshll.u32 %v1676, 16
      %v1711 = vrot.slane %v1709, 1
      %v1712 = vsel %vm533, %v1707, %v1711
      %v1713 = vshrl.u32 %v1676, 16
      %v1715 = vor.u32 %v1713, %v1711
      %v1717 = vsel %vm291, %v1688, 0
      %v1720 = vsel %vm291, %v1696, 0
      %v1723 = vsel %vm291, %v1704, 0
      %v1726 = vsel %vm291, %v1712, 0
      %v1729 = vsel %vm291, %v1715, 0
      %v1732 = vsel %vm307, %v1651, 0
      %1734 = vmatprep.subr.bf16.mxu0 0
      %1735 = vmatpush1.bf16.msra.mxu0 %v1732
      %1736 = vmatprep.subr.bf16.mxu0 0
      %1737 = vmatpush1.bf16.msra.mxu0 0
      %1738 = vmatprep.subr.bf16.mxu0 0
      %1739 = vmatpush1.bf16.msra.mxu0 0
      %1740 = vmatprep.subr.bf16.mxu0 0
      %1741 = vmatpush1.bf16.msra.mxu0 0
      %1742 = vmatprep.subr.bf16.mxu0 0
      %1743 = vmatpush1.bf16.msra.mxu0 0
      %1744 = vmatprep.subr.bf16.mxu0 0
      %1745 = vmatpush1.bf16.msra.mxu0 0
      %1746 = vmatprep.subr.bf16.mxu0 0
      %1747 = vmatpush1.bf16.msra.mxu0 0
      %1748 = vmatprep.subr.bf16.mxu0 0
      %1749 = vmatpush1.bf16.msra.mxu0 0
      %1750 = vmatprep.subr.bf16.mxu0 0
      %1751 = vmatpush1.bf16.msra.mxu0 0
      %1752 = vmatprep.subr.bf16.mxu0 0
      %1753 = vmatpush1.bf16.msra.mxu0 0
      %1754 = vmatprep.subr.bf16.mxu0 0
      %1755 = vmatpush1.bf16.msra.mxu0 0
      %1756 = vmatprep.subr.bf16.mxu0 0
      %1757 = vmatpush1.bf16.msra.mxu0 0
      %1758 = vmatprep.subr.bf16.mxu0 0
      %1759 = vmatpush1.bf16.msra.mxu0 0
      %1760 = vmatprep.subr.bf16.mxu0 0
      %1761 = vmatpush1.bf16.msra.mxu0 0
      %1762 = vmatprep.subr.bf16.mxu0 0
      %1763 = vmatpush1.bf16.msra.mxu0 0
      %1764 = vmatprep.subr.bf16.mxu0 0
      %1765 = vmatpush1.bf16.msra.mxu0 0
      %1766 = vmatprep.mubr.bf16.mxu0 0
      %1767 = vmatmul.mubr.bf16.gmra.mrb[0].mxu0 %v1717
      %v1768 = vpop.f32.mrb[0].mxu0
      %v1769 = vadd.f32 0.0, %v1768
      %v1770 = vpop.f32.mrb[0].mxu0
      %v1771 = vpop.f32.mrb[0].mxu0
      %v1772 = vadd.f32 0.0, %v1771
      %v1773 = vpop.f32.mrb[0].mxu0
      %1774 = vmatprep.mubr.bf16.mxu0 0
      %1775 = vmatmul.mubr.bf16.gmra.mrb[0].mxu0 %v1720
      %v1776 = vpop.f32.mrb[0].mxu0
      %v1777 = vadd.f32 0.0, %v1776
      %v1778 = vpop.f32.mrb[0].mxu0
      %v1779 = vpop.f32.mrb[0].mxu0
      %v1780 = vadd.f32 0.0, %v1779
      %v1781 = vpop.f32.mrb[0].mxu0
      %1782 = vmatprep.mubr.bf16.mxu0 0
      %1783 = vmatmul.mubr.bf16.gmra.mrb[0].mxu0 %v1723
      %v1784 = vpop.f32.mrb[0].mxu0
      %v1785 = vadd.f32 0.0, %v1784
      %v1786 = vpop.f32.mrb[0].mxu0
      %v1787 = vpop.f32.mrb[0].mxu0
      %v1788 = vadd.f32 0.0, %v1787
      %v1789 = vpop.f32.mrb[0].mxu0
      %1790 = vmatprep.mubr.bf16.mxu0 0
      %1791 = vmatmul.mubr.bf16.gmra.mrb[0].mxu0 %v1726
      %v1792 = vpop.f32.mrb[0].mxu0
      %v1793 = vadd.f32 0.0, %v1792
      %v1794 = vpop.f32.mrb[0].mxu0
      %v1795 = vpop.f32.mrb[0].mxu0
      %v1796 = vadd.f32 0.0, %v1795
      %v1797 = vpop.f32.mrb[0].mxu0
      %1798 = vmatprep.mubr.bf16.mxu0 0
      %1799 = vmatmul.mubr.bf16.gmra.mrb[0].mxu0 %v1729
      %v1800 = vpop.f32.mrb[0].mxu0
      %v1801 = vadd.f32 0.0, %v1800
      %v1802 = vpop.f32.mrb[0].mxu0
      %v1803 = vpop.f32.mrb[0].mxu0
      %v1804 = vpop.f32.mrb[0].mxu0
      %1805 = vdwg.mxu0
      %v1806 = vadd.f32 %v1631, %v1769
      %v1807 = vadd.f32 %v1632, %v1772
      %v1808 = vadd.f32 %v1633, %v1777
      %v1809 = vadd.f32 %v1634, %v1780
      %v1810 = vadd.f32 %v1635, %v1785
      %v1811 = vadd.f32 %v1636, %v1788
      %v1812 = vadd.f32 %v1637, %v1793
      %v1813 = vadd.f32 %v1638, %v1796
      %v1814 = vadd.f32 %v1639, %v1801
      %v1815 = vld [vmem:[%s224 + $0x4] sm:$0xe]
      %s1816 = scalar_lea.vmem %s1, 40
      %v1817 = vld [vmem:[%s1816] sm:$0xf]
      %v1819 = vunpack.c.l.b16 %v1815
      %v1820 = vpack.c.b16 %v1488, %v1819
      %vm1821 = vcmask 1046528
      %v1822 = vrot.slane %v1820, 1
      %v1823 = vrot.slane %v1498, 1
      %v1824 = vsel %vm1821, %v1822, %v1823
      %v1825 = vrot.slane %v1499, 1
      %v1826 = vsel %vm1821, %v1823, %v1825
      %v1827 = vrot.slane %v1500, 1
      %v1828 = vsel %vm1821, %v1825, %v1827
      %v1829 = vrot.slane %v1501, 1
      %v1830 = vsel %vm1821, %v1827, %v1829
      %v1832 = vsel %vm291, %v1824, 0
      %v1835 = vsel %vm291, %v1826, 0
      %v1838 = vsel %vm291, %v1828, 0
      %v1841 = vsel %vm291, %v1830, 0
      %v1844 = vsel %vm291, %v1829, 0
      %v1847 = vsel %vm307, %v1817, 0
      %1849 = vmatprep.subr.bf16.mxu0 0
      %1850 = vmatpush1.bf16.msra.mxu0 %v1847
      %1851 = vmatprep.subr.bf16.mxu0 0
      %1852 = vmatpush1.bf16.msra.mxu0 0
      %1853 = vmatprep.subr.bf16.mxu0 0
      %1854 = vmatpush1.bf16.msra.mxu0 0
      %1855 = vmatprep.subr.bf16.mxu0 0
      %1856 = vmatpush1.bf16.msra.mxu0 0
      %1857 = vmatprep.subr.bf16.mxu0 0
      %1858 = vmatpush1.bf16.msra.mxu0 0
      %1859 = vmatprep.subr.bf16.mxu0 0
      %1860 = vmatpush1.bf16.msra.mxu0 0
      %1861 = vmatprep.subr.bf16.mxu0 0
      %1862 = vmatpush1.bf16.msra.mxu0 0
      %1863 = vmatprep.subr.bf16.mxu0 0
      %1864 = vmatpush1.bf16.msra.mxu0 0
      %1865 = vmatprep.subr.bf16.mxu0 0
      %1866 = vmatpush1.bf16.msra.mxu0 0
      %1867 = vmatprep.subr.bf16.mxu0 0
      %1868 = vmatpush1.bf16.msra.mxu0 0
      %1869 = vmatprep.subr.bf16.mxu0 0
      %1870 = vmatpush1.bf16.msra.mxu0 0
      %1871 = vmatprep.subr.bf16.mxu0 0
      %1872 = vmatpush1.bf16.msra.mxu0 0
      %1873 = vmatprep.subr.bf16.mxu0 0
      %1874 = vmatpush1.bf16.msra.mxu0 0
      %1875 = vmatprep.subr.bf16.mxu0 0
      %1876 = vmatpush1.bf16.msra.mxu0 0
      %1877 = vmatprep.subr.bf16.mxu0 0
      %1878 = vmatpush1.bf16.msra.mxu0 0
      %1879 = vmatprep.subr.bf16.mxu0 0
      %1880 = vmatpush1.bf16.msra.mxu0 0
      %1881 = vmatprep.mubr.bf16.mxu0 0
      %1882 = vmatmul.mubr.bf16.gmra.mrb[0].mxu0 %v1832
      %v1883 = vpop.f32.mrb[0].mxu0
      %v1884 = vadd.f32 0.0, %v1883
      %v1885 = vpop.f32.mrb[0].mxu0
      %v1886 = vpop.f32.mrb[0].mxu0
      %v1887 = vadd.f32 0.0, %v1886
      %v1888 = vpop.f32.mrb[0].mxu0
      %1889 = vmatprep.mubr.bf16.mxu0 0
      %1890 = vmatmul.mubr.bf16.gmra.mrb[0].mxu0 %v1835
      %v1891 = vpop.f32.mrb[0].mxu0
      %v1892 = vadd.f32 0.0, %v1891
      %v1893 = vpop.f32.mrb[0].mxu0
      %v1894 = vpop.f32.mrb[0].mxu0
      %v1895 = vadd.f32 0.0, %v1894
      %v1896 = vpop.f32.mrb[0].mxu0
      %1897 = vmatprep.mubr.bf16.mxu0 0
      %1898 = vmatmul.mubr.bf16.gmra.mrb[0].mxu0 %v1838
      %v1899 = vpop.f32.mrb[0].mxu0
      %v1900 = vadd.f32 0.0, %v1899
      %v1901 = vpop.f32.mrb[0].mxu0
      %v1902 = vpop.f32.mrb[0].mxu0
      %v1903 = vadd.f32 0.0, %v1902
      %v1904 = vpop.f32.mrb[0].mxu0
      %1905 = vmatprep.mubr.bf16.mxu0 0
      %1906 = vmatmul.mubr.bf16.gmra.mrb[0].mxu0 %v1841
      %v1907 = vpop.f32.mrb[0].mxu0
      %v1908 = vadd.f32 0.0, %v1907
      %v1909 = vpop.f32.mrb[0].mxu0
      %v1910 = vpop.f32.mrb[0].mxu0
      %v1911 = vadd.f32 0.0, %v1910
      %v1912 = vpop.f32.mrb[0].mxu0
      %1913 = vmatprep.mubr.bf16.mxu0 0
      %1914 = vmatmul.mubr.bf16.gmra.mrb[0].mxu0 %v1844
      %v1915 = vpop.f32.mrb[0].mxu0
      %v1916 = vadd.f32 0.0, %v1915
      %v1917 = vpop.f32.mrb[0].mxu0
      %v1918 = vpop.f32.mrb[0].mxu0
      %v1919 = vpop.f32.mrb[0].mxu0
      %1920 = vdwg.mxu0
      %v1921 = vadd.f32 %v1806, %v1884
      %v1922 = vadd.f32 %v1807, %v1887
      %v1923 = vadd.f32 %v1808, %v1892
      %v1924 = vadd.f32 %v1809, %v1895
      %v1925 = vadd.f32 %v1810, %v1900
      %v1926 = vadd.f32 %v1811, %v1903
      %v1927 = vadd.f32 %v1812, %v1908
      %v1928 = vadd.f32 %v1813, %v1911
      %v1929 = vadd.f32 %v1814, %v1916
      %v1930 = vld [vmem:[%s256 + $0x4] sm:$0xe]
      %s1931 = scalar_lea.vmem %s1, 44
      %v1932 = vld [vmem:[%s1931] sm:$0xf]
      %v1934 = vunpack.c.l.b16 %v1930
      %v1935 = vpack.c.b16 %v1663, %v1934
      %v1936 = vrot.slane %v1935, 1
      %v1937 = vrot.slane %v1673, 1
      %v1938 = vsel %vm1821, %v1936, %v1937
      %v1939 = vrot.slane %v1674, 1
      %v1940 = vsel %vm1821, %v1937, %v1939
      %v1941 = vrot.slane %v1675, 1
      %v1942 = vsel %vm1821, %v1939, %v1941
      %v1943 = vrot.slane %v1676, 1
      %v1944 = vsel %vm1821, %v1941, %v1943
      %v1946 = vsel %vm291, %v1938, 0
      %v1949 = vsel %vm291, %v1940, 0
      %v1952 = vsel %vm291, %v1942, 0
      %v1955 = vsel %vm291, %v1944, 0
      %v1958 = vsel %vm291, %v1943, 0
      %v1961 = vsel %vm307, %v1932, 0
      %1963 = vmatprep.subr.bf16.mxu0 0
      %1964 = vmatpush1.bf16.msra.mxu0 %v1961
      %1965 = vmatprep.subr.bf16.mxu0 0
      %1966 = vmatpush1.bf16.msra.mxu0 0
      %1967 = vmatprep.subr.bf16.mxu0 0
      %1968 = vmatpush1.bf16.msra.mxu0 0
      %1969 = vmatprep.subr.bf16.mxu0 0
      %1970 = vmatpush1.bf16.msra.mxu0 0
      %1971 = vmatprep.subr.bf16.mxu0 0
      %1972 = vmatpush1.bf16.msra.mxu0 0
      %1973 = vmatprep.subr.bf16.mxu0 0
      %1974 = vmatpush1.bf16.msra.mxu0 0
      %1975 = vmatprep.subr.bf16.mxu0 0
      %1976 = vmatpush1.bf16.msra.mxu0 0
      %1977 = vmatprep.subr.bf16.mxu0 0
      %1978 = vmatpush1.bf16.msra.mxu0 0
      %1979 = vmatprep.subr.bf16.mxu0 0
      %1980 = vmatpush1.bf16.msra.mxu0 0
      %1981 = vmatprep.subr.bf16.mxu0 0
      %1982 = vmatpush1.bf16.msra.mxu0 0
      %1983 = vmatprep.subr.bf16.mxu0 0
      %1984 = vmatpush1.bf16.msra.mxu0 0
      %1985 = vmatprep.subr.bf16.mxu0 0
      %1986 = vmatpush1.bf16.msra.mxu0 0
      %1987 = vmatprep.subr.bf16.mxu0 0
      %1988 = vmatpush1.bf16.msra.mxu0 0
      %1989 = vmatprep.subr.bf16.mxu0 0
      %1990 = vmatpush1.bf16.msra.mxu0 0
      %1991 = vmatprep.subr.bf16.mxu0 0
      %1992 = vmatpush1.bf16.msra.mxu0 0
      %1993 = vmatprep.subr.bf16.mxu0 0
      %1994 = vmatpush1.bf16.msra.mxu0 0
      %1995 = vmatprep.mubr.bf16.mxu0 0
      %1996 = vmatmul.mubr.bf16.gmra.mrb[0].mxu0 %v1946
      %v1997 = vpop.f32.mrb[0].mxu0
      %v1998 = vadd.f32 0.0, %v1997
      %v1999 = vpop.f32.mrb[0].mxu0
      %v2000 = vpop.f32.mrb[0].mxu0
      %v2001 = vadd.f32 0.0, %v2000
      %v2002 = vpop.f32.mrb[0].mxu0
      %2003 = vmatprep.mubr.bf16.mxu0 0
      %2004 = vmatmul.mubr.bf16.gmra.mrb[0].mxu0 %v1949
      %v2005 = vpop.f32.mrb[0].mxu0
      %v2006 = vadd.f32 0.0, %v2005
      %v2007 = vpop.f32.mrb[0].mxu0
      %v2008 = vpop.f32.mrb[0].mxu0
      %v2009 = vadd.f32 0.0, %v2008
      %v2010 = vpop.f32.mrb[0].mxu0
      %2011 = vmatprep.mubr.bf16.mxu0 0
      %2012 = vmatmul.mubr.bf16.gmra.mrb[0].mxu0 %v1952
      %v2013 = vpop.f32.mrb[0].mxu0
      %v2014 = vadd.f32 0.0, %v2013
      %v2015 = vpop.f32.mrb[0].mxu0
      %v2016 = vpop.f32.mrb[0].mxu0
      %v2017 = vadd.f32 0.0, %v2016
      %v2018 = vpop.f32.mrb[0].mxu0
      %2019 = vmatprep.mubr.bf16.mxu0 0
      %2020 = vmatmul.mubr.bf16.gmra.mrb[0].mxu0 %v1955
      %v2021 = vpop.f32.mrb[0].mxu0
      %v2022 = vadd.f32 0.0, %v2021
      %v2023 = vpop.f32.mrb[0].mxu0
      %v2024 = vpop.f32.mrb[0].mxu0
      %v2025 = vadd.f32 0.0, %v2024
      %v2026 = vpop.f32.mrb[0].mxu0
      %2027 = vmatprep.mubr.bf16.mxu0 0
      %2028 = vmatmul.mubr.bf16.gmra.mrb[0].mxu0 %v1958
      %v2029 = vpop.f32.mrb[0].mxu0
      %v2030 = vadd.f32 0.0, %v2029
      %v2031 = vpop.f32.mrb[0].mxu0
      %v2032 = vpop.f32.mrb[0].mxu0
      %v2033 = vpop.f32.mrb[0].mxu0
      %2034 = vdwg.mxu0
      %v2035 = vadd.f32 %v1921, %v1998
      %v2036 = vadd.f32 %v1922, %v2001
      %v2037 = vadd.f32 %v1923, %v2006
      %v2038 = vadd.f32 %v1924, %v2009
      %v2039 = vadd.f32 %v1925, %v2014
      %v2040 = vadd.f32 %v1926, %v2017
      %v2041 = vadd.f32 %v1927, %v2022
      %v2042 = vadd.f32 %v1928, %v2025
      %v2043 = vadd.f32 %v1929, %v2030
      %v2044 = vld [vmem:[%s847 + $0x4] sm:$0xf]
      %v2045 = vld [vmem:[%s847 + $0x8] sm:$0xf]
      %v2046 = vld [vmem:[%s847 + $0xc] sm:$0xf]
      %v2047 = vld [vmem:[%s847 + $0x10] sm:$0xf]
      %v2048 = vld [vmem:[%s847 + $0x14] sm:$0xf]
      %v2049 = vld [vmem:[%s847 + $0x18] sm:$0xf]
      %v2050 = vld [vmem:[%s847 + $0x1c] sm:$0xf]
      %v2051 = vld [vmem:[%s847 + $0x20] sm:$0xf]
      %v2052 = vld [vmem:[%s847 + $0x24] sm:$0xf]
      %v2053 = vld [vmem:[%s847 + $0x28] sm:$0x1]
      %s2054 = scalar_lea.vmem %s1, 48
      %v2055 = vld [vmem:[%s2054] sm:$0xf]
      %v2066 = vunpack.c.l.b16 %v2044
      %v2067 = vunpack.c.l.b16 %v2045
      %v2068 = vunpack.c.l.b16 %v2046
      %v2069 = vunpack.c.l.b16 %v2047
      %v2070 = vunpack.c.l.b16 %v2048
      %v2071 = vunpack.c.l.b16 %v2049
      %v2072 = vunpack.c.l.b16 %v2050
      %v2073 = vunpack.c.l.b16 %v2051
      %v2074 = vunpack.c.l.b16 %v2052
      %v2075 = vunpack.c.l.b16 %v2053
      %v2076 = vpack.c.b16 %v2067, %v2066
      %v2077 = vpack.c.b16 %v2069, %v2068
      %v2078 = vpack.c.b16 %v2071, %v2070
      %v2079 = vpack.c.b16 %v2073, %v2072
      %v2080 = vpack.c.b16 %v2075, %v2074
      %v2082 = vshrl.u32 %v2076, 16
      %v2084 = vshll.u32 %v2076, 16
      %v2086 = vrot.slane %v2084, 1
      %v2087 = vor.u32 %v2082, %v2086
      %v2089 = vshll.u32 %v2077, 16
      %v2091 = vrot.slane %v2089, 1
      %v2092 = vsel %vm533, %v2087, %v2091
      %v2093 = vshrl.u32 %v2077, 16
      %v2095 = vor.u32 %v2093, %v2091
      %v2097 = vshll.u32 %v2078, 16
      %v2099 = vrot.slane %v2097, 1
      %v2100 = vsel %vm533, %v2095, %v2099
      %v2101 = vshrl.u32 %v2078, 16
      %v2103 = vor.u32 %v2101, %v2099
      %v2105 = vshll.u32 %v2079, 16
      %v2107 = vrot.slane %v2105, 1
      %v2108 = vsel %vm533, %v2103, %v2107
      %v2109 = vshrl.u32 %v2079, 16
      %v2111 = vor.u32 %v2109, %v2107
      %v2113 = vshll.u32 %v2080, 16
      %v2115 = vrot.slane %v2113, 1
      %v2116 = vsel %vm533, %v2111, %v2115
      %v2117 = vshrl.u32 %v2080, 16
      %v2119 = vor.u32 %v2117, %v2115
      %v2121 = vsel %vm291, %v2092, 0
      %v2124 = vsel %vm291, %v2100, 0
      %v2127 = vsel %vm291, %v2108, 0
      %v2130 = vsel %vm291, %v2116, 0
      %v2133 = vsel %vm291, %v2119, 0
      %v2136 = vsel %vm307, %v2055, 0
      %2138 = vmatprep.subr.bf16.mxu0 0
      %2139 = vmatpush1.bf16.msra.mxu0 %v2136
      %2140 = vmatprep.subr.bf16.mxu0 0
      %2141 = vmatpush1.bf16.msra.mxu0 0
      %2142 = vmatprep.subr.bf16.mxu0 0
      %2143 = vmatpush1.bf16.msra.mxu0 0
      %2144 = vmatprep.subr.bf16.mxu0 0
      %2145 = vmatpush1.bf16.msra.mxu0 0
      %2146 = vmatprep.subr.bf16.mxu0 0
      %2147 = vmatpush1.bf16.msra.mxu0 0
      %2148 = vmatprep.subr.bf16.mxu0 0
      %2149 = vmatpush1.bf16.msra.mxu0 0
      %2150 = vmatprep.subr.bf16.mxu0 0
      %2151 = vmatpush1.bf16.msra.mxu0 0
      %2152 = vmatprep.subr.bf16.mxu0 0
      %2153 = vmatpush1.bf16.msra.mxu0 0
      %2154 = vmatprep.subr.bf16.mxu0 0
      %2155 = vmatpush1.bf16.msra.mxu0 0
      %2156 = vmatprep.subr.bf16.mxu0 0
      %2157 = vmatpush1.bf16.msra.mxu0 0
      %2158 = vmatprep.subr.bf16.mxu0 0
      %2159 = vmatpush1.bf16.msra.mxu0 0
      %2160 = vmatprep.subr.bf16.mxu0 0
      %2161 = vmatpush1.bf16.msra.mxu0 0
      %2162 = vmatprep.subr.bf16.mxu0 0
      %2163 = vmatpush1.bf16.msra.mxu0 0
      %2164 = vmatprep.subr.bf16.mxu0 0
      %2165 = vmatpush1.bf16.msra.mxu0 0
      %2166 = vmatprep.subr.bf16.mxu0 0
      %2167 = vmatpush1.bf16.msra.mxu0 0
      %2168 = vmatprep.subr.bf16.mxu0 0
      %2169 = vmatpush1.bf16.msra.mxu0 0
      %2170 = vmatprep.mubr.bf16.mxu0 0
      %2171 = vmatmul.mubr.bf16.gmra.mrb[0].mxu0 %v2121
      %v2172 = vpop.f32.mrb[0].mxu0
      %v2173 = vadd.f32 0.0, %v2172
      %v2174 = vpop.f32.mrb[0].mxu0
      %v2175 = vpop.f32.mrb[0].mxu0
      %v2176 = vadd.f32 0.0, %v2175
      %v2177 = vpop.f32.mrb[0].mxu0
      %2178 = vmatprep.mubr.bf16.mxu0 0
      %2179 = vmatmul.mubr.bf16.gmra.mrb[0].mxu0 %v2124
      %v2180 = vpop.f32.mrb[0].mxu0
      %v2181 = vadd.f32 0.0, %v2180
      %v2182 = vpop.f32.mrb[0].mxu0
      %v2183 = vpop.f32.mrb[0].mxu0
      %v2184 = vadd.f32 0.0, %v2183
      %v2185 = vpop.f32.mrb[0].mxu0
      %2186 = vmatprep.mubr.bf16.mxu0 0
      %2187 = vmatmul.mubr.bf16.gmra.mrb[0].mxu0 %v2127
      %v2188 = vpop.f32.mrb[0].mxu0
      %v2189 = vadd.f32 0.0, %v2188
      %v2190 = vpop.f32.mrb[0].mxu0
      %v2191 = vpop.f32.mrb[0].mxu0
      %v2192 = vadd.f32 0.0, %v2191
      %v2193 = vpop.f32.mrb[0].mxu0
      %2194 = vmatprep.mubr.bf16.mxu0 0
      %2195 = vmatmul.mubr.bf16.gmra.mrb[0].mxu0 %v2130
      %v2196 = vpop.f32.mrb[0].mxu0
      %v2197 = vadd.f32 0.0, %v2196
      %v2198 = vpop.f32.mrb[0].mxu0
      %v2199 = vpop.f32.mrb[0].mxu0
      %v2200 = vadd.f32 0.0, %v2199
      %v2201 = vpop.f32.mrb[0].mxu0
      %2202 = vmatprep.mubr.bf16.mxu0 0
      %2203 = vmatmul.mubr.bf16.gmra.mrb[0].mxu0 %v2133
      %v2204 = vpop.f32.mrb[0].mxu0
      %v2205 = vadd.f32 0.0, %v2204
      %v2206 = vpop.f32.mrb[0].mxu0
      %v2207 = vpop.f32.mrb[0].mxu0
      %v2208 = vpop.f32.mrb[0].mxu0
      %2209 = vdwg.mxu0
      %v2210 = vadd.f32 %v2035, %v2173
      %v2211 = vadd.f32 %v2036, %v2176
      %v2212 = vadd.f32 %v2037, %v2181
      %v2213 = vadd.f32 %v2038, %v2184
      %v2214 = vadd.f32 %v2039, %v2189
      %v2215 = vadd.f32 %v2040, %v2192
      %v2216 = vadd.f32 %v2041, %v2197
      %v2217 = vadd.f32 %v2042, %v2200
      %v2218 = vadd.f32 %v2043, %v2205
      %v2219 = vld [vmem:[%s981 + $0x4] sm:$0xf]
      %v2220 = vld [vmem:[%s981 + $0x8] sm:$0xf]
      %v2221 = vld [vmem:[%s981 + $0xc] sm:$0xf]
      %v2222 = vld [vmem:[%s981 + $0x10] sm:$0xf]
      %v2223 = vld [vmem:[%s981 + $0x14] sm:$0xf]
      %v2224 = vld [vmem:[%s981 + $0x18] sm:$0xf]
      %v2225 = vld [vmem:[%s981 + $0x1c] sm:$0xf]
      %v2226 = vld [vmem:[%s981 + $0x20] sm:$0xf]
      %v2227 = vld [vmem:[%s981 + $0x24] sm:$0xf]
      %v2228 = vld [vmem:[%s981 + $0x28] sm:$0x1]
      %s2229 = scalar_lea.vmem %s1, 52
      %v2230 = vld [vmem:[%s2229] sm:$0xf]
      %v2241 = vunpack.c.l.b16 %v2219
      %v2242 = vunpack.c.l.b16 %v2220
      %v2243 = vunpack.c.l.b16 %v2221
      %v2244 = vunpack.c.l.b16 %v2222
      %v2245 = vunpack.c.l.b16 %v2223
      %v2246 = vunpack.c.l.b16 %v2224
      %v2247 = vunpack.c.l.b16 %v2225
      %v2248 = vunpack.c.l.b16 %v2226
      %v2249 = vunpack.c.l.b16 %v2227
      %v2250 = vunpack.c.l.b16 %v2228
      %v2251 = vpack.c.b16 %v2242, %v2241
      %v2252 = vpack.c.b16 %v2244, %v2243
      %v2253 = vpack.c.b16 %v2246, %v2245
      %v2254 = vpack.c.b16 %v2248, %v2247
      %v2255 = vpack.c.b16 %v2250, %v2249
      %v2257 = vshrl.u32 %v2251, 16
      %v2259 = vshll.u32 %v2251, 16
      %v2261 = vrot.slane %v2259, 1
      %v2262 = vor.u32 %v2257, %v2261
      %v2264 = vshll.u32 %v2252, 16
      %v2266 = vrot.slane %v2264, 1
      %v2267 = vsel %vm533, %v2262, %v2266
      %v2268 = vshrl.u32 %v2252, 16
      %v2270 = vor.u32 %v2268, %v2266
      %v2272 = vshll.u32 %v2253, 16
      %v2274 = vrot.slane %v2272, 1
      %v2275 = vsel %vm533, %v2270, %v2274
      %v2276 = vshrl.u32 %v2253, 16
      %v2278 = vor.u32 %v2276, %v2274
      %v2280 = vshll.u32 %v2254, 16
      %v2282 = vrot.slane %v2280, 1
      %v2283 = vsel %vm533, %v2278, %v2282
      %v2284 = vshrl.u32 %v2254, 16
      %v2286 = vor.u32 %v2284, %v2282
      %v2288 = vshll.u32 %v2255, 16
      %v2290 = vrot.slane %v2288, 1
      %v2291 = vsel %vm533, %v2286, %v2290
      %v2292 = vshrl.u32 %v2255, 16
      %v2294 = vor.u32 %v2292, %v2290
      %v2296 = vsel %vm291, %v2267, 0
      %v2299 = vsel %vm291, %v2275, 0
      %v2302 = vsel %vm291, %v2283, 0
      %v2305 = vsel %vm291, %v2291, 0
      %v2308 = vsel %vm291, %v2294, 0
      %v2311 = vsel %vm307, %v2230, 0
      %2313 = vmatprep.subr.bf16.mxu0 0
      %2314 = vmatpush1.bf16.msra.mxu0 %v2311
      %2315 = vmatprep.subr.bf16.mxu0 0
      %2316 = vmatpush1.bf16.msra.mxu0 0
      %2317 = vmatprep.subr.bf16.mxu0 0
      %2318 = vmatpush1.bf16.msra.mxu0 0
      %2319 = vmatprep.subr.bf16.mxu0 0
      %2320 = vmatpush1.bf16.msra.mxu0 0
      %2321 = vmatprep.subr.bf16.mxu0 0
      %2322 = vmatpush1.bf16.msra.mxu0 0
      %2323 = vmatprep.subr.bf16.mxu0 0
      %2324 = vmatpush1.bf16.msra.mxu0 0
      %2325 = vmatprep.subr.bf16.mxu0 0
      %2326 = vmatpush1.bf16.msra.mxu0 0
      %2327 = vmatprep.subr.bf16.mxu0 0
      %2328 = vmatpush1.bf16.msra.mxu0 0
      %2329 = vmatprep.subr.bf16.mxu0 0
      %2330 = vmatpush1.bf16.msra.mxu0 0
      %2331 = vmatprep.subr.bf16.mxu0 0
      %2332 = vmatpush1.bf16.msra.mxu0 0
      %2333 = vmatprep.subr.bf16.mxu0 0
      %2334 = vmatpush1.bf16.msra.mxu0 0
      %2335 = vmatprep.subr.bf16.mxu0 0
      %2336 = vmatpush1.bf16.msra.mxu0 0
      %2337 = vmatprep.subr.bf16.mxu0 0
      %2338 = vmatpush1.bf16.msra.mxu0 0
      %2339 = vmatprep.subr.bf16.mxu0 0
      %2340 = vmatpush1.bf16.msra.mxu0 0
      %2341 = vmatprep.subr.bf16.mxu0 0
      %2342 = vmatpush1.bf16.msra.mxu0 0
      %2343 = vmatprep.subr.bf16.mxu0 0
      %2344 = vmatpush1.bf16.msra.mxu0 0
      %2345 = vmatprep.mubr.bf16.mxu0 0
      %2346 = vmatmul.mubr.bf16.gmra.mrb[0].mxu0 %v2296
      %v2347 = vpop.f32.mrb[0].mxu0
      %v2348 = vadd.f32 0.0, %v2347
      %v2349 = vpop.f32.mrb[0].mxu0
      %v2350 = vpop.f32.mrb[0].mxu0
      %v2351 = vadd.f32 0.0, %v2350
      %v2352 = vpop.f32.mrb[0].mxu0
      %2353 = vmatprep.mubr.bf16.mxu0 0
      %2354 = vmatmul.mubr.bf16.gmra.mrb[0].mxu0 %v2299
      %v2355 = vpop.f32.mrb[0].mxu0
      %v2356 = vadd.f32 0.0, %v2355
      %v2357 = vpop.f32.mrb[0].mxu0
      %v2358 = vpop.f32.mrb[0].mxu0
      %v2359 = vadd.f32 0.0, %v2358
      %v2360 = vpop.f32.mrb[0].mxu0
      %2361 = vmatprep.mubr.bf16.mxu0 0
      %2362 = vmatmul.mubr.bf16.gmra.mrb[0].mxu0 %v2302
      %v2363 = vpop.f32.mrb[0].mxu0
      %v2364 = vadd.f32 0.0, %v2363
      %v2365 = vpop.f32.mrb[0].mxu0
      %v2366 = vpop.f32.mrb[0].mxu0
      %v2367 = vadd.f32 0.0, %v2366
      %v2368 = vpop.f32.mrb[0].mxu0
      %2369 = vmatprep.mubr.bf16.mxu0 0
      %2370 = vmatmul.mubr.bf16.gmra.mrb[0].mxu0 %v2305
      %v2371 = vpop.f32.mrb[0].mxu0
      %v2372 = vadd.f32 0.0, %v2371
      %v2373 = vpop.f32.mrb[0].mxu0
      %v2374 = vpop.f32.mrb[0].mxu0
      %v2375 = vadd.f32 0.0, %v2374
      %v2376 = vpop.f32.mrb[0].mxu0
      %2377 = vmatprep.mubr.bf16.mxu0 0
      %2378 = vmatmul.mubr.bf16.gmra.mrb[0].mxu0 %v2308
      %v2379 = vpop.f32.mrb[0].mxu0
      %v2380 = vadd.f32 0.0, %v2379
      %v2381 = vpop.f32.mrb[0].mxu0
      %v2382 = vpop.f32.mrb[0].mxu0
      %v2383 = vpop.f32.mrb[0].mxu0
      %2384 = vdwg.mxu0
      %v2385 = vadd.f32 %v2210, %v2348
      %v2386 = vadd.f32 %v2211, %v2351
      %v2387 = vadd.f32 %v2212, %v2356
      %v2388 = vadd.f32 %v2213, %v2359
      %v2389 = vadd.f32 %v2214, %v2364
      %v2390 = vadd.f32 %v2215, %v2367
      %v2391 = vadd.f32 %v2216, %v2372
      %v2392 = vadd.f32 %v2217, %v2375
      %v2393 = vadd.f32 %v2218, %v2380
      %v2394 = vld [vmem:[%s847 + $0x4] sm:$0xe]
      %s2395 = scalar_lea.vmem %s1, 56
      %v2396 = vld [vmem:[%s2395] sm:$0xf]
      %v2398 = vunpack.c.l.b16 %v2394
      %v2399 = vpack.c.b16 %v2067, %v2398
      %v2400 = vrot.slane %v2399, 1
      %v2401 = vrot.slane %v2077, 1
      %v2402 = vsel %vm1821, %v2400, %v2401
      %v2403 = vrot.slane %v2078, 1
      %v2404 = vsel %vm1821, %v2401, %v2403
      %v2405 = vrot.slane %v2079, 1
      %v2406 = vsel %vm1821, %v2403, %v2405
      %v2407 = vrot.slane %v2080, 1
      %v2408 = vsel %vm1821, %v2405, %v2407
      %v2410 = vsel %vm291, %v2402, 0
      %v2413 = vsel %vm291, %v2404, 0
      %v2416 = vsel %vm291, %v2406, 0
      %v2419 = vsel %vm291, %v2408, 0
      %v2422 = vsel %vm291, %v2407, 0
      %v2425 = vsel %vm307, %v2396, 0
      %2427 = vmatprep.subr.bf16.mxu0 0
      %2428 = vmatpush1.bf16.msra.mxu0 %v2425
      %2429 = vmatprep.subr.bf16.mxu0 0
      %2430 = vmatpush1.bf16.msra.mxu0 0
      %2431 = vmatprep.subr.bf16.mxu0 0
      %2432 = vmatpush1.bf16.msra.mxu0 0
      %2433 = vmatprep.subr.bf16.mxu0 0
      %2434 = vmatpush1.bf16.msra.mxu0 0
      %2435 = vmatprep.subr.bf16.mxu0 0
      %2436 = vmatpush1.bf16.msra.mxu0 0
      %2437 = vmatprep.subr.bf16.mxu0 0
      %2438 = vmatpush1.bf16.msra.mxu0 0
      %2439 = vmatprep.subr.bf16.mxu0 0
      %2440 = vmatpush1.bf16.msra.mxu0 0
      %2441 = vmatprep.subr.bf16.mxu0 0
      %2442 = vmatpush1.bf16.msra.mxu0 0
      %2443 = vmatprep.subr.bf16.mxu0 0
      %2444 = vmatpush1.bf16.msra.mxu0 0
      %2445 = vmatprep.subr.bf16.mxu0 0
      %2446 = vmatpush1.bf16.msra.mxu0 0
      %2447 = vmatprep.subr.bf16.mxu0 0
      %2448 = vmatpush1.bf16.msra.mxu0 0
      %2449 = vmatprep.subr.bf16.mxu0 0
      %2450 = vmatpush1.bf16.msra.mxu0 0
      %2451 = vmatprep.subr.bf16.mxu0 0
      %2452 = vmatpush1.bf16.msra.mxu0 0
      %2453 = vmatprep.subr.bf16.mxu0 0
      %2454 = vmatpush1.bf16.msra.mxu0 0
      %2455 = vmatprep.subr.bf16.mxu0 0
      %2456 = vmatpush1.bf16.msra.mxu0 0
      %2457 = vmatprep.subr.bf16.mxu0 0
      %2458 = vmatpush1.bf16.msra.mxu0 0
      %2459 = vmatprep.mubr.bf16.mxu0 0
      %2460 = vmatmul.mubr.bf16.gmra.mrb[0].mxu0 %v2410
      %v2461 = vpop.f32.mrb[0].mxu0
      %v2462 = vadd.f32 0.0, %v2461
      %v2463 = vpop.f32.mrb[0].mxu0
      %v2464 = vpop.f32.mrb[0].mxu0
      %v2465 = vadd.f32 0.0, %v2464
      %v2466 = vpop.f32.mrb[0].mxu0
      %2467 = vmatprep.mubr.bf16.mxu0 0
      %2468 = vmatmul.mubr.bf16.gmra.mrb[0].mxu0 %v2413
      %v2469 = vpop.f32.mrb[0].mxu0
      %v2470 = vadd.f32 0.0, %v2469
      %v2471 = vpop.f32.mrb[0].mxu0
      %v2472 = vpop.f32.mrb[0].mxu0
      %v2473 = vadd.f32 0.0, %v2472
      %v2474 = vpop.f32.mrb[0].mxu0
      %2475 = vmatprep.mubr.bf16.mxu0 0
      %2476 = vmatmul.mubr.bf16.gmra.mrb[0].mxu0 %v2416
      %v2477 = vpop.f32.mrb[0].mxu0
      %v2478 = vadd.f32 0.0, %v2477
      %v2479 = vpop.f32.mrb[0].mxu0
      %v2480 = vpop.f32.mrb[0].mxu0
      %v2481 = vadd.f32 0.0, %v2480
      %v2482 = vpop.f32.mrb[0].mxu0
      %2483 = vmatprep.mubr.bf16.mxu0 0
      %2484 = vmatmul.mubr.bf16.gmra.mrb[0].mxu0 %v2419
      %v2485 = vpop.f32.mrb[0].mxu0
      %v2486 = vadd.f32 0.0, %v2485
      %v2487 = vpop.f32.mrb[0].mxu0
      %v2488 = vpop.f32.mrb[0].mxu0
      %v2489 = vadd.f32 0.0, %v2488
      %v2490 = vpop.f32.mrb[0].mxu0
      %2491 = vmatprep.mubr.bf16.mxu0 0
      %2492 = vmatmul.mubr.bf16.gmra.mrb[0].mxu0 %v2422
      %v2493 = vpop.f32.mrb[0].mxu0
      %v2494 = vadd.f32 0.0, %v2493
      %v2495 = vpop.f32.mrb[0].mxu0
      %v2496 = vpop.f32.mrb[0].mxu0
      %v2497 = vpop.f32.mrb[0].mxu0
      %2498 = vdwg.mxu0
      %v2499 = vadd.f32 %v2385, %v2462
      %v2500 = vadd.f32 %v2386, %v2465
      %v2501 = vadd.f32 %v2387, %v2470
      %v2502 = vadd.f32 %v2388, %v2473
      %v2503 = vadd.f32 %v2389, %v2478
      %v2504 = vadd.f32 %v2390, %v2481
      %v2505 = vadd.f32 %v2391, %v2486
      %v2506 = vadd.f32 %v2392, %v2489
      %v2507 = vadd.f32 %v2393, %v2494
      %v2508 = vld [vmem:[%s981 + $0x4] sm:$0xe]
      %s2509 = scalar_lea.vmem %s1, 60
      %v2510 = vld [vmem:[%s2509] sm:$0xf]
      %v2512 = vunpack.c.l.b16 %v2508
      %v2513 = vpack.c.b16 %v2242, %v2512
      %v2514 = vrot.slane %v2513, 1
      %v2515 = vrot.slane %v2252, 1
      %v2516 = vsel %vm1821, %v2514, %v2515
      %v2517 = vrot.slane %v2253, 1
      %v2518 = vsel %vm1821, %v2515, %v2517
      %v2519 = vrot.slane %v2254, 1
      %v2520 = vsel %vm1821, %v2517, %v2519
      %v2521 = vrot.slane %v2255, 1
      %v2522 = vsel %vm1821, %v2519, %v2521
      %v2524 = vsel %vm291, %v2516, 0
      %v2527 = vsel %vm291, %v2518, 0
      %v2530 = vsel %vm291, %v2520, 0
      %v2533 = vsel %vm291, %v2522, 0
      %v2536 = vsel %vm291, %v2521, 0
      %v2539 = vsel %vm307, %v2510, 0
      %2541 = vmatprep.subr.bf16.mxu0 0
      %2542 = vmatpush1.bf16.msra.mxu0 %v2539
      %2543 = vmatprep.subr.bf16.mxu0 0
      %2544 = vmatpush1.bf16.msra.mxu0 0
      %2545 = vmatprep.subr.bf16.mxu0 0
      %2546 = vmatpush1.bf16.msra.mxu0 0
      %2547 = vmatprep.subr.bf16.mxu0 0
      %2548 = vmatpush1.bf16.msra.mxu0 0
      %2549 = vmatprep.subr.bf16.mxu0 0
      %2550 = vmatpush1.bf16.msra.mxu0 0
      %2551 = vmatprep.subr.bf16.mxu0 0
      %2552 = vmatpush1.bf16.msra.mxu0 0
      %2553 = vmatprep.subr.bf16.mxu0 0
      %2554 = vmatpush1.bf16.msra.mxu0 0
      %2555 = vmatprep.subr.bf16.mxu0 0
      %2556 = vmatpush1.bf16.msra.mxu0 0
      %2557 = vmatprep.subr.bf16.mxu0 0
      %2558 = vmatpush1.bf16.msra.mxu0 0
      %2559 = vmatprep.subr.bf16.mxu0 0
      %2560 = vmatpush1.bf16.msra.mxu0 0
      %2561 = vmatprep.subr.bf16.mxu0 0
      %2562 = vmatpush1.bf16.msra.mxu0 0
      %2563 = vmatprep.subr.bf16.mxu0 0
      %2564 = vmatpush1.bf16.msra.mxu0 0
      %2565 = vmatprep.subr.bf16.mxu0 0
      %2566 = vmatpush1.bf16.msra.mxu0 0
      %2567 = vmatprep.subr.bf16.mxu0 0
      %2568 = vmatpush1.bf16.msra.mxu0 0
      %2569 = vmatprep.subr.bf16.mxu0 0
      %2570 = vmatpush1.bf16.msra.mxu0 0
      %2571 = vmatprep.subr.bf16.mxu0 0
      %2572 = vmatpush1.bf16.msra.mxu0 0
      %2573 = vmatprep.mubr.bf16.mxu0 0
      %2574 = vmatmul.mubr.bf16.gmra.mrb[0].mxu0 %v2524
      %v2575 = vpop.f32.mrb[0].mxu0
      %v2576 = vadd.f32 0.0, %v2575
      %v2577 = vpop.f32.mrb[0].mxu0
      %v2578 = vpop.f32.mrb[0].mxu0
      %v2579 = vadd.f32 0.0, %v2578
      %v2580 = vpop.f32.mrb[0].mxu0
      %2581 = vmatprep.mubr.bf16.mxu0 0
      %2582 = vmatmul.mubr.bf16.gmra.mrb[0].mxu0 %v2527
      %v2583 = vpop.f32.mrb[0].mxu0
      %v2584 = vadd.f32 0.0, %v2583
      %v2585 = vpop.f32.mrb[0].mxu0
      %v2586 = vpop.f32.mrb[0].mxu0
      %v2587 = vadd.f32 0.0, %v2586
      %v2588 = vpop.f32.mrb[0].mxu0
      %2589 = vmatprep.mubr.bf16.mxu0 0
      %2590 = vmatmul.mubr.bf16.gmra.mrb[0].mxu0 %v2530
      %v2591 = vpop.f32.mrb[0].mxu0
      %v2592 = vadd.f32 0.0, %v2591
      %v2593 = vpop.f32.mrb[0].mxu0
      %v2594 = vpop.f32.mrb[0].mxu0
      %v2595 = vadd.f32 0.0, %v2594
      %v2596 = vpop.f32.mrb[0].mxu0
      %2597 = vmatprep.mubr.bf16.mxu0 0
      %2598 = vmatmul.mubr.bf16.gmra.mrb[0].mxu0 %v2533
      %v2599 = vpop.f32.mrb[0].mxu0
      %v2600 = vadd.f32 0.0, %v2599
      %v2601 = vpop.f32.mrb[0].mxu0
      %v2602 = vpop.f32.mrb[0].mxu0
      %v2603 = vadd.f32 0.0, %v2602
      %v2604 = vpop.f32.mrb[0].mxu0
      %2605 = vmatprep.mubr.bf16.mxu0 0
      %2606 = vmatmul.mubr.bf16.gmra.mrb[0].mxu0 %v2536
      %v2607 = vpop.f32.mrb[0].mxu0
      %v2608 = vadd.f32 0.0, %v2607
      %v2609 = vpop.f32.mrb[0].mxu0
      %v2610 = vpop.f32.mrb[0].mxu0
      %v2611 = vpop.f32.mrb[0].mxu0
      %2612 = vdwg.mxu0
      %v2613 = vadd.f32 %v2499, %v2576
      %v2614 = vadd.f32 %v2500, %v2579
      %v2615 = vadd.f32 %v2501, %v2584
      %v2616 = vadd.f32 %v2502, %v2587
      %v2617 = vadd.f32 %v2503, %v2592
      %v2618 = vadd.f32 %v2504, %v2595
      %v2619 = vadd.f32 %v2505, %v2600
      %v2620 = vadd.f32 %v2506, %v2603
      %v2621 = vadd.f32 %v2507, %v2608
      %v2622 = vpack.c.bf16 %v2614, %v2613
      %v2623 = vpack.c.bf16 %v2616, %v2615
      %v2624 = vpack.c.bf16 %v2618, %v2617
      %v2625 = vpack.c.bf16 %v2620, %v2619
      %v2626 = vpack.c.bf16 %v2621, %v2621
      %v2632 = vunpack.c.l.b16 %v2622
      %v2633 = vunpack.c.h.b16 %v2622
      %v2634 = vunpack.c.l.b16 %v2623
      %v2635 = vunpack.c.h.b16 %v2623
      %v2636 = vunpack.c.l.b16 %v2624
      %v2637 = vunpack.c.h.b16 %v2624
      %v2638 = vunpack.c.l.b16 %v2625
      %v2639 = vunpack.c.h.b16 %v2625
      %v2640 = vunpack.c.l.b16 %v2626
      %v2641 = vpack.c.b16 %v2632, %v2632
      %v2642 = vpack.c.b16 %v2633, %v2633
      %v2643 = vpack.c.b16 %v2634, %v2634
      %v2644 = vpack.c.b16 %v2635, %v2635
      %v2645 = vpack.c.b16 %v2636, %v2636
      %v2646 = vpack.c.b16 %v2637, %v2637
      %v2647 = vpack.c.b16 %v2638, %v2638
      %v2648 = vpack.c.b16 %v2639, %v2639
      %v2649 = vpack.c.b16 %v2640, %v2640
      %2659 = vst [vmem:[%s231] sm:$0xf] %v2641
      %2660 = vst [vmem:[%s231 + $0x4] sm:$0xf] %v2642
      %2661 = vst [vmem:[%s231 + $0x8] sm:$0xf] %v2643
      %2662 = vst [vmem:[%s231 + $0xc] sm:$0xf] %v2644
      %2663 = vst [vmem:[%s231 + $0x10] sm:$0xf] %v2645
      %2664 = vst [vmem:[%s231 + $0x14] sm:$0xf] %v2646
      %2665 = vst [vmem:[%s231 + $0x18] sm:$0xf] %v2647
      %2666 = vst [vmem:[%s231 + $0x1c] sm:$0xf] %v2648
      %2667 = vst [vmem:[%s231 + $0x20] sm:$0xf] %v2649
      %v2668 = vlaneseq
      %v2669 = vshrl.u32 %v2668, 7
      %v2670 = vadd.s32 %v2669, 8
      %v2671 = vadd.s32 %v2669, 16
      %v2672 = vadd.s32 %v2669, 24
      %v2673 = vadd.s32 %v2669, 32
      %v2674 = vadd.s32 %v2669, 40
      %v2675 = vadd.s32 %v2669, 48
      %v2676 = vadd.s32 %v2669, 56
      %v2677 = vadd.s32 %v2669, 64
      %vm2678 = vcmp.lt.s32.totalorder %v2669, 0
      %v2679 = vsub.s32 0, %v2669
      %v2680 = vsel %vm2678, %v2679, %v2669
      %v2681 = vmul.u32.u64.compose %v2680, 3817748708
      %v2682 = vextract.low.u32 %v2681
      %v2683 = vextract.high.u32 %v2681
      %v2684 = vshrl.u32 %v2683, 3
      %v2685 = vmul.u32 %v2684, 9
      %v2686 = vsub.s32 %v2680, %v2685
      %v2687 = vsub.s32 0, %v2686
      %v2688 = vsel %vm2678, %v2687, %v2686
      %vm2689 = vcmp.lt.s32.totalorder %v2670, 0
      %v2690 = vsub.s32 0, %v2670
      %v2691 = vsel %vm2689, %v2690, %v2670
      %v2692 = vmul.u32.u64.compose %v2691, 3817748708
      %v2693 = vextract.low.u32 %v2692
      %v2694 = vextract.high.u32 %v2692
      %v2695 = vshrl.u32 %v2694, 3
      %v2696 = vmul.u32 %v2695, 9
      %v2697 = vsub.s32 %v2691, %v2696
      %v2698 = vsub.s32 0, %v2697
      %v2699 = vsel %vm2689, %v2698, %v2697
      %vm2700 = vcmp.lt.s32.totalorder %v2671, 0
      %v2701 = vsub.s32 0, %v2671
      %v2702 = vsel %vm2700, %v2701, %v2671
      %v2703 = vmul.u32.u64.compose %v2702, 3817748708
      %v2704 = vextract.low.u32 %v2703
      %v2705 = vextract.high.u32 %v2703
      %v2706 = vshrl.u32 %v2705, 3
      %v2707 = vmul.u32 %v2706, 9
      %v2708 = vsub.s32 %v2702, %v2707
      %v2709 = vsub.s32 0, %v2708
      %v2710 = vsel %vm2700, %v2709, %v2708
      %vm2711 = vcmp.lt.s32.totalorder %v2672, 0
      %v2712 = vsub.s32 0, %v2672
      %v2713 = vsel %vm2711, %v2712, %v2672
      %v2714 = vmul.u32.u64.compose %v2713, 3817748708
      %v2715 = vextract.low.u32 %v2714
      %v2716 = vextract.high.u32 %v2714
      %v2717 = vshrl.u32 %v2716, 3
      %v2718 = vmul.u32 %v2717, 9
      %v2719 = vsub.s32 %v2713, %v2718
      %v2720 = vsub.s32 0, %v2719
      %v2721 = vsel %vm2711, %v2720, %v2719
      %vm2722 = vcmp.lt.s32.totalorder %v2673, 0
      %v2723 = vsub.s32 0, %v2673
      %v2724 = vsel %vm2722, %v2723, %v2673
      %v2725 = vmul.u32.u64.compose %v2724, 3817748708
      %v2726 = vextract.low.u32 %v2725
      %v2727 = vextract.high.u32 %v2725
      %v2728 = vshrl.u32 %v2727, 3
      %v2729 = vmul.u32 %v2728, 9
      %v2730 = vsub.s32 %v2724, %v2729
      %v2731 = vsub.s32 0, %v2730
      %v2732 = vsel %vm2722, %v2731, %v2730
      %vm2733 = vcmp.lt.s32.totalorder %v2674, 0
      %v2734 = vsub.s32 0, %v2674
      %v2735 = vsel %vm2733, %v2734, %v2674
      %v2736 = vmul.u32.u64.compose %v2735, 3817748708
      %v2737 = vextract.low.u32 %v2736
      %v2738 = vextract.high.u32 %v2736
      %v2739 = vshrl.u32 %v2738, 3
      %v2740 = vmul.u32 %v2739, 9
      %v2741 = vsub.s32 %v2735, %v2740
      %v2742 = vsub.s32 0, %v2741
      %v2743 = vsel %vm2733, %v2742, %v2741
      %vm2744 = vcmp.lt.s32.totalorder %v2675, 0
      %v2745 = vsub.s32 0, %v2675
      %v2746 = vsel %vm2744, %v2745, %v2675
      %v2747 = vmul.u32.u64.compose %v2746, 3817748708
      %v2748 = vextract.low.u32 %v2747
      %v2749 = vextract.high.u32 %v2747
      %v2750 = vshrl.u32 %v2749, 3
      %v2751 = vmul.u32 %v2750, 9
      %v2752 = vsub.s32 %v2746, %v2751
      %v2753 = vsub.s32 0, %v2752
      %v2754 = vsel %vm2744, %v2753, %v2752
      %vm2755 = vcmp.lt.s32.totalorder %v2676, 0
      %v2756 = vsub.s32 0, %v2676
      %v2757 = vsel %vm2755, %v2756, %v2676
      %v2758 = vmul.u32.u64.compose %v2757, 3817748708
      %v2759 = vextract.low.u32 %v2758
      %v2760 = vextract.high.u32 %v2758
      %v2761 = vshrl.u32 %v2760, 3
      %v2762 = vmul.u32 %v2761, 9
      %v2763 = vsub.s32 %v2757, %v2762
      %v2764 = vsub.s32 0, %v2763
      %v2765 = vsel %vm2755, %v2764, %v2763
      %vm2766 = vcmp.lt.s32.totalorder %v2677, 0
      %v2767 = vsub.s32 0, %v2677
      %v2768 = vsel %vm2766, %v2767, %v2677
      %v2769 = vmul.u32.u64.compose %v2768, 3817748708
      %v2770 = vextract.low.u32 %v2769
      %v2771 = vextract.high.u32 %v2769
      %v2772 = vshrl.u32 %v2771, 3
      %v2773 = vmul.u32 %v2772, 9
      %v2774 = vsub.s32 %v2768, %v2773
      %v2775 = vsub.s32 0, %v2774
      %v2776 = vsel %vm2766, %v2775, %v2774
      %vm2777 = vcmp.ne.s32.totalorder %v2688, 0
      %vm2778 = vcmp.ne.s32.totalorder %v2699, 0
      %vm2779 = vcmp.ne.s32.totalorder %v2710, 0
      %vm2780 = vcmp.ne.s32.totalorder %v2721, 0
      %vm2781 = vcmp.ne.s32.totalorder %v2732, 0
      %vm2782 = vcmp.ne.s32.totalorder %v2743, 0
      %vm2783 = vcmp.ne.s32.totalorder %v2754, 0
      %vm2784 = vcmp.ne.s32.totalorder %v2765, 0
      %vm2785 = vcmp.ne.s32.totalorder %v2776, 0
      %vm2786 = vcmp.lt.s32.totalorder %v2688, 0
      %vm2787 = vcmp.lt.s32.totalorder %v2699, 0
      %vm2788 = vcmp.lt.s32.totalorder %v2710, 0
      %vm2789 = vcmp.lt.s32.totalorder %v2721, 0
      %vm2790 = vcmp.lt.s32.totalorder %v2732, 0
      %vm2791 = vcmp.lt.s32.totalorder %v2743, 0
      %vm2792 = vcmp.lt.s32.totalorder %v2754, 0
      %vm2793 = vcmp.lt.s32.totalorder %v2765, 0
      %vm2794 = vcmp.lt.s32.totalorder %v2776, 0
      %vm2795 = vmand %vm2786, %vm2777
      %vm2796 = vmand %vm2787, %vm2778
      %vm2797 = vmand %vm2788, %vm2779
      %vm2798 = vmand %vm2789, %vm2780
      %vm2799 = vmand %vm2790, %vm2781
      %vm2800 = vmand %vm2791, %vm2782
      %vm2801 = vmand %vm2792, %vm2783
      %vm2802 = vmand %vm2793, %vm2784
      %vm2803 = vmand %vm2794, %vm2785
      %v2804 = vadd.s32 %v2688, 9
      %v2805 = vadd.s32 %v2699, 9
      %v2806 = vadd.s32 %v2710, 9
      %v2807 = vadd.s32 %v2721, 9
      %v2808 = vadd.s32 %v2732, 9
      %v2809 = vadd.s32 %v2743, 9
      %v2810 = vadd.s32 %v2754, 9
      %v2811 = vadd.s32 %v2765, 9
      %v2812 = vadd.s32 %v2776, 9
      %v2813 = vsel %vm2795, %v2804, %v2688
      %v2814 = vsel %vm2796, %v2805, %v2699
      %v2815 = vsel %vm2797, %v2806, %v2710
      %v2816 = vsel %vm2798, %v2807, %v2721
      %v2817 = vsel %vm2799, %v2808, %v2732
      %v2818 = vsel %vm2800, %v2809, %v2743
      %v2819 = vsel %vm2801, %v2810, %v2754
      %v2820 = vsel %vm2802, %v2811, %v2765
      %v2821 = vsel %vm2803, %v2812, %v2776
      %vm2822 = vcmp.lt.s32.totalorder %v2813, 8
      %vm2823 = vcmp.lt.s32.totalorder %v2814, 8
      %vm2824 = vcmp.lt.s32.totalorder %v2815, 8
      %vm2825 = vcmp.lt.s32.totalorder %v2816, 8
      %vm2826 = vcmp.lt.s32.totalorder %v2817, 8
      %vm2827 = vcmp.lt.s32.totalorder %v2818, 8
      %vm2828 = vcmp.lt.s32.totalorder %v2819, 8
      %vm2829 = vcmp.lt.s32.totalorder %v2820, 8
      %vm2830 = vcmp.lt.s32.totalorder %v2821, 8
      %v2831 = vsel %vm2822, 1, 0
      %v2832 = vsel %vm2823, 1, 0
      %v2833 = vsel %vm2824, 1, 0
      %v2834 = vsel %vm2825, 1, 0
      %v2835 = vsel %vm2826, 1, 0
      %v2836 = vsel %vm2827, 1, 0
      %v2837 = vsel %vm2828, 1, 0
      %v2838 = vsel %vm2829, 1, 0
      %v2839 = vsel %vm2830, 1, 0
      %vm2840 = vcmp.eq.s32.totalorder %v2831, 1
      %vm2841 = vcmp.eq.s32.totalorder %v2832, 1
      %vm2842 = vcmp.eq.s32.totalorder %v2833, 1
      %vm2843 = vcmp.eq.s32.totalorder %v2834, 1
      %vm2844 = vcmp.eq.s32.totalorder %v2835, 1
      %vm2845 = vcmp.eq.s32.totalorder %v2836, 1
      %vm2846 = vcmp.eq.s32.totalorder %v2837, 1
      %vm2847 = vcmp.eq.s32.totalorder %v2838, 1
      %vm2848 = vcmp.eq.s32.totalorder %v2839, 1
      %v2849 = vsel %vm2840, %v2613, 0.0
      %v2850 = vsel %vm2841, %v2614, 0.0
      %v2851 = vsel %vm2842, %v2615, 0.0
      %v2852 = vsel %vm2843, %v2616, 0.0
      %v2853 = vsel %vm2844, %v2617, 0.0
      %v2854 = vsel %vm2845, %v2618, 0.0
      %v2855 = vsel %vm2846, %v2619, 0.0
      %v2856 = vsel %vm2847, %v2620, 0.0
      %v2857 = vsel %vm2848, %v2621, 0.0
      %v2858 = vld [vmem:[%s235] sm:$0x1]
      %v2859 = vadd.f32 %v2849, %v2850
      %v2860 = vadd.f32 %v2859, %v2851
      %v2861 = vadd.f32 %v2860, %v2852
      %v2862 = vadd.f32 %v2861, %v2853
      %v2863 = vadd.f32 %v2862, %v2854
      %v2864 = vadd.f32 %v2863, %v2855
      %v2865 = vadd.f32 %v2864, %v2856
      %v2866 = vadd.f32 %v2865, %v2857
      %v2867 = vrot.slane %v2866, 4
      %v2868 = vadd.f32 %v2866, %v2867
      %v2869 = vrot.slane %v2868, 2
      %v2870 = vadd.f32 %v2868, %v2869
      %v2871 = vrot.slane %v2870, 1
      %v2872 = vadd.f32 %v2870, %v2871
      %v2873 = vadd.f32 %v2858, %v2872
      %2874 = vst [vmem:[%s235] sm:$0x1] %v2873
      %v2875 = vld [vmem:[%s238] sm:$0x1]
      %v2876 = vmul.f32 %v2849, %v2849
      %v2877 = vmul.f32 %v2850, %v2850
      %v2878 = vmul.f32 %v2851, %v2851
      %v2879 = vmul.f32 %v2852, %v2852
      %v2880 = vmul.f32 %v2853, %v2853
      %v2881 = vmul.f32 %v2854, %v2854
      %v2882 = vmul.f32 %v2855, %v2855
      %v2883 = vmul.f32 %v2856, %v2856
      %v2884 = vmul.f32 %v2857, %v2857
      %v2885 = vadd.f32 %v2876, %v2877
      %v2886 = vadd.f32 %v2885, %v2878
      %v2887 = vadd.f32 %v2886, %v2879
      %v2888 = vadd.f32 %v2887, %v2880
      %v2889 = vadd.f32 %v2888, %v2881
      %v2890 = vadd.f32 %v2889, %v2882
      %v2891 = vadd.f32 %v2890, %v2883
      %v2892 = vadd.f32 %v2891, %v2884
      %v2893 = vrot.slane %v2892, 4
      %v2894 = vadd.f32 %v2892, %v2893
      %v2895 = vrot.slane %v2894, 2
      %v2896 = vadd.f32 %v2894, %v2895
      %v2897 = vrot.slane %v2896, 1
      %v2898 = vadd.f32 %v2896, %v2897
      %v2899 = vadd.f32 %v2875, %v2898
      %2900 = vst [vmem:[%s238] sm:$0x1] %v2899
      %s2901 = sadd.s32 %s20, %s21
      %p2902 = scmp.lt.s32.totalorder %s2901, 1
      %s2903 = scalar_select %p2902, %s2901, 1
      %s2904 = smul.addr %s2903, 9
      %s2905 = smul.addr %s2904, 4
      %s2906 = scalar_lea.vmem %s2, %s2905
      %p2907 = scmp.lt.s32.totalorder %s20, 1
      %s2908 = scalar_select %p2907, %s20, 1
      %s2909 = scalar_lea.vmem %s3, %s2908
      %p2910 = scmp.lt.s32.totalorder %s20, 1
      %s2911 = scalar_select %p2910, %s20, 1
      %s2912 = scalar_lea.vmem %s4, %s2911
      // Predicated region
      $region33: #{discriminator_block.2} parent=27 // pred_check
        %p2913 = pneg %p97
      $region34: #{discriminator_block.2} parent=27 // pred_check_branch
        %2915 = sbr.rel (%p2913) target = $region36
      $region35: #{discriminator_block.2} parent=27 // pred_region
        %s2916 = sadd.s32 %s20, %s21
      $region36: #{discriminator_block.2} parent=27 // pred_fallthru
        _
      // Predicated region
      $region37: #{discriminator_block.2} parent=27 // pred_check
        %p2917 = pneg %p123
      $region38: #{discriminator_block.2} parent=27 // pred_check_branch
        %2919 = sbr.rel (%p2917) target = $region40
      $region39: #{discriminator_block.2} parent=27 // pred_region
        _
      $region40: #{discriminator_block.2} parent=27 // pred_fallthru
        _
      // Predicated region
      $region41: #{discriminator_block.2} parent=27 // pred_check
        %p2920 = pneg %p149
      $region42: #{discriminator_block.2} parent=27 // pred_check_branch
        %2922 = sbr.rel (%p2920) target = $region44
      $region43: #{discriminator_block.2} parent=27 // pred_region
        _
      $region44: #{discriminator_block.2} parent=27 // pred_fallthru
        _
    $region28: #{discriminator_block.2} parent=5 // pred_fallthru
      _
    %p2923 = scmp.le.s32.totalorder 2, %s11
    // Predicated region
    $region45: #{discriminator_block.2} parent=5 // pred_check
      %p2924 = pneg %p2923
    $region46: #{discriminator_block.2} parent=5 // pred_check_branch
      %2926 = sbr.rel (%p2924) target = $region48
    $region47: #{discriminator_block.2} parent=5 // pred_region
      %s2927 = ssub.s32 %s11, 2
      // Predicated region
      $region49: #{discriminator_block.2} parent=47 // pred_check
        %p2928 = pneg %p103
      $region50: #{discriminator_block.2} parent=47 // pred_check_branch
        %2930 = sbr.rel (%p2928) target = $region52
      $region51: #{discriminator_block.2} parent=47 // pred_region
        %s2931 = sadd.s32 %s22, %s23
        %p2932 = scmp.lt.s32.totalorder %s2931, 1
        %s2933 = scalar_select %p2932, %s2931, 1
        %s2934 = smul.addr %s2933, 9
        %s2935 = smul.addr %s2934, 4
        %s2936 = scalar_lea.vmem %s2, %s2935
      $region52: #{discriminator_block.2} parent=47 // pred_fallthru
        _
      // Predicated region
      $region53: #{discriminator_block.2} parent=47 // pred_check
        %p2937 = pneg %p129
      $region54: #{discriminator_block.2} parent=47 // pred_check_branch
        %2939 = sbr.rel (%p2937) target = $region56
      $region55: #{discriminator_block.2} parent=47 // pred_region
        %p2940 = scmp.lt.s32.totalorder %s22, 1
        %s2941 = scalar_select %p2940, %s22, 1
        %s2942 = scalar_lea.vmem %s3, %s2941
      $region56: #{discriminator_block.2} parent=47 // pred_fallthru
        _
      // Predicated region
      $region57: #{discriminator_block.2} parent=47 // pred_check
        %p2943 = pneg %p155
      $region58: #{discriminator_block.2} parent=47 // pred_check_branch
        %2945 = sbr.rel (%p2943) target = $region60
      $region59: #{discriminator_block.2} parent=47 // pred_region
        %p2946 = scmp.lt.s32.totalorder %s22, 1
        %s2947 = scalar_select %p2946, %s22, 1
        %s2948 = scalar_lea.vmem %s4, %s2947
      $region60: #{discriminator_block.2} parent=47 // pred_fallthru
        _
    $region48: #{discriminator_block.2} parent=5 // pred_fallthru
      _
  $region6: #{discriminator_block.2} parent=0 // loop_footer
    %s15 = sadd.s32 1, %s11
  $region7: #{discriminator_block.2} parent=0 // loop_footer_branch
    %10 = sbr.rel target = $region3
  $region8: #{discriminator_block.2} parent=0 // loop_exit
    _

</llo_original>
